<compile_context>
chip_gen: v5e
topology: v5e:2x2
jax: 0.10.0
libtpu: 0.0.40
codegen_flags: <defaults>
</compile_context>

<pallas_src>
import functools

import jax
import jax.numpy as jnp
from jax import lax
from jax.experimental import pallas as pl
from jax.experimental.pallas import tpu as pltpu

EPS = 1e-5  # torch.nn.InstanceNorm2d default


def _resblock_kernel(x_ref, w1_ref, g1_ref, be1_ref, w2_ref, g2_ref, be2_ref,
                     o_ref, pad_ref, acc_ref, *, wide_k):
    _, H, W, C = o_ref.shape
    HW = H * W
    inv_hw = 1.0 / HW

    def reflect_pad_into(img):
        # img: (H, W, C) -> reflect-padded (H+2, W+2, C) written into pad_ref
        # (MXU dtype).  Only the 1-px halo needs extra writes.
        s = img.astype(pad_ref.dtype)
        pad_ref[1:H + 1, 1:W + 1, :] = s                      # interior
        pad_ref[0:1, 1:W + 1, :] = s[1:2]                     # top row    <- x[1]
        pad_ref[H + 1:H + 2, 1:W + 1, :] = s[H - 2:H - 1]     # bottom row <- x[H-2]
        pad_ref[:, 0:1, :] = pad_ref[:, 2:3, :]               # left col  (+corners)
        pad_ref[:, W + 1:W + 2, :] = pad_ref[:, W - 1:W, :]   # right col (+corners)

    def conv3x3_into_acc(w_ref):
        # VALID 3x3 conv of pad_ref, accumulated into acc_ref (HW, C) f32.
        p = pad_ref[...]
        if wide_k:
            # K = 3C: one matmul per kernel row (256-deep MXU on v6e/v7x).
            slab = jnp.concatenate(
                [p[:, 0:W, :], p[:, 1:W + 1, :], p[:, 2:W + 2, :]],
                axis=-1)                                      # (H+2, W, 3C)
            for dy in range(3):
                lhs = slab[dy:dy + H].reshape(HW, 3 * C)
                part = jnp.dot(lhs, w_ref[dy],
                               preferred_element_type=jnp.float32)
                if dy == 0:
                    acc_ref[...] = part
                else:
                    acc_ref[...] += part
        else:
            # 9-tap K = C: v5e's 128-deep MXU serializes K=3C anyway, so skip
            # the (H+2, W, 3C) slab temporary there.
            for t in range(9):
                dy, dx = t // 3, t % 3
                lhs = p[dy:dy + H, dx:dx + W, :].reshape(HW, C)
                part = jnp.dot(lhs, w_ref[t],
                               preferred_element_type=jnp.float32)
                if t == 0:
                    acc_ref[...] = part
                else:
                    acc_ref[...] += part

    def instance_norm(y, gamma, beta):
        # Fused statistics (sum & sum-of-squares), all math in f32, var >= 0.
        s = jnp.sum(y, axis=0, keepdims=True)
        ss = jnp.sum(y * y, axis=0, keepdims=True)
        mean = s * inv_hw
        var = jnp.maximum(ss * inv_hw - mean * mean, 0.0)
        scale = gamma * lax.rsqrt(var + EPS)
        shift = beta - mean * scale
        return y * scale + shift

    # ---- conv1 -> IN1 -> ReLU ------------------------------------------------
    reflect_pad_into(x_ref[0])
    conv3x3_into_acc(w1_ref)
    y = instance_norm(acc_ref[...], g1_ref[...], be1_ref[...])
    y = jnp.maximum(y, 0.0).reshape(H, W, C)                  # f32

    # ---- conv2 -> IN2 -> + residual --------------------------------------------
    reflect_pad_into(y)
    conv3x3_into_acc(w2_ref)
    z = instance_norm(acc_ref[...], g2_ref[...], be2_ref[...]).reshape(H, W, C)
    o_ref[0] = (z + x_ref[0].astype(jnp.float32)).astype(o_ref.dtype)


def _pick_wide_k():
    """K=3C matmuls on 256-deep MXUs (v6e/v7x); 9-tap K=C on 128-deep MXUs."""
    try:
        kind = jax.devices()[0].device_kind.lower()
        return not any(v in kind for v in ("v2", "v3", "v4", "v5"))
    except Exception:
        return True


def _pick_vmem_limit_bytes():
    """~75% of physical VMEM per TensorCore (headroom for Mosaic scratch)."""
    try:
        cap = int(pltpu.get_tpu_info().vmem_capacity_bytes)
        return max(32 * 1024 * 1024, (cap * 3) // 4)
    except Exception:
        return 48 * 1024 * 1024  # safe on every current generation


@functools.partial(jax.jit,
                   static_argnames=("mxu_dtype", "wide_k", "vmem_limit_bytes"))
def _residual_block_impl(x_nchw, params, *, mxu_dtype, wide_k,
                         vmem_limit_bytes):
    N, C, H, W = x_nchw.shape
    x = jnp.transpose(x_nchw, (0, 2, 3, 1))               # NCHW -> NHWC (stays f32)

    def prep_w(w_pt):
        # PyTorch (Cout, Cin, 3, 3) -> (kh, kw, Cin, Cout)
        w = jnp.transpose(w_pt, (2, 3, 1, 0))
        if wide_k:
            w = w.reshape(3, 3 * C, C)                    # dy-major, dx*C+ci inner
        else:
            w = w.reshape(9, C, C)                        # t = dy*3 + dx
        return w.astype(mxu_dtype)

    w1 = prep_w(params["conv1_w"])
    w2 = prep_w(params["conv2_w"])
    # conv biases intentionally dropped (cancelled by the following InstanceNorm).
    g1 = params["in1_gamma"].reshape(1, C).astype(jnp.float32)
    be1 = params["in1_beta"].reshape(1, C).astype(jnp.float32)
    g2 = params["in2_gamma"].reshape(1, C).astype(jnp.float32)
    be2 = params["in2_beta"].reshape(1, C).astype(jnp.float32)

    w_spec = pl.BlockSpec(w1.shape, lambda n: (0, 0, 0))
    vec_spec = pl.BlockSpec((1, C), lambda n: (0, 0))
    img_spec = pl.BlockSpec((1, H, W, C), lambda n: (n, 0, 0, 0))

    kernel = functools.partial(_resblock_kernel, wide_k=wide_k)

    out = pl.pallas_call(
        kernel,
        out_shape=jax.ShapeDtypeStruct((N, H, W, C), x.dtype),
        grid_spec=pltpu.PrefetchScalarGridSpec(
            num_scalar_prefetch=0,
            grid=(N,),
            in_specs=[
                img_spec,                     # x (conv1 source + residual, f32)
                w_spec, vec_spec, vec_spec,   # conv1 / IN1
                w_spec, vec_spec, vec_spec,   # conv2 / IN2
            ],
            out_specs=img_spec,
            scratch_shapes=[
                pltpu.VMEM((H + 2, W + 2, C), mxu_dtype),   # padded image
                pltpu.VMEM((H * W, C), jnp.float32),        # conv accumulator
            ],
        ),
        compiler_params=pltpu.CompilerParams(
            dimension_semantics=("parallel",),
            vmem_limit_bytes=vmem_limit_bytes),
    )(x, w1, g1, be1, w2, g2, be2)

    return jnp.transpose(out, (0, 3, 1, 2))                # NHWC -> NCHW


def residual_block(x_nchw, params, *, mxu_dtype=jnp.bfloat16):
    """x_nchw: (N, C, H, W); params: PyTorch-layout conv / InstanceNorm params.

    mxu_dtype feeds the MXU only (default bf16); InstanceNorm, elementwise math
    and the residual add always run in float32.
    """
    return _residual_block_impl(
        x_nchw, params, mxu_dtype=mxu_dtype,
        wide_k=_pick_wide_k(), vmem_limit_bytes=_pick_vmem_limit_bytes())


def _reference(x_nchw, params):
    """Pure-JAX reference matching PyTorch semantics (incl. conv bias)."""
    x = jnp.transpose(x_nchw, (0, 2, 3, 1))

    def conv(a, w_pt, b_pt):
        w = jnp.transpose(w_pt, (2, 3, 1, 0))             # HWIO
        p = jnp.pad(a, ((0, 0), (1, 1), (1, 1), (0, 0)), mode="reflect")
        y = lax.conv_general_dilated(
            p, w, window_strides=(1, 1), padding="VALID",
            dimension_numbers=("NHWC", "HWIO", "NHWC"))
        return y + b_pt.reshape(1, 1, 1, -1)

    def inorm(y, gamma, beta):
        mean = jnp.mean(y, axis=(1, 2), keepdims=True)
        var = jnp.mean((y - mean) ** 2, axis=(1, 2), keepdims=True)
        return (y - mean) * lax.rsqrt(var + EPS) * gamma.reshape(1, 1, 1, -1) \
            + beta.reshape(1, 1, 1, -1)

    y = jnp.maximum(
        inorm(conv(x, params["conv1_w"], params["conv1_b"]),
              params["in1_gamma"], params["in1_beta"]), 0.0)
    z = inorm(conv(y, params["conv2_w"], params["conv2_b"]),
              params["in2_gamma"], params["in2_beta"])
    return jnp.transpose(z + x, (0, 3, 1, 2))


if __name__ == "__main__":
    def make_inputs(key, N, C, H, W):
        kx, kw1, kb1, kw2, kb2 = jax.random.split(key, 5)
        x = jax.random.normal(kx, (N, C, H, W), jnp.float32)
        params = {
            # conv weights/bias in PyTorch layout (Cout, Cin, kh, kw)
            "conv1_w": jax.random.normal(kw1, (C, C, 3, 3), jnp.float32) * 0.1,
            "conv1_b": jax.random.normal(kb1, (C,), jnp.float32) * 0.1,
            "conv2_w": jax.random.normal(kw2, (C, C, 3, 3), jnp.float32) * 0.1,
            "conv2_b": jax.random.normal(kb2, (C,), jnp.float32) * 0.1,
            # InstanceNorm2d(affine=True) default init: weight=1, bias=0
            "in1_gamma": jnp.ones((C,), jnp.float32),
            "in1_beta": jnp.zeros((C,), jnp.float32),
            "in2_gamma": jnp.ones((C,), jnp.float32),
            "in2_beta": jnp.zeros((C,), jnp.float32),
        }
        return x, params

    k_small, k_big = jax.random.split(jax.random.PRNGKey(0))

    # --- small-shape checks (N=2, C=4, 16x16) ----------------------------------
    x, params = make_inputs(k_small, 2, 4, 16, 16)
    ref = jax.block_until_ready(_reference(x, params))

    # f32 MXU path: matches reference to fp rounding (bias drop is exact).
    out_f32 = jax.block_until_ready(
        residual_block(x, params, mxu_dtype=jnp.float32))
    assert out_f32.shape == x.shape, out_f32.shape
    err_f32 = float(jnp.max(jnp.abs(out_f32 - ref)))
    assert err_f32 < 1e-4, err_f32

    # default path: bf16 MXU operands, f32 accumulation / norm / residual.
    out_bf16 = jax.block_until_ready(residual_block(x, params))
    err_bf16 = float(jnp.max(jnp.abs(out_bf16 - ref)))
    assert err_bf16 < 0.15, err_bf16

    # --- lane-dense check at production channel count (C=128, small spatial) ---
    x2, params2 = make_inputs(k_big, 1, 128, 16, 16)
    ref2 = jax.block_until_ready(_reference(x2, params2))
    out2 = jax.block_until_ready(residual_block(x2, params2))
    err2 = float(jnp.max(jnp.abs(out2 - ref2)))
    assert err2 < 0.3, err2

    print("KERNEL_OK")
</pallas_src>

<mosaic_0001>
module attributes {stable_mosaic.version = 11 : i64} {
  func.func @_resblock_kernel(%arg0: i32, %arg1: memref<1x16x16x4xf32, #tpu.memory_space<vmem>>, %arg2: memref<3x12x4xf32, #tpu.memory_space<vmem>>, %arg3: memref<1x4xf32, #tpu.memory_space<vmem>>, %arg4: memref<1x4xf32, #tpu.memory_space<vmem>>, %arg5: memref<3x12x4xf32, #tpu.memory_space<vmem>>, %arg6: memref<1x4xf32, #tpu.memory_space<vmem>>, %arg7: memref<1x4xf32, #tpu.memory_space<vmem>>, %arg8: memref<1x16x16x4xf32, #tpu.memory_space<vmem>>, %arg9: memref<18x18x4xf32, #tpu.memory_space<vmem>>, %arg10: memref<256x4xf32, #tpu.memory_space<vmem>>) attributes {dimension_semantics = [#tpu.dimension_semantics<parallel>], iteration_bounds = array<i64: 2>, scalar_prefetch = 0 : i64, scratch_operands = 2 : i64, tpu.core_type = #tpu.core_type<tc>, window_params = [{transform_indices = @transform_0, window_bounds = array<i64: 1, 16, 16, 4>}, {pipeline_mode = #tpu.pipeline_mode<synchronous>, transform_indices = @transform_1, window_bounds = array<i64: 3, 12, 4>}, {pipeline_mode = #tpu.pipeline_mode<synchronous>, transform_indices = @transform_2, window_bounds = array<i64: 1, 4>}, {pipeline_mode = #tpu.pipeline_mode<synchronous>, transform_indices = @transform_3, window_bounds = array<i64: 1, 4>}, {pipeline_mode = #tpu.pipeline_mode<synchronous>, transform_indices = @transform_4, window_bounds = array<i64: 3, 12, 4>}, {pipeline_mode = #tpu.pipeline_mode<synchronous>, transform_indices = @transform_5, window_bounds = array<i64: 1, 4>}, {pipeline_mode = #tpu.pipeline_mode<synchronous>, transform_indices = @transform_6, window_bounds = array<i64: 1, 4>}, {transform_indices = @transform_7, window_bounds = array<i64: 1, 16, 16, 4>}]} {
    %c0 = arith.constant 0 : index
    %c0_0 = arith.constant 0 : index
    %c0_1 = arith.constant 0 : index
    %c0_2 = arith.constant 0 : index
    %0 = vector.load %arg1[%c0, %c0_0, %c0_1, %c0_2] : memref<1x16x16x4xf32, #tpu.memory_space<vmem>>, vector<1x16x16x4xf32>
    %1 = vector.shape_cast %0 : vector<1x16x16x4xf32> to vector<16x16x4xf32>
    %c1 = arith.constant 1 : index
    %c1_3 = arith.constant 1 : index
    %c0_4 = arith.constant 0 : index
    %2 = vector.load %arg9[%c1, %c1_3, %c0_4] : memref<18x18x4xf32, #tpu.memory_space<vmem>>, vector<16x16x4xf32>
    tpu.vector_store %arg9[%c1, %c1_3, %c0_4], %1 {strides = array<i32>} : memref<18x18x4xf32, #tpu.memory_space<vmem>>, vector<16x16x4xf32>,
    %3 = vector.extract_strided_slice %1 {offsets = [1, 0, 0], sizes = [1, 16, 4], strides = [1, 1, 1]} : vector<16x16x4xf32> to vector<1x16x4xf32>
    %c0_5 = arith.constant 0 : index
    %c1_6 = arith.constant 1 : index
    %c0_7 = arith.constant 0 : index
    %4 = vector.load %arg9[%c0_5, %c1_6, %c0_7] : memref<18x18x4xf32, #tpu.memory_space<vmem>>, vector<1x16x4xf32>
    tpu.vector_store %arg9[%c0_5, %c1_6, %c0_7], %3 {strides = array<i32>} : memref<18x18x4xf32, #tpu.memory_space<vmem>>, vector<1x16x4xf32>,
    %5 = vector.extract_strided_slice %1 {offsets = [14, 0, 0], sizes = [1, 16, 4], strides = [1, 1, 1]} : vector<16x16x4xf32> to vector<1x16x4xf32>
    %c17 = arith.constant 17 : index
    %c1_8 = arith.constant 1 : index
    %c0_9 = arith.constant 0 : index
    %6 = vector.load %arg9[%c17, %c1_8, %c0_9] : memref<18x18x4xf32, #tpu.memory_space<vmem>>, vector<1x16x4xf32>
    tpu.vector_store %arg9[%c17, %c1_8, %c0_9], %5 {strides = array<i32>} : memref<18x18x4xf32, #tpu.memory_space<vmem>>, vector<1x16x4xf32>,
    %c0_10 = arith.constant 0 : index
    %c2 = arith.constant 2 : index
    %c0_11 = arith.constant 0 : index
    %7 = vector.load %arg9[%c0_10, %c2, %c0_11] : memref<18x18x4xf32, #tpu.memory_space<vmem>>, vector<18x1x4xf32>
    %c0_12 = arith.constant 0 : index
    %c0_13 = arith.constant 0 : index
    %c0_14 = arith.constant 0 : index
    %8 = vector.load %arg9[%c0_12, %c0_13, %c0_14] : memref<18x18x4xf32, #tpu.memory_space<vmem>>, vector<18x1x4xf32>
    tpu.vector_store %arg9[%c0_12, %c0_13, %c0_14], %7 {strides = array<i32>} : memref<18x18x4xf32, #tpu.memory_space<vmem>>, vector<18x1x4xf32>,
    %c0_15 = arith.constant 0 : index
    %c15 = arith.constant 15 : index
    %c0_16 = arith.constant 0 : index
    %9 = vector.load %arg9[%c0_15, %c15, %c0_16] : memref<18x18x4xf32, #tpu.memory_space<vmem>>, vector<18x1x4xf32>
    %c0_17 = arith.constant 0 : index
    %c17_18 = arith.constant 17 : index
    %c0_19 = arith.constant 0 : index
    %10 = vector.load %arg9[%c0_17, %c17_18, %c0_19] : memref<18x18x4xf32, #tpu.memory_space<vmem>>, vector<18x1x4xf32>
    tpu.vector_store %arg9[%c0_17, %c17_18, %c0_19], %9 {strides = array<i32>} : memref<18x18x4xf32, #tpu.memory_space<vmem>>, vector<18x1x4xf32>,
    %c0_20 = arith.constant 0 : index
    %c0_21 = arith.constant 0 : index
    %c0_22 = arith.constant 0 : index
    %11 = vector.load %arg9[%c0_20, %c0_21, %c0_22] : memref<18x18x4xf32, #tpu.memory_space<vmem>>, vector<18x18x4xf32>
    %12 = vector.extract_strided_slice %11 {offsets = [0, 0, 0], sizes = [18, 16, 4], strides = [1, 1, 1]} : vector<18x18x4xf32> to vector<18x16x4xf32>
    %13 = vector.extract_strided_slice %11 {offsets = [0, 1, 0], sizes = [18, 16, 4], strides = [1, 1, 1]} : vector<18x18x4xf32> to vector<18x16x4xf32>
    %14 = vector.extract_strided_slice %11 {offsets = [0, 2, 0], sizes = [18, 16, 4], strides = [1, 1, 1]} : vector<18x18x4xf32> to vector<18x16x4xf32>
    %15 = tpu.concatenate %12, %13, %14 in 2 : vector<18x16x4xf32>, vector<18x16x4xf32>, vector<18x16x4xf32> -> vector<18x16x12xf32>
    %16 = vector.extract_strided_slice %15 {offsets = [0, 0, 0], sizes = [16, 16, 12], strides = [1, 1, 1]} : vector<18x16x12xf32> to vector<16x16x12xf32>
    %17 = vector.shape_cast %16 : vector<16x16x12xf32> to vector<256x12xf32>
    %c0_23 = arith.constant 0 : index
    %c0_24 = arith.constant 0 : index
    %c0_25 = arith.constant 0 : index
    %18 = vector.load %arg2[%c0_23, %c0_24, %c0_25] : memref<3x12x4xf32, #tpu.memory_space<vmem>>, vector<1x12x4xf32>
    %19 = vector.shape_cast %18 : vector<1x12x4xf32> to vector<12x4xf32>
    %cst = arith.constant dense<0.000000e+00> : vector<256x4xf32>
    %20 = tpu.matmul %17, %19, %cst {dimension_numbers = #tpu.dot_dimension_numbers<[1], [0], [0], [1], [0, 0, 1, 1], [], []>} : vector<256x12xf32>, vector<12x4xf32>, vector<256x4xf32> -> vector<256x4xf32>
    %c0_26 = arith.constant 0 : index
    %c0_27 = arith.constant 0 : index
    %21 = vector.load %arg10[%c0_26, %c0_27] : memref<256x4xf32, #tpu.memory_space<vmem>>, vector<256x4xf32>
    tpu.vector_store %arg10[%c0_26, %c0_27], %20 {strides = array<i32>} : memref<256x4xf32, #tpu.memory_space<vmem>>, vector<256x4xf32>,
    %22 = vector.extract_strided_slice %15 {offsets = [1, 0, 0], sizes = [16, 16, 12], strides = [1, 1, 1]} : vector<18x16x12xf32> to vector<16x16x12xf32>
    %23 = vector.shape_cast %22 : vector<16x16x12xf32> to vector<256x12xf32>
    %c1_28 = arith.constant 1 : index
    %c0_29 = arith.constant 0 : index
    %c0_30 = arith.constant 0 : index
    %24 = vector.load %arg2[%c1_28, %c0_29, %c0_30] : memref<3x12x4xf32, #tpu.memory_space<vmem>>, vector<1x12x4xf32>
    %25 = vector.shape_cast %24 : vector<1x12x4xf32> to vector<12x4xf32>
    %cst_31 = arith.constant dense<0.000000e+00> : vector<256x4xf32>
    %26 = tpu.matmul %23, %25, %cst_31 {dimension_numbers = #tpu.dot_dimension_numbers<[1], [0], [0], [1], [0, 0, 1, 1], [], []>} : vector<256x12xf32>, vector<12x4xf32>, vector<256x4xf32> -> vector<256x4xf32>
    %c0_32 = arith.constant 0 : index
    %c0_33 = arith.constant 0 : index
    %27 = vector.load %arg10[%c0_32, %c0_33] : memref<256x4xf32, #tpu.memory_space<vmem>>, vector<256x4xf32>
    %28 = arith.addf %27, %26 : vector<256x4xf32>
    %c0_34 = arith.constant 0 : index
    %c0_35 = arith.constant 0 : index
    %29 = vector.load %arg10[%c0_34, %c0_35] : memref<256x4xf32, #tpu.memory_space<vmem>>, vector<256x4xf32>
    tpu.vector_store %arg10[%c0_34, %c0_35], %28 {strides = array<i32>} : memref<256x4xf32, #tpu.memory_space<vmem>>, vector<256x4xf32>,
    %30 = vector.extract_strided_slice %15 {offsets = [2, 0, 0], sizes = [16, 16, 12], strides = [1, 1, 1]} : vector<18x16x12xf32> to vector<16x16x12xf32>
    %31 = vector.shape_cast %30 : vector<16x16x12xf32> to vector<256x12xf32>
    %c2_36 = arith.constant 2 : index
    %c0_37 = arith.constant 0 : index
    %c0_38 = arith.constant 0 : index
    %32 = vector.load %arg2[%c2_36, %c0_37, %c0_38] : memref<3x12x4xf32, #tpu.memory_space<vmem>>, vector<1x12x4xf32>
    %33 = vector.shape_cast %32 : vector<1x12x4xf32> to vector<12x4xf32>
    %cst_39 = arith.constant dense<0.000000e+00> : vector<256x4xf32>
    %34 = tpu.matmul %31, %33, %cst_39 {dimension_numbers = #tpu.dot_dimension_numbers<[1], [0], [0], [1], [0, 0, 1, 1], [], []>} : vector<256x12xf32>, vector<12x4xf32>, vector<256x4xf32> -> vector<256x4xf32>
    %c0_40 = arith.constant 0 : index
    %c0_41 = arith.constant 0 : index
    %35 = vector.load %arg10[%c0_40, %c0_41] : memref<256x4xf32, #tpu.memory_space<vmem>>, vector<256x4xf32>
    %36 = arith.addf %35, %34 : vector<256x4xf32>
    %c0_42 = arith.constant 0 : index
    %c0_43 = arith.constant 0 : index
    %37 = vector.load %arg10[%c0_42, %c0_43] : memref<256x4xf32, #tpu.memory_space<vmem>>, vector<256x4xf32>
    tpu.vector_store %arg10[%c0_42, %c0_43], %36 {strides = array<i32>} : memref<256x4xf32, #tpu.memory_space<vmem>>, vector<256x4xf32>,
    %c0_44 = arith.constant 0 : index
    %c0_45 = arith.constant 0 : index
    %38 = vector.load %arg10[%c0_44, %c0_45] : memref<256x4xf32, #tpu.memory_space<vmem>>, vector<256x4xf32>
    %c0_46 = arith.constant 0 : index
    %c0_47 = arith.constant 0 : index
    %39 = vector.load %arg3[%c0_46, %c0_47] : memref<1x4xf32, #tpu.memory_space<vmem>>, vector<1x4xf32>
    %c0_48 = arith.constant 0 : index
    %c0_49 = arith.constant 0 : index
    %40 = vector.load %arg4[%c0_48, %c0_49] : memref<1x4xf32, #tpu.memory_space<vmem>>, vector<1x4xf32>
    %cst_50 = arith.constant dense<0.000000e+00> : vector<4xf32>
    %41 = vector.multi_reduction <add>, %38, %cst_50 [0] : vector<256x4xf32> to vector<4xf32>
    %42 = vector.shape_cast %41 : vector<4xf32> to vector<1x4xf32>
    %43 = arith.mulf %38, %38 : vector<256x4xf32>
    %cst_51 = arith.constant dense<0.000000e+00> : vector<4xf32>
    %44 = vector.multi_reduction <add>, %43, %cst_51 [0] : vector<256x4xf32> to vector<4xf32>
    %45 = vector.shape_cast %44 : vector<4xf32> to vector<1x4xf32>
    %cst_52 = arith.constant 3.906250e-03 : f32
    %46 = vector.broadcast %cst_52 : f32 to vector<1x4xf32>
    %47 = arith.mulf %42, %46 : vector<1x4xf32>
    %cst_53 = arith.constant 3.906250e-03 : f32
    %48 = vector.broadcast %cst_53 : f32 to vector<1x4xf32>
    %49 = arith.mulf %45, %48 : vector<1x4xf32>
    %50 = arith.mulf %47, %47 : vector<1x4xf32>
    %51 = arith.subf %49, %50 : vector<1x4xf32>
    %cst_54 = arith.constant 0.000000e+00 : f32
    %52 = vector.broadcast %cst_54 : f32 to vector<1x4xf32>
    %53 = arith.maximumf %51, %52 : vector<1x4xf32>
    %cst_55 = arith.constant 9.99999974E-6 : f32
    %54 = vector.broadcast %cst_55 : f32 to vector<1x4xf32>
    %55 = arith.addf %53, %54 : vector<1x4xf32>
    %56 = math.rsqrt %55 : vector<1x4xf32>
    %57 = arith.mulf %39, %56 : vector<1x4xf32>
    %58 = arith.mulf %47, %57 : vector<1x4xf32>
    %59 = arith.subf %40, %58 : vector<1x4xf32>
    %60 = vector.broadcast %57 : vector<1x4xf32> to vector<256x4xf32>
    %61 = arith.mulf %38, %60 : vector<256x4xf32>
    %62 = vector.broadcast %59 : vector<1x4xf32> to vector<256x4xf32>
    %63 = arith.addf %61, %62 : vector<256x4xf32>
    %cst_56 = arith.constant 0.000000e+00 : f32
    %64 = vector.broadcast %cst_56 : f32 to vector<256x4xf32>
    %65 = arith.maximumf %63, %64 : vector<256x4xf32>
    %66 = vector.shape_cast %65 : vector<256x4xf32> to vector<16x16x4xf32>
    %c1_57 = arith.constant 1 : index
    %c1_58 = arith.constant 1 : index
    %c0_59 = arith.constant 0 : index
    %67 = vector.load %arg9[%c1_57, %c1_58, %c0_59] : memref<18x18x4xf32, #tpu.memory_space<vmem>>, vector<16x16x4xf32>
    tpu.vector_store %arg9[%c1_57, %c1_58, %c0_59], %66 {strides = array<i32>} : memref<18x18x4xf32, #tpu.memory_space<vmem>>, vector<16x16x4xf32>,
    %68 = vector.extract_strided_slice %66 {offsets = [1, 0, 0], sizes = [1, 16, 4], strides = [1, 1, 1]} : vector<16x16x4xf32> to vector<1x16x4xf32>
    %c0_60 = arith.constant 0 : index
    %c1_61 = arith.constant 1 : index
    %c0_62 = arith.constant 0 : index
    %69 = vector.load %arg9[%c0_60, %c1_61, %c0_62] : memref<18x18x4xf32, #tpu.memory_space<vmem>>, vector<1x16x4xf32>
    tpu.vector_store %arg9[%c0_60, %c1_61, %c0_62], %68 {strides = array<i32>} : memref<18x18x4xf32, #tpu.memory_space<vmem>>, vector<1x16x4xf32>,
    %70 = vector.extract_strided_slice %66 {offsets = [14, 0, 0], sizes = [1, 16, 4], strides = [1, 1, 1]} : vector<16x16x4xf32> to vector<1x16x4xf32>
    %c17_63 = arith.constant 17 : index
    %c1_64 = arith.constant 1 : index
    %c0_65 = arith.constant 0 : index
    %71 = vector.load %arg9[%c17_63, %c1_64, %c0_65] : memref<18x18x4xf32, #tpu.memory_space<vmem>>, vector<1x16x4xf32>
    tpu.vector_store %arg9[%c17_63, %c1_64, %c0_65], %70 {strides = array<i32>} : memref<18x18x4xf32, #tpu.memory_space<vmem>>, vector<1x16x4xf32>,
    %c0_66 = arith.constant 0 : index
    %c2_67 = arith.constant 2 : index
    %c0_68 = arith.constant 0 : index
    %72 = vector.load %arg9[%c0_66, %c2_67, %c0_68] : memref<18x18x4xf32, #tpu.memory_space<vmem>>, vector<18x1x4xf32>
    %c0_69 = arith.constant 0 : index
    %c0_70 = arith.constant 0 : index
    %c0_71 = arith.constant 0 : index
    %73 = vector.load %arg9[%c0_69, %c0_70, %c0_71] : memref<18x18x4xf32, #tpu.memory_space<vmem>>, vector<18x1x4xf32>
    tpu.vector_store %arg9[%c0_69, %c0_70, %c0_71], %72 {strides = array<i32>} : memref<18x18x4xf32, #tpu.memory_space<vmem>>, vector<18x1x4xf32>,
    %c0_72 = arith.constant 0 : index
    %c15_73 = arith.constant 15 : index
    %c0_74 = arith.constant 0 : index
    %74 = vector.load %arg9[%c0_72, %c15_73, %c0_74] : memref<18x18x4xf32, #tpu.memory_space<vmem>>, vector<18x1x4xf32>
    %c0_75 = arith.constant 0 : index
    %c17_76 = arith.constant 17 : index
    %c0_77 = arith.constant 0 : index
    %75 = vector.load %arg9[%c0_75, %c17_76, %c0_77] : memref<18x18x4xf32, #tpu.memory_space<vmem>>, vector<18x1x4xf32>
    tpu.vector_store %arg9[%c0_75, %c17_76, %c0_77], %74 {strides = array<i32>} : memref<18x18x4xf32, #tpu.memory_space<vmem>>, vector<18x1x4xf32>,
    %c0_78 = arith.constant 0 : index
    %c0_79 = arith.constant 0 : index
    %c0_80 = arith.constant 0 : index
    %76 = vector.load %arg9[%c0_78, %c0_79, %c0_80] : memref<18x18x4xf32, #tpu.memory_space<vmem>>, vector<18x18x4xf32>
    %77 = vector.extract_strided_slice %76 {offsets = [0, 0, 0], sizes = [18, 16, 4], strides = [1, 1, 1]} : vector<18x18x4xf32> to vector<18x16x4xf32>
    %78 = vector.extract_strided_slice %76 {offsets = [0, 1, 0], sizes = [18, 16, 4], strides = [1, 1, 1]} : vector<18x18x4xf32> to vector<18x16x4xf32>
    %79 = vector.extract_strided_slice %76 {offsets = [0, 2, 0], sizes = [18, 16, 4], strides = [1, 1, 1]} : vector<18x18x4xf32> to vector<18x16x4xf32>
    %80 = tpu.concatenate %77, %78, %79 in 2 : vector<18x16x4xf32>, vector<18x16x4xf32>, vector<18x16x4xf32> -> vector<18x16x12xf32>
    %81 = vector.extract_strided_slice %80 {offsets = [0, 0, 0], sizes = [16, 16, 12], strides = [1, 1, 1]} : vector<18x16x12xf32> to vector<16x16x12xf32>
    %82 = vector.shape_cast %81 : vector<16x16x12xf32> to vector<256x12xf32>
    %c0_81 = arith.constant 0 : index
    %c0_82 = arith.constant 0 : index
    %c0_83 = arith.constant 0 : index
    %83 = vector.load %arg5[%c0_81, %c0_82, %c0_83] : memref<3x12x4xf32, #tpu.memory_space<vmem>>, vector<1x12x4xf32>
    %84 = vector.shape_cast %83 : vector<1x12x4xf32> to vector<12x4xf32>
    %cst_84 = arith.constant dense<0.000000e+00> : vector<256x4xf32>
    %85 = tpu.matmul %82, %84, %cst_84 {dimension_numbers = #tpu.dot_dimension_numbers<[1], [0], [0], [1], [0, 0, 1, 1], [], []>} : vector<256x12xf32>, vector<12x4xf32>, vector<256x4xf32> -> vector<256x4xf32>
    %c0_85 = arith.constant 0 : index
    %c0_86 = arith.constant 0 : index
    %86 = vector.load %arg10[%c0_85, %c0_86] : memref<256x4xf32, #tpu.memory_space<vmem>>, vector<256x4xf32>
    tpu.vector_store %arg10[%c0_85, %c0_86], %85 {strides = array<i32>} : memref<256x4xf32, #tpu.memory_space<vmem>>, vector<256x4xf32>,
    %87 = vector.extract_strided_slice %80 {offsets = [1, 0, 0], sizes = [16, 16, 12], strides = [1, 1, 1]} : vector<18x16x12xf32> to vector<16x16x12xf32>
    %88 = vector.shape_cast %87 : vector<16x16x12xf32> to vector<256x12xf32>
    %c1_87 = arith.constant 1 : index
    %c0_88 = arith.constant 0 : index
    %c0_89 = arith.constant 0 : index
    %89 = vector.load %arg5[%c1_87, %c0_88, %c0_89] : memref<3x12x4xf32, #tpu.memory_space<vmem>>, vector<1x12x4xf32>
    %90 = vector.shape_cast %89 : vector<1x12x4xf32> to vector<12x4xf32>
    %cst_90 = arith.constant dense<0.000000e+00> : vector<256x4xf32>
    %91 = tpu.matmul %88, %90, %cst_90 {dimension_numbers = #tpu.dot_dimension_numbers<[1], [0], [0], [1], [0, 0, 1, 1], [], []>} : vector<256x12xf32>, vector<12x4xf32>, vector<256x4xf32> -> vector<256x4xf32>
    %c0_91 = arith.constant 0 : index
    %c0_92 = arith.constant 0 : index
    %92 = vector.load %arg10[%c0_91, %c0_92] : memref<256x4xf32, #tpu.memory_space<vmem>>, vector<256x4xf32>
    %93 = arith.addf %92, %91 : vector<256x4xf32>
    %c0_93 = arith.constant 0 : index
    %c0_94 = arith.constant 0 : index
    %94 = vector.load %arg10[%c0_93, %c0_94] : memref<256x4xf32, #tpu.memory_space<vmem>>, vector<256x4xf32>
    tpu.vector_store %arg10[%c0_93, %c0_94], %93 {strides = array<i32>} : memref<256x4xf32, #tpu.memory_space<vmem>>, vector<256x4xf32>,
    %95 = vector.extract_strided_slice %80 {offsets = [2, 0, 0], sizes = [16, 16, 12], strides = [1, 1, 1]} : vector<18x16x12xf32> to vector<16x16x12xf32>
    %96 = vector.shape_cast %95 : vector<16x16x12xf32> to vector<256x12xf32>
    %c2_95 = arith.constant 2 : index
    %c0_96 = arith.constant 0 : index
    %c0_97 = arith.constant 0 : index
    %97 = vector.load %arg5[%c2_95, %c0_96, %c0_97] : memref<3x12x4xf32, #tpu.memory_space<vmem>>, vector<1x12x4xf32>
    %98 = vector.shape_cast %97 : vector<1x12x4xf32> to vector<12x4xf32>
    %cst_98 = arith.constant dense<0.000000e+00> : vector<256x4xf32>
    %99 = tpu.matmul %96, %98, %cst_98 {dimension_numbers = #tpu.dot_dimension_numbers<[1], [0], [0], [1], [0, 0, 1, 1], [], []>} : vector<256x12xf32>, vector<12x4xf32>, vector<256x4xf32> -> vector<256x4xf32>
    %c0_99 = arith.constant 0 : index
    %c0_100 = arith.constant 0 : index
    %100 = vector.load %arg10[%c0_99, %c0_100] : memref<256x4xf32, #tpu.memory_space<vmem>>, vector<256x4xf32>
    %101 = arith.addf %100, %99 : vector<256x4xf32>
    %c0_101 = arith.constant 0 : index
    %c0_102 = arith.constant 0 : index
    %102 = vector.load %arg10[%c0_101, %c0_102] : memref<256x4xf32, #tpu.memory_space<vmem>>, vector<256x4xf32>
    tpu.vector_store %arg10[%c0_101, %c0_102], %101 {strides = array<i32>} : memref<256x4xf32, #tpu.memory_space<vmem>>, vector<256x4xf32>,
    %c0_103 = arith.constant 0 : index
    %c0_104 = arith.constant 0 : index
    %103 = vector.load %arg10[%c0_103, %c0_104] : memref<256x4xf32, #tpu.memory_space<vmem>>, vector<256x4xf32>
    %c0_105 = arith.constant 0 : index
    %c0_106 = arith.constant 0 : index
    %104 = vector.load %arg6[%c0_105, %c0_106] : memref<1x4xf32, #tpu.memory_space<vmem>>, vector<1x4xf32>
    %c0_107 = arith.constant 0 : index
    %c0_108 = arith.constant 0 : index
    %105 = vector.load %arg7[%c0_107, %c0_108] : memref<1x4xf32, #tpu.memory_space<vmem>>, vector<1x4xf32>
    %cst_109 = arith.constant dense<0.000000e+00> : vector<4xf32>
    %106 = vector.multi_reduction <add>, %103, %cst_109 [0] : vector<256x4xf32> to vector<4xf32>
    %107 = vector.shape_cast %106 : vector<4xf32> to vector<1x4xf32>
    %108 = arith.mulf %103, %103 : vector<256x4xf32>
    %cst_110 = arith.constant dense<0.000000e+00> : vector<4xf32>
    %109 = vector.multi_reduction <add>, %108, %cst_110 [0] : vector<256x4xf32> to vector<4xf32>
    %110 = vector.shape_cast %109 : vector<4xf32> to vector<1x4xf32>
    %cst_111 = arith.constant 3.906250e-03 : f32
    %111 = vector.broadcast %cst_111 : f32 to vector<1x4xf32>
    %112 = arith.mulf %107, %111 : vector<1x4xf32>
    %cst_112 = arith.constant 3.906250e-03 : f32
    %113 = vector.broadcast %cst_112 : f32 to vector<1x4xf32>
    %114 = arith.mulf %110, %113 : vector<1x4xf32>
    %115 = arith.mulf %112, %112 : vector<1x4xf32>
    %116 = arith.subf %114, %115 : vector<1x4xf32>
    %cst_113 = arith.constant 0.000000e+00 : f32
    %117 = vector.broadcast %cst_113 : f32 to vector<1x4xf32>
    %118 = arith.maximumf %116, %117 : vector<1x4xf32>
    %cst_114 = arith.constant 9.99999974E-6 : f32
    %119 = vector.broadcast %cst_114 : f32 to vector<1x4xf32>
    %120 = arith.addf %118, %119 : vector<1x4xf32>
    %121 = math.rsqrt %120 : vector<1x4xf32>
    %122 = arith.mulf %104, %121 : vector<1x4xf32>
    %123 = arith.mulf %112, %122 : vector<1x4xf32>
    %124 = arith.subf %105, %123 : vector<1x4xf32>
    %125 = vector.broadcast %122 : vector<1x4xf32> to vector<256x4xf32>
    %126 = arith.mulf %103, %125 : vector<256x4xf32>
    %127 = vector.broadcast %124 : vector<1x4xf32> to vector<256x4xf32>
    %128 = arith.addf %126, %127 : vector<256x4xf32>
    %129 = vector.shape_cast %128 : vector<256x4xf32> to vector<16x16x4xf32>
    %c0_115 = arith.constant 0 : index
    %c0_116 = arith.constant 0 : index
    %c0_117 = arith.constant 0 : index
    %c0_118 = arith.constant 0 : index
    %130 = vector.load %arg1[%c0_115, %c0_116, %c0_117, %c0_118] : memref<1x16x16x4xf32, #tpu.memory_space<vmem>>, vector<1x16x16x4xf32>
    %131 = vector.shape_cast %130 : vector<1x16x16x4xf32> to vector<16x16x4xf32>
    %132 = arith.addf %129, %131 : vector<16x16x4xf32>
    %c0_119 = arith.constant 0 : index
    %c0_120 = arith.constant 0 : index
    %c0_121 = arith.constant 0 : index
    %c0_122 = arith.constant 0 : index
    %133 = vector.load %arg8[%c0_119, %c0_120, %c0_121, %c0_122] : memref<1x16x16x4xf32, #tpu.memory_space<vmem>>, vector<1x16x16x4xf32>
    %134 = vector.shape_cast %133 : vector<1x16x16x4xf32> to vector<16x16x4xf32>
    %135 = vector.shape_cast %132 : vector<16x16x4xf32> to vector<1x16x16x4xf32>
    tpu.vector_store %arg8[%c0_119, %c0_120, %c0_121, %c0_122], %135 {strides = array<i32>} : memref<1x16x16x4xf32, #tpu.memory_space<vmem>>, vector<1x16x16x4xf32>,
    return
  }
  func.func @transform_0(%arg0: i32) -> (i32, i32, i32, i32) {
    %c0_i32 = arith.constant 0 : i32
    %c0_i32_0 = arith.constant 0 : i32
    %c0_i32_1 = arith.constant 0 : i32
    %c0_i32_2 = arith.constant 0 : i32
    return %arg0, %c0_i32, %c0_i32_0, %c0_i32_1 : i32, i32, i32, i32
  }
  func.func @transform_1(%arg0: i32) -> (i32, i32, i32) {
    %c0_i32 = arith.constant 0 : i32
    %c0_i32_0 = arith.constant 0 : i32
    %c0_i32_1 = arith.constant 0 : i32
    %c0_i32_2 = arith.constant 0 : i32
    return %c0_i32, %c0_i32_0, %c0_i32_1 : i32, i32, i32
  }
  func.func @transform_2(%arg0: i32) -> (i32, i32) {
    %c0_i32 = arith.constant 0 : i32
    %c0_i32_0 = arith.constant 0 : i32
    %c0_i32_1 = arith.constant 0 : i32
    return %c0_i32, %c0_i32_0 : i32, i32
  }
  func.func @transform_3(%arg0: i32) -> (i32, i32) {
    %c0_i32 = arith.constant 0 : i32
    %c0_i32_0 = arith.constant 0 : i32
    %c0_i32_1 = arith.constant 0 : i32
    return %c0_i32, %c0_i32_0 : i32, i32
  }
  func.func @transform_4(%arg0: i32) -> (i32, i32, i32) {
    %c0_i32 = arith.constant 0 : i32
    %c0_i32_0 = arith.constant 0 : i32
    %c0_i32_1 = arith.constant 0 : i32
    %c0_i32_2 = arith.constant 0 : i32
    return %c0_i32, %c0_i32_0, %c0_i32_1 : i32, i32, i32
  }
  func.func @transform_5(%arg0: i32) -> (i32, i32) {
    %c0_i32 = arith.constant 0 : i32
    %c0_i32_0 = arith.constant 0 : i32
    %c0_i32_1 = arith.constant 0 : i32
    return %c0_i32, %c0_i32_0 : i32, i32
  }
  func.func @transform_6(%arg0: i32) -> (i32, i32) {
    %c0_i32 = arith.constant 0 : i32
    %c0_i32_0 = arith.constant 0 : i32
    %c0_i32_1 = arith.constant 0 : i32
    return %c0_i32, %c0_i32_0 : i32, i32
  }
  func.func @transform_7(%arg0: i32) -> (i32, i32, i32, i32) {
    %c0_i32 = arith.constant 0 : i32
    %c0_i32_0 = arith.constant 0 : i32
    %c0_i32_1 = arith.constant 0 : i32
    %c0_i32_2 = arith.constant 0 : i32
    return %arg0, %c0_i32, %c0_i32_0, %c0_i32_1 : i32, i32, i32, i32
  }
}

</mosaic_0001>

<llo_original>
// kernel: _residual_block_impl.1
$region0: #{_residual_block_impl.1}
  #allocation0 [shape = 'u32[]', space=smem, size = 0x4, offset = 0x4, fixed_abs, tag = 'smem constant byte address 0x4 - core index']
  #allocation1 [shape = 'u32[72,128]{1,0:T(1,128)}', space=vmem, size = 0x9000, scoped, tag = 'internal scratch']
  #allocation2 [shape = 'f32[18,18,4]{2,1,0:T(8,128)}', space=vmem, size = 0x36000, scoped, tag = 'scratch operand']
  #allocation3 [shape = 'f32[256,4]{1,0:T(8,128)}', space=vmem, size = 0x20000, scoped, tag = 'scratch operand']
  %s0 = inlined_call_operand.vmem [shape: f32[2,16,16,4], index: 0, kind: input, shape index: {}]
  %s1 = inlined_call_operand.vmem [shape: f32[3,12,4], index: 1, kind: input, shape index: {}]
  %s2 = inlined_call_operand.vmem [shape: f32[1,4], index: 2, kind: input, shape index: {}]
  %s3 = inlined_call_operand.vmem [shape: f32[1,4], index: 3, kind: input, shape index: {}]
  %s4 = inlined_call_operand.vmem [shape: f32[3,12,4], index: 4, kind: input, shape index: {}]
  %s5 = inlined_call_operand.vmem [shape: f32[1,4], index: 5, kind: input, shape index: {}]
  %s6 = inlined_call_operand.vmem [shape: f32[1,4], index: 6, kind: input, shape index: {}]
  %s7 = inlined_call_operand.vmem [shape: f32[2,16,16,4], index: 7, kind: output, shape index: {}]
  %s8 = sld [smem:[#allocation0]]
  $region61: #{_residual_block_impl.1} parent=0
    _
  %s10 = ssub.s32 1, %s8
  %s11 = scalar_select 0, %s10, %s8
  loop: start=0, step=1, limit=4
  $region2: #{_residual_block_impl.1} parent=0 // loop_pre_header
    _
  $region3: #{_residual_block_impl.1} parent=0 // loop_header
    %s13 = sphi 0, %s17
    %p14 = scmp.ge.s32.totalorder %s13, 4
    %s23 = sphi 0, %s25
    %s26 = sphi 0, %s23
    %s27 = sphi 0, %s26
    %s43 = sphi 0, %s27
    %s47 = sphi 0, %s47
    %s49 = sphi 0, %s47
    %s50 = sphi 0, %s49
    %s64 = sphi 0, %s50
    %s68 = sphi 0, %s68
    %s70 = sphi 0, %s68
    %s71 = sphi 0, %s70
    %s85 = sphi 0, %s71
    %s89 = sphi 0, %s89
    %s91 = sphi 0, %s89
    %s92 = sphi 0, %s91
    %s106 = sphi 0, %s92
    %s110 = sphi 0, %s110
    %s112 = sphi 0, %s110
    %s113 = sphi 0, %s112
    %s127 = sphi 0, %s113
    %s131 = sphi 0, %s131
    %s133 = sphi 0, %s131
    %s134 = sphi 0, %s133
    %s148 = sphi 0, %s134
    %s152 = sphi 0, %s152
    %s154 = sphi 0, %s152
    %s155 = sphi 0, %s154
    %s169 = sphi 0, %s155
    %s175 = sphi 0, %s177
    %s178 = sphi 0, %s175
    %s179 = sphi 0, %s178
    %s195 = sphi 0, %s179
  $region4: #{_residual_block_impl.1} parent=0 // loop_header_branch
    %16 = sbr.rel (%p14) target = $region8
  $region5: #{_residual_block_impl.1} parent=0 // loop_body
    %s18 = ssub.s32 %s13, 1
    %s19 = ssub.s32 %s13, 2
    %s20 = sadd.s32 %s13, 1
    %s21 = ssub.s32 %s13, %s20
    %p22 = scmp.eq.s32.totalorder %s21, 0
    %s24 = sadd.s32 %s23, 1
    %s25 = scalar_select %p22, %s23, %s24
    %p28 = pneg %p22
    %p29 = scmp.eq.s32.totalorder %s13, 1
    %p30 = por %p28, %p29
    %p31 = scmp.ne.s32.totalorder %s23, %s26
    %p32 = scmp.eq.s32.totalorder %s13, 0
    %p33 = por %p31, %p32
    %p34 = scmp.ne.s32.totalorder %s23, %s26
    %p35 = scmp.eq.s32.totalorder %s18, 1
    %p36 = por %p34, %p35
    %p37 = scmp.ne.s32.totalorder %s26, %s27
    %p38 = scmp.eq.s32.totalorder %s18, 0
    %p39 = por %p37, %p38
    %p40 = scmp.ne.s32.totalorder %s26, %s27
    %p41 = scmp.eq.s32.totalorder %s19, 1
    %p42 = por %p40, %p41
    %p44 = scmp.ne.s32.totalorder %s27, %s43
    %p45 = scmp.eq.s32.totalorder %s19, 0
    %p46 = por %p44, %p45
    %s48 = sadd.s32 %s47, 1
    %p51 = scmp.eq.s32.totalorder %s13, 1
    %p52 = scmp.ne.s32.totalorder %s47, %s49
    %p53 = scmp.eq.s32.totalorder %s13, 0
    %p54 = por %p52, %p53
    %p55 = scmp.ne.s32.totalorder %s47, %s49
    %p56 = scmp.eq.s32.totalorder %s18, 1
    %p57 = por %p55, %p56
    %p58 = scmp.ne.s32.totalorder %s49, %s50
    %p59 = scmp.eq.s32.totalorder %s18, 0
    %p60 = por %p58, %p59
    %p61 = scmp.ne.s32.totalorder %s49, %s50
    %p62 = scmp.eq.s32.totalorder %s19, 1
    %p63 = por %p61, %p62
    %p65 = scmp.ne.s32.totalorder %s50, %s64
    %p66 = scmp.eq.s32.totalorder %s19, 0
    %p67 = por %p65, %p66
    %s69 = sadd.s32 %s68, 1
    %p72 = scmp.eq.s32.totalorder %s13, 1
    %p73 = scmp.ne.s32.totalorder %s68, %s70
    %p74 = scmp.eq.s32.totalorder %s13, 0
    %p75 = por %p73, %p74
    %p76 = scmp.ne.s32.totalorder %s68, %s70
    %p77 = scmp.eq.s32.totalorder %s18, 1
    %p78 = por %p76, %p77
    %p79 = scmp.ne.s32.totalorder %s70, %s71
    %p80 = scmp.eq.s32.totalorder %s18, 0
    %p81 = por %p79, %p80
    %p82 = scmp.ne.s32.totalorder %s70, %s71
    %p83 = scmp.eq.s32.totalorder %s19, 1
    %p84 = por %p82, %p83
    %p86 = scmp.ne.s32.totalorder %s71, %s85
    %p87 = scmp.eq.s32.totalorder %s19, 0
    %p88 = por %p86, %p87
    %s90 = sadd.s32 %s89, 1
    %p93 = scmp.eq.s32.totalorder %s13, 1
    %p94 = scmp.ne.s32.totalorder %s89, %s91
    %p95 = scmp.eq.s32.totalorder %s13, 0
    %p96 = por %p94, %p95
    %p97 = scmp.ne.s32.totalorder %s89, %s91
    %p98 = scmp.eq.s32.totalorder %s18, 1
    %p99 = por %p97, %p98
    %p100 = scmp.ne.s32.totalorder %s91, %s92
    %p101 = scmp.eq.s32.totalorder %s18, 0
    %p102 = por %p100, %p101
    %p103 = scmp.ne.s32.totalorder %s91, %s92
    %p104 = scmp.eq.s32.totalorder %s19, 1
    %p105 = por %p103, %p104
    %p107 = scmp.ne.s32.totalorder %s92, %s106
    %p108 = scmp.eq.s32.totalorder %s19, 0
    %p109 = por %p107, %p108
    %s111 = sadd.s32 %s110, 1
    %p114 = scmp.eq.s32.totalorder %s13, 1
    %p115 = scmp.ne.s32.totalorder %s110, %s112
    %p116 = scmp.eq.s32.totalorder %s13, 0
    %p117 = por %p115, %p116
    %p118 = scmp.ne.s32.totalorder %s110, %s112
    %p119 = scmp.eq.s32.totalorder %s18, 1
    %p120 = por %p118, %p119
    %p121 = scmp.ne.s32.totalorder %s112, %s113
    %p122 = scmp.eq.s32.totalorder %s18, 0
    %p123 = por %p121, %p122
    %p124 = scmp.ne.s32.totalorder %s112, %s113
    %p125 = scmp.eq.s32.totalorder %s19, 1
    %p126 = por %p124, %p125
    %p128 = scmp.ne.s32.totalorder %s113, %s127
    %p129 = scmp.eq.s32.totalorder %s19, 0
    %p130 = por %p128, %p129
    %s132 = sadd.s32 %s131, 1
    %p135 = scmp.eq.s32.totalorder %s13, 1
    %p136 = scmp.ne.s32.totalorder %s131, %s133
    %p137 = scmp.eq.s32.totalorder %s13, 0
    %p138 = por %p136, %p137
    %p139 = scmp.ne.s32.totalorder %s131, %s133
    %p140 = scmp.eq.s32.totalorder %s18, 1
    %p141 = por %p139, %p140
    %p142 = scmp.ne.s32.totalorder %s133, %s134
    %p143 = scmp.eq.s32.totalorder %s18, 0
    %p144 = por %p142, %p143
    %p145 = scmp.ne.s32.totalorder %s133, %s134
    %p146 = scmp.eq.s32.totalorder %s19, 1
    %p147 = por %p145, %p146
    %p149 = scmp.ne.s32.totalorder %s134, %s148
    %p150 = scmp.eq.s32.totalorder %s19, 0
    %p151 = por %p149, %p150
    %s153 = sadd.s32 %s152, 1
    %p156 = scmp.eq.s32.totalorder %s13, 1
    %p157 = scmp.ne.s32.totalorder %s152, %s154
    %p158 = scmp.eq.s32.totalorder %s13, 0
    %p159 = por %p157, %p158
    %p160 = scmp.ne.s32.totalorder %s152, %s154
    %p161 = scmp.eq.s32.totalorder %s18, 1
    %p162 = por %p160, %p161
    %p163 = scmp.ne.s32.totalorder %s154, %s155
    %p164 = scmp.eq.s32.totalorder %s18, 0
    %p165 = por %p163, %p164
    %p166 = scmp.ne.s32.totalorder %s154, %s155
    %p167 = scmp.eq.s32.totalorder %s19, 1
    %p168 = por %p166, %p167
    %p170 = scmp.ne.s32.totalorder %s155, %s169
    %p171 = scmp.eq.s32.totalorder %s19, 0
    %p172 = por %p170, %p171
    %s173 = ssub.s32 %s13, %s20
    %p174 = scmp.eq.s32.totalorder %s173, 0
    %s176 = sadd.s32 %s175, 1
    %s177 = scalar_select %p174, %s175, %s176
    %p180 = pneg %p174
    %p181 = scmp.eq.s32.totalorder %s13, 1
    %p182 = por %p180, %p181
    %p183 = scmp.ne.s32.totalorder %s175, %s178
    %p184 = scmp.eq.s32.totalorder %s13, 0
    %p185 = por %p183, %p184
    %p186 = scmp.ne.s32.totalorder %s175, %s178
    %p187 = scmp.eq.s32.totalorder %s18, 1
    %p188 = por %p186, %p187
    %p189 = scmp.ne.s32.totalorder %s178, %s179
    %p190 = scmp.eq.s32.totalorder %s18, 0
    %p191 = por %p189, %p190
    %p192 = scmp.ne.s32.totalorder %s178, %s179
    %p193 = scmp.eq.s32.totalorder %s19, 1
    %p194 = por %p192, %p193
    %p196 = scmp.ne.s32.totalorder %s179, %s195
    %p197 = scmp.eq.s32.totalorder %s19, 0
    %p198 = por %p196, %p197
    %p199 = scmp.le.s32.totalorder 1, %s13
    %p200 = scmp.lt.s32.totalorder %s13, 3
    %p201 = pnand %p199, %p200
    %p202 = pneg %p201
    // Predicated region
    $region9: #{_residual_block_impl.1} parent=5 // pred_check
      _
    $region10: #{_residual_block_impl.1} parent=5 // pred_check_branch
      %204 = sbr.rel (%p201) target = $region12
    $region11: #{_residual_block_impl.1} parent=5 // pred_region
      %s205 = ssub.s32 %s13, 1
      // Predicated region
      $region13: #{_residual_block_impl.1} parent=11 // pred_check
        %p206 = pneg %p60
      $region14: #{_residual_block_impl.1} parent=11 // pred_check_branch
        %208 = sbr.rel (%p206) target = $region16
      $region15: #{_residual_block_impl.1} parent=11 // pred_region
        _
      $region16: #{_residual_block_impl.1} parent=11 // pred_fallthru
        _
      // Predicated region
      $region17: #{_residual_block_impl.1} parent=11 // pred_check
        %p209 = pneg %p81
      $region18: #{_residual_block_impl.1} parent=11 // pred_check_branch
        %211 = sbr.rel (%p209) target = $region20
      $region19: #{_residual_block_impl.1} parent=11 // pred_region
        _
      $region20: #{_residual_block_impl.1} parent=11 // pred_fallthru
        _
      // Predicated region
      $region21: #{_residual_block_impl.1} parent=11 // pred_check
        %p212 = pneg %p102
      $region22: #{_residual_block_impl.1} parent=11 // pred_check_branch
        %214 = sbr.rel (%p212) target = $region24
      $region23: #{_residual_block_impl.1} parent=11 // pred_region
        _
      $region24: #{_residual_block_impl.1} parent=11 // pred_fallthru
        _
      // Predicated region
      $region25: #{_residual_block_impl.1} parent=11 // pred_check
        %p215 = pneg %p123
      $region26: #{_residual_block_impl.1} parent=11 // pred_check_branch
        %217 = sbr.rel (%p215) target = $region28
      $region27: #{_residual_block_impl.1} parent=11 // pred_region
        _
      $region28: #{_residual_block_impl.1} parent=11 // pred_fallthru
        _
      // Predicated region
      $region29: #{_residual_block_impl.1} parent=11 // pred_check
        %p218 = pneg %p144
      $region30: #{_residual_block_impl.1} parent=11 // pred_check_branch
        %220 = sbr.rel (%p218) target = $region32
      $region31: #{_residual_block_impl.1} parent=11 // pred_region
        _
      $region32: #{_residual_block_impl.1} parent=11 // pred_fallthru
        _
      // Predicated region
      $region33: #{_residual_block_impl.1} parent=11 // pred_check
        %p221 = pneg %p165
      $region34: #{_residual_block_impl.1} parent=11 // pred_check_branch
        %223 = sbr.rel (%p221) target = $region36
      $region35: #{_residual_block_impl.1} parent=11 // pred_region
        _
      $region36: #{_residual_block_impl.1} parent=11 // pred_fallthru
        _
    $region12: #{_residual_block_impl.1} parent=5 // pred_fallthru
      _
    %p224 = scmp.lt.s32.totalorder %s13, 2
    // Predicated region
    $region37: #{_residual_block_impl.1} parent=5 // pred_check
      %p225 = pneg %p224
    $region38: #{_residual_block_impl.1} parent=5 // pred_check_branch
      %227 = sbr.rel (%p225) target = $region40
    $region39: #{_residual_block_impl.1} parent=5 // pred_region
      // Predicated region
      $region41: #{_residual_block_impl.1} parent=39 // pred_check
        %p228 = pneg %p33
      $region42: #{_residual_block_impl.1} parent=39 // pred_check_branch
        %230 = sbr.rel (%p228) target = $region44
      $region43: #{_residual_block_impl.1} parent=39 // pred_region
        %p231 = scmp.lt.s32.totalorder %s13, 1
        %s232 = scalar_select %p231, %s13, 1
        %s233 = smul.addr %s232, 32
        %s234 = smul.addr %s233, 8
        %s235 = scalar_lea.vmem %s0, %s234
      $region44: #{_residual_block_impl.1} parent=39 // pred_fallthru
        _
    $region40: #{_residual_block_impl.1} parent=5 // pred_fallthru
      _
    %p236 = scmp.le.s32.totalorder 1, %s13
    %p237 = scmp.lt.s32.totalorder %s13, 3
    %p238 = pnand %p236, %p237
    %p239 = pneg %p238
    // Predicated region
    $region45: #{_residual_block_impl.1} parent=5 // pred_check
      _
    $region46: #{_residual_block_impl.1} parent=5 // pred_check_branch
      %241 = sbr.rel (%p238) target = $region48
    $region47: #{_residual_block_impl.1} parent=5 // pred_region
      %s242 = ssub.s32 %s13, 1
      %p243 = scmp.lt.s32.totalorder %s18, 1
      %s244 = scalar_select %p243, %s18, 1
      %s245 = smul.addr %s244, 32
      %s246 = smul.addr %s245, 8
      %s247 = scalar_lea.vmem %s0, %s246
      %p248 = pneg %p39
      %p249 = pneg %p36
      %p250 = pneg %p60
      %p251 = pneg %p57
      %p252 = pneg %p81
      %p253 = pneg %p78
      %p254 = pneg %p102
      %p255 = pneg %p99
      %p256 = pneg %p123
      %p257 = pneg %p120
      %p258 = pneg %p144
      %p259 = pneg %p141
      %p260 = pneg %p165
      %p261 = pneg %p162
      %p262 = pneg %p191
      %p263 = pneg %p188
      %p264 = scmp.lt.s32.totalorder %s18, 1
      %s265 = scalar_select %p264, %s18, 1
      %s266 = smul.addr %s265, 32
      %s267 = smul.addr %s266, 8
      %s268 = scalar_lea.vmem %s7, %s267
      %p269 = scmp.lt.s32.totalorder %s18, 1
      %s270 = scalar_select %p269, %s18, 1
      %s271 = smul.addr %s270, 32
      %s272 = smul.addr %s271, 8
      %s273 = scalar_lea.vmem %s0, %s272
      %p274 = scmp.lt.s32.totalorder %s18, 1
      %s275 = scalar_select %p274, %s18, 1
      %s276 = smul.addr %s275, 32
      %s277 = smul.addr %s276, 8
      %s278 = scalar_lea.vmem %s7, %s277
      %v279 = vld [vmem:[%s273] sm:$0xff]
      %v280 = vld [vmem:[%s273 + $0x8] sm:$0xff]
      %v281 = vld [vmem:[%s273 + $0x10] sm:$0xff]
      %v282 = vld [vmem:[%s273 + $0x18] sm:$0xff]
      %v283 = vld [vmem:[%s273 + $0x20] sm:$0xff]
      %v284 = vld [vmem:[%s273 + $0x28] sm:$0xff]
      %v285 = vld [vmem:[%s273 + $0x30] sm:$0xff]
      %v286 = vld [vmem:[%s273 + $0x38] sm:$0xff]
      %v287 = vld [vmem:[%s273 + $0x40] sm:$0xff]
      %v288 = vld [vmem:[%s273 + $0x48] sm:$0xff]
      %v289 = vld [vmem:[%s273 + $0x50] sm:$0xff]
      %v290 = vld [vmem:[%s273 + $0x58] sm:$0xff]
      %v291 = vld [vmem:[%s273 + $0x60] sm:$0xff]
      %v292 = vld [vmem:[%s273 + $0x68] sm:$0xff]
      %v293 = vld [vmem:[%s273 + $0x70] sm:$0xff]
      %v294 = vld [vmem:[%s273 + $0x78] sm:$0xff]
      %v295 = vld [vmem:[%s273 + $0x80] sm:$0xff]
      %v296 = vld [vmem:[%s273 + $0x88] sm:$0xff]
      %v297 = vld [vmem:[%s273 + $0x90] sm:$0xff]
      %v298 = vld [vmem:[%s273 + $0x98] sm:$0xff]
      %v299 = vld [vmem:[%s273 + $0xa0] sm:$0xff]
      %v300 = vld [vmem:[%s273 + $0xa8] sm:$0xff]
      %v301 = vld [vmem:[%s273 + $0xb0] sm:$0xff]
      %v302 = vld [vmem:[%s273 + $0xb8] sm:$0xff]
      %v303 = vld [vmem:[%s273 + $0xc0] sm:$0xff]
      %v304 = vld [vmem:[%s273 + $0xc8] sm:$0xff]
      %v305 = vld [vmem:[%s273 + $0xd0] sm:$0xff]
      %v306 = vld [vmem:[%s273 + $0xd8] sm:$0xff]
      %v307 = vld [vmem:[%s273 + $0xe0] sm:$0xff]
      %v308 = vld [vmem:[%s273 + $0xe8] sm:$0xff]
      %v309 = vld [vmem:[%s273 + $0xf0] sm:$0xff]
      %v310 = vld [vmem:[%s273 + $0xf8] sm:$0xff]
      %s311 = scalar_lea.vmem [#allocation2], 24
      %vm312 = vcmask 31744
      %313 = vst.msk [vmem:[%s311 + $0x1] sm:$0xff] %vm312, %v279
      %314 = vst.msk [vmem:[%s311 + $0x9] sm:$0xff] %vm312, %v280
      %315 = vst.msk [vmem:[%s311 + $0x19] sm:$0xff] %vm312, %v281
      %316 = vst.msk [vmem:[%s311 + $0x21] sm:$0xff] %vm312, %v282
      %317 = vst.msk [vmem:[%s311 + $0x31] sm:$0xff] %vm312, %v283
      %318 = vst.msk [vmem:[%s311 + $0x39] sm:$0xff] %vm312, %v284
      %319 = vst.msk [vmem:[%s311 + $0x49] sm:$0xff] %vm312, %v285
      %320 = vst.msk [vmem:[%s311 + $0x51] sm:$0xff] %vm312, %v286
      %321 = vst.msk [vmem:[%s311 + $0x61] sm:$0xff] %vm312, %v287
      %322 = vst.msk [vmem:[%s311 + $0x69] sm:$0xff] %vm312, %v288
      %323 = vst.msk [vmem:[%s311 + $0x79] sm:$0xff] %vm312, %v289
      %324 = vst.msk [vmem:[%s311 + $0x81] sm:$0xff] %vm312, %v290
      %325 = vst.msk [vmem:[%s311 + $0x91] sm:$0xff] %vm312, %v291
      %326 = vst.msk [vmem:[%s311 + $0x99] sm:$0xff] %vm312, %v292
      %327 = vst.msk [vmem:[%s311 + $0xa9] sm:$0xff] %vm312, %v293
      %328 = vst.msk [vmem:[%s311 + $0xb1] sm:$0xff] %vm312, %v294
      %329 = vst.msk [vmem:[%s311 + $0xc1] sm:$0xff] %vm312, %v295
      %330 = vst.msk [vmem:[%s311 + $0xc9] sm:$0xff] %vm312, %v296
      %331 = vst.msk [vmem:[%s311 + $0xd9] sm:$0xff] %vm312, %v297
      %332 = vst.msk [vmem:[%s311 + $0xe1] sm:$0xff] %vm312, %v298
      %333 = vst.msk [vmem:[%s311 + $0xf1] sm:$0xff] %vm312, %v299
      %334 = vst.msk [vmem:[%s311 + $0xf9] sm:$0xff] %vm312, %v300
      %335 = vst.msk [vmem:[%s311 + $0x109] sm:$0xff] %vm312, %v301
      %336 = vst.msk [vmem:[%s311 + $0x111] sm:$0xff] %vm312, %v302
      %337 = vst.msk [vmem:[%s311 + $0x121] sm:$0xff] %vm312, %v303
      %338 = vst.msk [vmem:[%s311 + $0x129] sm:$0xff] %vm312, %v304
      %339 = vst.msk [vmem:[%s311 + $0x139] sm:$0xff] %vm312, %v305
      %340 = vst.msk [vmem:[%s311 + $0x141] sm:$0xff] %vm312, %v306
      %341 = vst.msk [vmem:[%s311 + $0x151] sm:$0xff] %vm312, %v307
      %342 = vst.msk [vmem:[%s311 + $0x159] sm:$0xff] %vm312, %v308
      %343 = vst.msk [vmem:[%s311 + $0x169] sm:$0xff] %vm312, %v309
      %344 = vst.msk [vmem:[%s311 + $0x171] sm:$0xff] %vm312, %v310
      %345 = vst.msk [vmem:[#allocation2 + $0x1] sm:$0xff] %vm312, %v281
      %346 = vst.msk [vmem:[#allocation2 + $0x9] sm:$0xff] %vm312, %v282
      %s347 = scalar_lea.vmem [#allocation2], 408
      %348 = vst.msk [vmem:[%s347 + $0x1] sm:$0xff] %vm312, %v307
      %349 = vst.msk [vmem:[%s347 + $0x9] sm:$0xff] %vm312, %v308
      %v350 = vld [vmem:[#allocation2 + $0x2] sm:$0x1]
      %v351 = vld [vmem:[#allocation2 + $0x1a] sm:$0x1]
      %v352 = vld [vmem:[#allocation2 + $0x32] sm:$0x1]
      %v353 = vld [vmem:[#allocation2 + $0x4a] sm:$0x1]
      %v354 = vld [vmem:[#allocation2 + $0x62] sm:$0x1]
      %v355 = vld [vmem:[#allocation2 + $0x7a] sm:$0x1]
      %v356 = vld [vmem:[#allocation2 + $0x92] sm:$0x1]
      %v357 = vld [vmem:[#allocation2 + $0xaa] sm:$0x1]
      %v358 = vld [vmem:[#allocation2 + $0xc2] sm:$0x1]
      %v359 = vld [vmem:[#allocation2 + $0xda] sm:$0x1]
      %v360 = vld [vmem:[#allocation2 + $0xf2] sm:$0x1]
      %v361 = vld [vmem:[#allocation2 + $0x10a] sm:$0x1]
      %v362 = vld [vmem:[#allocation2 + $0x122] sm:$0x1]
      %v363 = vld [vmem:[#allocation2 + $0x13a] sm:$0x1]
      %v364 = vld [vmem:[#allocation2 + $0x152] sm:$0x1]
      %v365 = vld [vmem:[#allocation2 + $0x16a] sm:$0x1]
      %v366 = vld [vmem:[#allocation2 + $0x182] sm:$0x1]
      %v367 = vld [vmem:[#allocation2 + $0x19a] sm:$0x1]
      %vm368 = vcmask 24576
      %369 = vst.msk [vmem:[#allocation2] sm:$0x1] %vm368, %v350
      %370 = vst.msk [vmem:[#allocation2 + $0x18] sm:$0x1] %vm368, %v351
      %371 = vst.msk [vmem:[#allocation2 + $0x30] sm:$0x1] %vm368, %v352
      %372 = vst.msk [vmem:[#allocation2 + $0x48] sm:$0x1] %vm368, %v353
      %373 = vst.msk [vmem:[#allocation2 + $0x60] sm:$0x1] %vm368, %v354
      %374 = vst.msk [vmem:[#allocation2 + $0x78] sm:$0x1] %vm368, %v355
      %375 = vst.msk [vmem:[#allocation2 + $0x90] sm:$0x1] %vm368, %v356
      %376 = vst.msk [vmem:[#allocation2 + $0xa8] sm:$0x1] %vm368, %v357
      %377 = vst.msk [vmem:[#allocation2 + $0xc0] sm:$0x1] %vm368, %v358
      %378 = vst.msk [vmem:[#allocation2 + $0xd8] sm:$0x1] %vm368, %v359
      %379 = vst.msk [vmem:[#allocation2 + $0xf0] sm:$0x1] %vm368, %v360
      %380 = vst.msk [vmem:[#allocation2 + $0x108] sm:$0x1] %vm368, %v361
      %381 = vst.msk [vmem:[#allocation2 + $0x120] sm:$0x1] %vm368, %v362
      %382 = vst.msk [vmem:[#allocation2 + $0x138] sm:$0x1] %vm368, %v363
      %383 = vst.msk [vmem:[#allocation2 + $0x150] sm:$0x1] %vm368, %v364
      %384 = vst.msk [vmem:[#allocation2 + $0x168] sm:$0x1] %vm368, %v365
      %385 = vst.msk [vmem:[#allocation2 + $0x180] sm:$0x1] %vm368, %v366
      %386 = vst.msk [vmem:[#allocation2 + $0x198] sm:$0x1] %vm368, %v367
      %v387 = vld [vmem:[#allocation2 + $0xf] sm:$0x1]
      %v388 = vld [vmem:[#allocation2 + $0x27] sm:$0x1]
      %v389 = vld [vmem:[#allocation2 + $0x3f] sm:$0x1]
      %v390 = vld [vmem:[#allocation2 + $0x57] sm:$0x1]
      %v391 = vld [vmem:[#allocation2 + $0x6f] sm:$0x1]
      %v392 = vld [vmem:[#allocation2 + $0x87] sm:$0x1]
      %v393 = vld [vmem:[#allocation2 + $0x9f] sm:$0x1]
      %v394 = vld [vmem:[#allocation2 + $0xb7] sm:$0x1]
      %v395 = vld [vmem:[#allocation2 + $0xcf] sm:$0x1]
      %v396 = vld [vmem:[#allocation2 + $0xe7] sm:$0x1]
      %v397 = vld [vmem:[#allocation2 + $0xff] sm:$0x1]
      %v398 = vld [vmem:[#allocation2 + $0x117] sm:$0x1]
      %v399 = vld [vmem:[#allocation2 + $0x12f] sm:$0x1]
      %v400 = vld [vmem:[#allocation2 + $0x147] sm:$0x1]
      %v401 = vld [vmem:[#allocation2 + $0x15f] sm:$0x1]
      %v402 = vld [vmem:[#allocation2 + $0x177] sm:$0x1]
      %v403 = vld [vmem:[#allocation2 + $0x18f] sm:$0x1]
      %v404 = vld [vmem:[#allocation2 + $0x1a7] sm:$0x1]
      %405 = vst.msk [vmem:[#allocation2 + $0x11] sm:$0x1] %vm368, %v387
      %406 = vst.msk [vmem:[#allocation2 + $0x29] sm:$0x1] %vm368, %v388
      %407 = vst.msk [vmem:[#allocation2 + $0x41] sm:$0x1] %vm368, %v389
      %408 = vst.msk [vmem:[#allocation2 + $0x59] sm:$0x1] %vm368, %v390
      %409 = vst.msk [vmem:[#allocation2 + $0x71] sm:$0x1] %vm368, %v391
      %410 = vst.msk [vmem:[#allocation2 + $0x89] sm:$0x1] %vm368, %v392
      %411 = vst.msk [vmem:[#allocation2 + $0xa1] sm:$0x1] %vm368, %v393
      %412 = vst.msk [vmem:[#allocation2 + $0xb9] sm:$0x1] %vm368, %v394
      %413 = vst.msk [vmem:[#allocation2 + $0xd1] sm:$0x1] %vm368, %v395
      %414 = vst.msk [vmem:[#allocation2 + $0xe9] sm:$0x1] %vm368, %v396
      %415 = vst.msk [vmem:[#allocation2 + $0x101] sm:$0x1] %vm368, %v397
      %416 = vst.msk [vmem:[#allocation2 + $0x119] sm:$0x1] %vm368, %v398
      %417 = vst.msk [vmem:[#allocation2 + $0x131] sm:$0x1] %vm368, %v399
      %418 = vst.msk [vmem:[#allocation2 + $0x149] sm:$0x1] %vm368, %v400
      %419 = vst.msk [vmem:[#allocation2 + $0x161] sm:$0x1] %vm368, %v401
      %420 = vst.msk [vmem:[#allocation2 + $0x179] sm:$0x1] %vm368, %v402
      %421 = vst.msk [vmem:[#allocation2 + $0x191] sm:$0x1] %vm368, %v403
      %422 = vst.msk [vmem:[#allocation2 + $0x1a9] sm:$0x1] %vm368, %v404
      %v423 = vld [vmem:[#allocation2] sm:$0xff]
      %v424 = vld [vmem:[#allocation2 + $0x8] sm:$0xff]
      %v425 = vld [vmem:[#allocation2 + $0x10] sm:$0x3]
      %v426 = vld [vmem:[#allocation2 + $0x18] sm:$0xff]
      %v427 = vld [vmem:[#allocation2 + $0x20] sm:$0xff]
      %v428 = vld [vmem:[#allocation2 + $0x28] sm:$0x3]
      %v429 = vld [vmem:[#allocation2 + $0x30] sm:$0xff]
      %v430 = vld [vmem:[#allocation2 + $0x38] sm:$0xff]
      %v431 = vld [vmem:[#allocation2 + $0x40] sm:$0x3]
      %v432 = vld [vmem:[#allocation2 + $0x48] sm:$0xff]
      %v433 = vld [vmem:[#allocation2 + $0x50] sm:$0xff]
      %v434 = vld [vmem:[#allocation2 + $0x58] sm:$0x3]
      %v435 = vld [vmem:[#allocation2 + $0x60] sm:$0xff]
      %v436 = vld [vmem:[#allocation2 + $0x68] sm:$0xff]
      %v437 = vld [vmem:[#allocation2 + $0x70] sm:$0x3]
      %v438 = vld [vmem:[#allocation2 + $0x78] sm:$0xff]
      %v439 = vld [vmem:[#allocation2 + $0x80] sm:$0xff]
      %v440 = vld [vmem:[#allocation2 + $0x88] sm:$0x3]
      %v441 = vld [vmem:[#allocation2 + $0x90] sm:$0xff]
      %v442 = vld [vmem:[#allocation2 + $0x98] sm:$0xff]
      %v443 = vld [vmem:[#allocation2 + $0xa0] sm:$0x3]
      %v444 = vld [vmem:[#allocation2 + $0xa8] sm:$0xff]
      %v445 = vld [vmem:[#allocation2 + $0xb0] sm:$0xff]
      %v446 = vld [vmem:[#allocation2 + $0xb8] sm:$0x3]
      %v447 = vld [vmem:[#allocation2 + $0xc0] sm:$0xff]
      %v448 = vld [vmem:[#allocation2 + $0xc8] sm:$0xff]
      %v449 = vld [vmem:[#allocation2 + $0xd0] sm:$0x3]
      %v450 = vld [vmem:[#allocation2 + $0xd8] sm:$0xff]
      %v451 = vld [vmem:[#allocation2 + $0xe0] sm:$0xff]
      %v452 = vld [vmem:[#allocation2 + $0xe8] sm:$0x3]
      %v453 = vld [vmem:[#allocation2 + $0xf0] sm:$0xff]
      %v454 = vld [vmem:[#allocation2 + $0xf8] sm:$0xff]
      %v455 = vld [vmem:[#allocation2 + $0x100] sm:$0x3]
      %v456 = vld [vmem:[#allocation2 + $0x108] sm:$0xff]
      %v457 = vld [vmem:[#allocation2 + $0x110] sm:$0xff]
      %v458 = vld [vmem:[#allocation2 + $0x118] sm:$0x3]
      %v459 = vld [vmem:[#allocation2 + $0x120] sm:$0xff]
      %v460 = vld [vmem:[#allocation2 + $0x128] sm:$0xff]
      %v461 = vld [vmem:[#allocation2 + $0x130] sm:$0x3]
      %v462 = vld [vmem:[#allocation2 + $0x138] sm:$0xff]
      %v463 = vld [vmem:[#allocation2 + $0x140] sm:$0xff]
      %v464 = vld [vmem:[#allocation2 + $0x148] sm:$0x3]
      %v465 = vld [vmem:[#allocation2 + $0x150] sm:$0xff]
      %v466 = vld [vmem:[#allocation2 + $0x158] sm:$0xff]
      %v467 = vld [vmem:[#allocation2 + $0x160] sm:$0x3]
      %v468 = vld [vmem:[#allocation2 + $0x168] sm:$0xff]
      %v469 = vld [vmem:[#allocation2 + $0x170] sm:$0xff]
      %v470 = vld [vmem:[#allocation2 + $0x178] sm:$0x3]
      %v471 = vld [vmem:[#allocation2 + $0x180] sm:$0xff]
      %v472 = vld [vmem:[#allocation2 + $0x188] sm:$0xff]
      %v473 = vld [vmem:[#allocation2 + $0x190] sm:$0x3]
      %v474 = vld [vmem:[#allocation2 + $0x198] sm:$0xff]
      %v475 = vld [vmem:[#allocation2 + $0x1a0] sm:$0xff]
      %v476 = vld [vmem:[#allocation2 + $0x1a8] sm:$0x3]
      %vm531 = vcmask 1046528
      %v532 = vrot.slane %v423, 1
      %v533 = vrot.slane %v424, 1
      %v534 = vsel %vm531, %v532, %v533
      %v535 = vrot.slane %v425, 1
      %v536 = vsel %vm531, %v533, %v535
      %v537 = vrot.slane %v426, 1
      %v538 = vrot.slane %v427, 1
      %v539 = vsel %vm531, %v537, %v538
      %v540 = vrot.slane %v428, 1
      %v541 = vsel %vm531, %v538, %v540
      %v542 = vrot.slane %v429, 1
      %v543 = vrot.slane %v430, 1
      %v544 = vsel %vm531, %v542, %v543
      %v545 = vrot.slane %v431, 1
      %v546 = vsel %vm531, %v543, %v545
      %v547 = vrot.slane %v432, 1
      %v548 = vrot.slane %v433, 1
      %v549 = vsel %vm531, %v547, %v548
      %v550 = vrot.slane %v434, 1
      %v551 = vsel %vm531, %v548, %v550
      %v552 = vrot.slane %v435, 1
      %v553 = vrot.slane %v436, 1
      %v554 = vsel %vm531, %v552, %v553
      %v555 = vrot.slane %v437, 1
      %v556 = vsel %vm531, %v553, %v555
      %v557 = vrot.slane %v438, 1
      %v558 = vrot.slane %v439, 1
      %v559 = vsel %vm531, %v557, %v558
      %v560 = vrot.slane %v440, 1
      %v561 = vsel %vm531, %v558, %v560
      %v562 = vrot.slane %v441, 1
      %v563 = vrot.slane %v442, 1
      %v564 = vsel %vm531, %v562, %v563
      %v565 = vrot.slane %v443, 1
      %v566 = vsel %vm531, %v563, %v565
      %v567 = vrot.slane %v444, 1
      %v568 = vrot.slane %v445, 1
      %v569 = vsel %vm531, %v567, %v568
      %v570 = vrot.slane %v446, 1
      %v571 = vsel %vm531, %v568, %v570
      %v572 = vrot.slane %v447, 1
      %v573 = vrot.slane %v448, 1
      %v574 = vsel %vm531, %v572, %v573
      %v575 = vrot.slane %v449, 1
      %v576 = vsel %vm531, %v573, %v575
      %v577 = vrot.slane %v450, 1
      %v578 = vrot.slane %v451, 1
      %v579 = vsel %vm531, %v577, %v578
      %v580 = vrot.slane %v452, 1
      %v581 = vsel %vm531, %v578, %v580
      %v582 = vrot.slane %v453, 1
      %v583 = vrot.slane %v454, 1
      %v584 = vsel %vm531, %v582, %v583
      %v585 = vrot.slane %v455, 1
      %v586 = vsel %vm531, %v583, %v585
      %v587 = vrot.slane %v456, 1
      %v588 = vrot.slane %v457, 1
      %v589 = vsel %vm531, %v587, %v588
      %v590 = vrot.slane %v458, 1
      %v591 = vsel %vm531, %v588, %v590
      %v592 = vrot.slane %v459, 1
      %v593 = vrot.slane %v460, 1
      %v594 = vsel %vm531, %v592, %v593
      %v595 = vrot.slane %v461, 1
      %v596 = vsel %vm531, %v593, %v595
      %v597 = vrot.slane %v462, 1
      %v598 = vrot.slane %v463, 1
      %v599 = vsel %vm531, %v597, %v598
      %v600 = vrot.slane %v464, 1
      %v601 = vsel %vm531, %v598, %v600
      %v602 = vrot.slane %v465, 1
      %v603 = vrot.slane %v466, 1
      %v604 = vsel %vm531, %v602, %v603
      %v605 = vrot.slane %v467, 1
      %v606 = vsel %vm531, %v603, %v605
      %v607 = vrot.slane %v468, 1
      %v608 = vrot.slane %v469, 1
      %v609 = vsel %vm531, %v607, %v608
      %v610 = vrot.slane %v470, 1
      %v611 = vsel %vm531, %v608, %v610
      %v612 = vrot.slane %v471, 1
      %v613 = vrot.slane %v472, 1
      %v614 = vsel %vm531, %v612, %v613
      %v615 = vrot.slane %v473, 1
      %v616 = vsel %vm531, %v613, %v615
      %v617 = vrot.slane %v474, 1
      %v618 = vrot.slane %v475, 1
      %v619 = vsel %vm531, %v617, %v618
      %v620 = vrot.slane %v476, 1
      %v621 = vsel %vm531, %v618, %v620
      %622 = vrot.lane.b32.xlu0 %v534, 4
      %v623 = vpop.permute.xlu0 %622
      %624 = vrot.lane.b32.xlu0 %v536, 4
      %v625 = vpop.permute.xlu0 %624
      %626 = vrot.lane.b32.xlu0 %v539, 4
      %v627 = vpop.permute.xlu0 %626
      %628 = vrot.lane.b32.xlu0 %v541, 4
      %v629 = vpop.permute.xlu0 %628
      %630 = vrot.lane.b32.xlu0 %v544, 4
      %v631 = vpop.permute.xlu0 %630
      %632 = vrot.lane.b32.xlu0 %v546, 4
      %v633 = vpop.permute.xlu0 %632
      %634 = vrot.lane.b32.xlu0 %v549, 4
      %v635 = vpop.permute.xlu0 %634
      %636 = vrot.lane.b32.xlu0 %v551, 4
      %v637 = vpop.permute.xlu0 %636
      %638 = vrot.lane.b32.xlu0 %v554, 4
      %v639 = vpop.permute.xlu0 %638
      %640 = vrot.lane.b32.xlu0 %v556, 4
      %v641 = vpop.permute.xlu0 %640
      %642 = vrot.lane.b32.xlu0 %v559, 4
      %v643 = vpop.permute.xlu0 %642
      %644 = vrot.lane.b32.xlu0 %v561, 4
      %v645 = vpop.permute.xlu0 %644
      %646 = vrot.lane.b32.xlu0 %v564, 4
      %v647 = vpop.permute.xlu0 %646
      %648 = vrot.lane.b32.xlu0 %v566, 4
      %v649 = vpop.permute.xlu0 %648
      %650 = vrot.lane.b32.xlu0 %v569, 4
      %v651 = vpop.permute.xlu0 %650
      %652 = vrot.lane.b32.xlu0 %v571, 4
      %v653 = vpop.permute.xlu0 %652
      %654 = vrot.lane.b32.xlu0 %v574, 4
      %v655 = vpop.permute.xlu0 %654
      %656 = vrot.lane.b32.xlu0 %v576, 4
      %v657 = vpop.permute.xlu0 %656
      %658 = vrot.lane.b32.xlu0 %v579, 4
      %v659 = vpop.permute.xlu0 %658
      %660 = vrot.lane.b32.xlu0 %v581, 4
      %v661 = vpop.permute.xlu0 %660
      %662 = vrot.lane.b32.xlu0 %v584, 4
      %v663 = vpop.permute.xlu0 %662
      %664 = vrot.lane.b32.xlu0 %v586, 4
      %v665 = vpop.permute.xlu0 %664
      %666 = vrot.lane.b32.xlu0 %v589, 4
      %v667 = vpop.permute.xlu0 %666
      %668 = vrot.lane.b32.xlu0 %v591, 4
      %v669 = vpop.permute.xlu0 %668
      %670 = vrot.lane.b32.xlu0 %v594, 4
      %v671 = vpop.permute.xlu0 %670
      %672 = vrot.lane.b32.xlu0 %v596, 4
      %v673 = vpop.permute.xlu0 %672
      %674 = vrot.lane.b32.xlu0 %v599, 4
      %v675 = vpop.permute.xlu0 %674
      %676 = vrot.lane.b32.xlu0 %v601, 4
      %v677 = vpop.permute.xlu0 %676
      %678 = vrot.lane.b32.xlu0 %v604, 4
      %v679 = vpop.permute.xlu0 %678
      %680 = vrot.lane.b32.xlu0 %v606, 4
      %v681 = vpop.permute.xlu0 %680
      %682 = vrot.lane.b32.xlu0 %v609, 4
      %v683 = vpop.permute.xlu0 %682
      %684 = vrot.lane.b32.xlu0 %v611, 4
      %v685 = vpop.permute.xlu0 %684
      %686 = vrot.lane.b32.xlu0 %v614, 4
      %v687 = vpop.permute.xlu0 %686
      %688 = vrot.lane.b32.xlu0 %v616, 4
      %v689 = vpop.permute.xlu0 %688
      %690 = vrot.lane.b32.xlu0 %v619, 4
      %v691 = vpop.permute.xlu0 %690
      %692 = vrot.lane.b32.xlu0 %v621, 4
      %v693 = vpop.permute.xlu0 %692
      %vm730 = vcmask 1045504
      %v731 = vrot.slane %v423, 2
      %v732 = vrot.slane %v424, 2
      %v733 = vsel %vm730, %v731, %v732
      %v734 = vrot.slane %v425, 2
      %v735 = vsel %vm730, %v732, %v734
      %v736 = vrot.slane %v426, 2
      %v737 = vrot.slane %v427, 2
      %v738 = vsel %vm730, %v736, %v737
      %v739 = vrot.slane %v428, 2
      %v740 = vsel %vm730, %v737, %v739
      %v741 = vrot.slane %v429, 2
      %v742 = vrot.slane %v430, 2
      %v743 = vsel %vm730, %v741, %v742
      %v744 = vrot.slane %v431, 2
      %v745 = vsel %vm730, %v742, %v744
      %v746 = vrot.slane %v432, 2
      %v747 = vrot.slane %v433, 2
      %v748 = vsel %vm730, %v746, %v747
      %v749 = vrot.slane %v434, 2
      %v750 = vsel %vm730, %v747, %v749
      %v751 = vrot.slane %v435, 2
      %v752 = vrot.slane %v436, 2
      %v753 = vsel %vm730, %v751, %v752
      %v754 = vrot.slane %v437, 2
      %v755 = vsel %vm730, %v752, %v754
      %v756 = vrot.slane %v438, 2
      %v757 = vrot.slane %v439, 2
      %v758 = vsel %vm730, %v756, %v757
      %v759 = vrot.slane %v440, 2
      %v760 = vsel %vm730, %v757, %v759
      %v761 = vrot.slane %v441, 2
      %v762 = vrot.slane %v442, 2
      %v763 = vsel %vm730, %v761, %v762
      %v764 = vrot.slane %v443, 2
      %v765 = vsel %vm730, %v762, %v764
      %v766 = vrot.slane %v444, 2
      %v767 = vrot.slane %v445, 2
      %v768 = vsel %vm730, %v766, %v767
      %v769 = vrot.slane %v446, 2
      %v770 = vsel %vm730, %v767, %v769
      %v771 = vrot.slane %v447, 2
      %v772 = vrot.slane %v448, 2
      %v773 = vsel %vm730, %v771, %v772
      %v774 = vrot.slane %v449, 2
      %v775 = vsel %vm730, %v772, %v774
      %v776 = vrot.slane %v450, 2
      %v777 = vrot.slane %v451, 2
      %v778 = vsel %vm730, %v776, %v777
      %v779 = vrot.slane %v452, 2
      %v780 = vsel %vm730, %v777, %v779
      %v781 = vrot.slane %v453, 2
      %v782 = vrot.slane %v454, 2
      %v783 = vsel %vm730, %v781, %v782
      %v784 = vrot.slane %v455, 2
      %v785 = vsel %vm730, %v782, %v784
      %v786 = vrot.slane %v456, 2
      %v787 = vrot.slane %v457, 2
      %v788 = vsel %vm730, %v786, %v787
      %v789 = vrot.slane %v458, 2
      %v790 = vsel %vm730, %v787, %v789
      %v791 = vrot.slane %v459, 2
      %v792 = vrot.slane %v460, 2
      %v793 = vsel %vm730, %v791, %v792
      %v794 = vrot.slane %v461, 2
      %v795 = vsel %vm730, %v792, %v794
      %v796 = vrot.slane %v462, 2
      %v797 = vrot.slane %v463, 2
      %v798 = vsel %vm730, %v796, %v797
      %v799 = vrot.slane %v464, 2
      %v800 = vsel %vm730, %v797, %v799
      %v801 = vrot.slane %v465, 2
      %v802 = vrot.slane %v466, 2
      %v803 = vsel %vm730, %v801, %v802
      %v804 = vrot.slane %v467, 2
      %v805 = vsel %vm730, %v802, %v804
      %v806 = vrot.slane %v468, 2
      %v807 = vrot.slane %v469, 2
      %v808 = vsel %vm730, %v806, %v807
      %v809 = vrot.slane %v470, 2
      %v810 = vsel %vm730, %v807, %v809
      %v811 = vrot.slane %v471, 2
      %v812 = vrot.slane %v472, 2
      %v813 = vsel %vm730, %v811, %v812
      %v814 = vrot.slane %v473, 2
      %v815 = vsel %vm730, %v812, %v814
      %v816 = vrot.slane %v474, 2
      %v817 = vrot.slane %v475, 2
      %v818 = vsel %vm730, %v816, %v817
      %v819 = vrot.slane %v476, 2
      %v820 = vsel %vm730, %v817, %v819
      %821 = vrot.lane.b32.xlu0 %v733, 8
      %v822 = vpop.permute.xlu0 %821
      %823 = vrot.lane.b32.xlu0 %v735, 8
      %v824 = vpop.permute.xlu0 %823
      %825 = vrot.lane.b32.xlu0 %v738, 8
      %v826 = vpop.permute.xlu0 %825
      %827 = vrot.lane.b32.xlu0 %v740, 8
      %v828 = vpop.permute.xlu0 %827
      %829 = vrot.lane.b32.xlu0 %v743, 8
      %v830 = vpop.permute.xlu0 %829
      %831 = vrot.lane.b32.xlu0 %v745, 8
      %v832 = vpop.permute.xlu0 %831
      %833 = vrot.lane.b32.xlu0 %v748, 8
      %v834 = vpop.permute.xlu0 %833
      %835 = vrot.lane.b32.xlu0 %v750, 8
      %v836 = vpop.permute.xlu0 %835
      %837 = vrot.lane.b32.xlu0 %v753, 8
      %v838 = vpop.permute.xlu0 %837
      %839 = vrot.lane.b32.xlu0 %v755, 8
      %v840 = vpop.permute.xlu0 %839
      %841 = vrot.lane.b32.xlu0 %v758, 8
      %v842 = vpop.permute.xlu0 %841
      %843 = vrot.lane.b32.xlu0 %v760, 8
      %v844 = vpop.permute.xlu0 %843
      %845 = vrot.lane.b32.xlu0 %v763, 8
      %v846 = vpop.permute.xlu0 %845
      %847 = vrot.lane.b32.xlu0 %v765, 8
      %v848 = vpop.permute.xlu0 %847
      %849 = vrot.lane.b32.xlu0 %v768, 8
      %v850 = vpop.permute.xlu0 %849
      %851 = vrot.lane.b32.xlu0 %v770, 8
      %v852 = vpop.permute.xlu0 %851
      %853 = vrot.lane.b32.xlu0 %v773, 8
      %v854 = vpop.permute.xlu0 %853
      %855 = vrot.lane.b32.xlu0 %v775, 8
      %v856 = vpop.permute.xlu0 %855
      %857 = vrot.lane.b32.xlu0 %v778, 8
      %v858 = vpop.permute.xlu0 %857
      %859 = vrot.lane.b32.xlu0 %v780, 8
      %v860 = vpop.permute.xlu0 %859
      %861 = vrot.lane.b32.xlu0 %v783, 8
      %v862 = vpop.permute.xlu0 %861
      %863 = vrot.lane.b32.xlu0 %v785, 8
      %v864 = vpop.permute.xlu0 %863
      %865 = vrot.lane.b32.xlu0 %v788, 8
      %v866 = vpop.permute.xlu0 %865
      %867 = vrot.lane.b32.xlu0 %v790, 8
      %v868 = vpop.permute.xlu0 %867
      %869 = vrot.lane.b32.xlu0 %v793, 8
      %v870 = vpop.permute.xlu0 %869
      %871 = vrot.lane.b32.xlu0 %v795, 8
      %v872 = vpop.permute.xlu0 %871
      %873 = vrot.lane.b32.xlu0 %v798, 8
      %v874 = vpop.permute.xlu0 %873
      %875 = vrot.lane.b32.xlu0 %v800, 8
      %v876 = vpop.permute.xlu0 %875
      %877 = vrot.lane.b32.xlu0 %v803, 8
      %v878 = vpop.permute.xlu0 %877
      %879 = vrot.lane.b32.xlu0 %v805, 8
      %v880 = vpop.permute.xlu0 %879
      %881 = vrot.lane.b32.xlu0 %v808, 8
      %v882 = vpop.permute.xlu0 %881
      %883 = vrot.lane.b32.xlu0 %v810, 8
      %v884 = vpop.permute.xlu0 %883
      %885 = vrot.lane.b32.xlu0 %v813, 8
      %v886 = vpop.permute.xlu0 %885
      %887 = vrot.lane.b32.xlu0 %v815, 8
      %v888 = vpop.permute.xlu0 %887
      %889 = vrot.lane.b32.xlu0 %v818, 8
      %v890 = vpop.permute.xlu0 %889
      %891 = vrot.lane.b32.xlu0 %v820, 8
      %v892 = vpop.permute.xlu0 %891
      %v929 = vsel %vm312, %v423, %v623
      %v930 = vsel %vm312, %v424, %v625
      %v931 = vsel %vm312, %v426, %v627
      %v932 = vsel %vm312, %v427, %v629
      %v933 = vsel %vm312, %v429, %v631
      %v934 = vsel %vm312, %v430, %v633
      %v935 = vsel %vm312, %v432, %v635
      %v936 = vsel %vm312, %v433, %v637
      %v937 = vsel %vm312, %v435, %v639
      %v938 = vsel %vm312, %v436, %v641
      %v939 = vsel %vm312, %v438, %v643
      %v940 = vsel %vm312, %v439, %v645
      %v941 = vsel %vm312, %v441, %v647
      %v942 = vsel %vm312, %v442, %v649
      %v943 = vsel %vm312, %v444, %v651
      %v944 = vsel %vm312, %v445, %v653
      %v945 = vsel %vm312, %v447, %v655
      %v946 = vsel %vm312, %v448, %v657
      %v947 = vsel %vm312, %v450, %v659
      %v948 = vsel %vm312, %v451, %v661
      %v949 = vsel %vm312, %v453, %v663
      %v950 = vsel %vm312, %v454, %v665
      %v951 = vsel %vm312, %v456, %v667
      %v952 = vsel %vm312, %v457, %v669
      %v953 = vsel %vm312, %v459, %v671
      %v954 = vsel %vm312, %v460, %v673
      %v955 = vsel %vm312, %v462, %v675
      %v956 = vsel %vm312, %v463, %v677
      %v957 = vsel %vm312, %v465, %v679
      %v958 = vsel %vm312, %v466, %v681
      %v959 = vsel %vm312, %v468, %v683
      %v960 = vsel %vm312, %v469, %v685
      %v961 = vsel %vm312, %v471, %v687
      %v962 = vsel %vm312, %v472, %v689
      %v963 = vsel %vm312, %v474, %v691
      %v964 = vsel %vm312, %v475, %v693
      %vm965 = vcmask 64512
      %v966 = vsel %vm965, %v929, %v822
      %v967 = vsel %vm965, %v930, %v824
      %v968 = vsel %vm965, %v931, %v826
      %v969 = vsel %vm965, %v932, %v828
      %v970 = vsel %vm965, %v933, %v830
      %v971 = vsel %vm965, %v934, %v832
      %v972 = vsel %vm965, %v935, %v834
      %v973 = vsel %vm965, %v936, %v836
      %v974 = vsel %vm965, %v937, %v838
      %v975 = vsel %vm965, %v938, %v840
      %v976 = vsel %vm965, %v939, %v842
      %v977 = vsel %vm965, %v940, %v844
      %v978 = vsel %vm965, %v941, %v846
      %v979 = vsel %vm965, %v942, %v848
      %v980 = vsel %vm965, %v943, %v850
      %v981 = vsel %vm965, %v944, %v852
      %v982 = vsel %vm965, %v945, %v854
      %v983 = vsel %vm965, %v946, %v856
      %v984 = vsel %vm965, %v947, %v858
      %v985 = vsel %vm965, %v948, %v860
      %v986 = vsel %vm965, %v949, %v862
      %v987 = vsel %vm965, %v950, %v864
      %v988 = vsel %vm965, %v951, %v866
      %v989 = vsel %vm965, %v952, %v868
      %v990 = vsel %vm965, %v953, %v870
      %v991 = vsel %vm965, %v954, %v872
      %v992 = vsel %vm965, %v955, %v874
      %v993 = vsel %vm965, %v956, %v876
      %v994 = vsel %vm965, %v957, %v878
      %v995 = vsel %vm965, %v958, %v880
      %v996 = vsel %vm965, %v959, %v882
      %v997 = vsel %vm965, %v960, %v884
      %v998 = vsel %vm965, %v961, %v886
      %v999 = vsel %vm965, %v962, %v888
      %v1000 = vsel %vm965, %v963, %v890
      %v1001 = vsel %vm965, %v964, %v892
      %v1002 = vld [vmem:[%s1] sm:$0xff]
      %v1003 = vld [vmem:[%s1 + $0x8] sm:$0xf]
      %vm1004 = vcmask 97280
      %v1006 = vsel %vm1004, %v966, 0
      %v1009 = vsel %vm1004, %v967, 0
      %v1012 = vsel %vm1004, %v968, 0
      %v1015 = vsel %vm1004, %v969, 0
      %v1018 = vsel %vm1004, %v970, 0
      %v1021 = vsel %vm1004, %v971, 0
      %v1024 = vsel %vm1004, %v972, 0
      %v1027 = vsel %vm1004, %v973, 0
      %v1030 = vsel %vm1004, %v974, 0
      %v1033 = vsel %vm1004, %v975, 0
      %v1036 = vsel %vm1004, %v976, 0
      %v1039 = vsel %vm1004, %v977, 0
      %v1042 = vsel %vm1004, %v978, 0
      %v1045 = vsel %vm1004, %v979, 0
      %v1048 = vsel %vm1004, %v980, 0
      %v1051 = vsel %vm1004, %v981, 0
      %v1054 = vsel %vm1004, %v982, 0
      %v1057 = vsel %vm1004, %v983, 0
      %v1060 = vsel %vm1004, %v984, 0
      %v1063 = vsel %vm1004, %v985, 0
      %v1066 = vsel %vm1004, %v986, 0
      %v1069 = vsel %vm1004, %v987, 0
      %v1072 = vsel %vm1004, %v988, 0
      %v1075 = vsel %vm1004, %v989, 0
      %v1078 = vsel %vm1004, %v990, 0
      %v1081 = vsel %vm1004, %v991, 0
      %v1084 = vsel %vm1004, %v992, 0
      %v1087 = vsel %vm1004, %v993, 0
      %v1090 = vsel %vm1004, %v994, 0
      %v1093 = vsel %vm1004, %v995, 0
      %v1096 = vsel %vm1004, %v996, 0
      %v1099 = vsel %vm1004, %v997, 0
      %vm1101 = vcmask 1043456
      %v1103 = vsel %vm1101, %v1003, 0
      %1105 = vmatpush.msra.mxu0 0.0
      %1106 = vmatpush.msra.mxu0 0.0
      %1107 = vmatpush.msra.mxu0 0.0
      %1108 = vmatpush.msra.mxu0 0.0
      %1109 = vmatpush.msra.mxu0 0.0
      %1110 = vmatpush.msra.mxu0 0.0
      %1111 = vmatpush.msra.mxu0 0.0
      %1112 = vmatpush.msra.mxu0 0.0
      %1113 = vmatpush.msra.mxu0 0.0
      %1114 = vmatpush.msra.mxu0 0.0
      %1115 = vmatpush.msra.mxu0 0.0
      %1116 = vmatpush.msra.mxu0 0.0
      %1117 = vmatpush.msra.mxu0 0.0
      %1118 = vmatpush.msra.mxu0 0.0
      %1119 = vmatpush.msra.mxu0 %v1103
      %1120 = vmatpush.msra.mxu0 %v1002
      %1121 = vmatmul.f32.gmra.mxu0 %v1006
      %v1122 = vpop.f32.mrf.mxu0
      %v1123 = vadd.f32 0.0, %v1122
      %1124 = vmatmul.f32.gmra.mxu0 %v1009
      %v1125 = vpop.f32.mrf.mxu0
      %v1126 = vadd.f32 0.0, %v1125
      %1127 = vmatmul.f32.gmra.mxu0 %v1012
      %v1128 = vpop.f32.mrf.mxu0
      %v1129 = vadd.f32 0.0, %v1128
      %1130 = vmatmul.f32.gmra.mxu0 %v1015
      %v1131 = vpop.f32.mrf.mxu0
      %v1132 = vadd.f32 0.0, %v1131
      %1133 = vmatmul.f32.gmra.mxu0 %v1018
      %v1134 = vpop.f32.mrf.mxu0
      %v1135 = vadd.f32 0.0, %v1134
      %1136 = vmatmul.f32.gmra.mxu0 %v1021
      %v1137 = vpop.f32.mrf.mxu0
      %v1138 = vadd.f32 0.0, %v1137
      %1139 = vmatmul.f32.gmra.mxu0 %v1024
      %v1140 = vpop.f32.mrf.mxu0
      %v1141 = vadd.f32 0.0, %v1140
      %1142 = vmatmul.f32.gmra.mxu0 %v1027
      %v1143 = vpop.f32.mrf.mxu0
      %v1144 = vadd.f32 0.0, %v1143
      %1145 = vmatmul.f32.gmra.mxu0 %v1030
      %v1146 = vpop.f32.mrf.mxu0
      %v1147 = vadd.f32 0.0, %v1146
      %1148 = vmatmul.f32.gmra.mxu0 %v1033
      %v1149 = vpop.f32.mrf.mxu0
      %v1150 = vadd.f32 0.0, %v1149
      %1151 = vmatmul.f32.gmra.mxu0 %v1036
      %v1152 = vpop.f32.mrf.mxu0
      %v1153 = vadd.f32 0.0, %v1152
      %1154 = vmatmul.f32.gmra.mxu0 %v1039
      %v1155 = vpop.f32.mrf.mxu0
      %v1156 = vadd.f32 0.0, %v1155
      %1157 = vmatmul.f32.gmra.mxu0 %v1042
      %v1158 = vpop.f32.mrf.mxu0
      %v1159 = vadd.f32 0.0, %v1158
      %1160 = vmatmul.f32.gmra.mxu0 %v1045
      %v1161 = vpop.f32.mrf.mxu0
      %v1162 = vadd.f32 0.0, %v1161
      %1163 = vmatmul.f32.gmra.mxu0 %v1048
      %v1164 = vpop.f32.mrf.mxu0
      %v1165 = vadd.f32 0.0, %v1164
      %1166 = vmatmul.f32.gmra.mxu0 %v1051
      %v1167 = vpop.f32.mrf.mxu0
      %v1168 = vadd.f32 0.0, %v1167
      %1169 = vmatmul.f32.gmra.mxu0 %v1054
      %v1170 = vpop.f32.mrf.mxu0
      %v1171 = vadd.f32 0.0, %v1170
      %1172 = vmatmul.f32.gmra.mxu0 %v1057
      %v1173 = vpop.f32.mrf.mxu0
      %v1174 = vadd.f32 0.0, %v1173
      %1175 = vmatmul.f32.gmra.mxu0 %v1060
      %v1176 = vpop.f32.mrf.mxu0
      %v1177 = vadd.f32 0.0, %v1176
      %1178 = vmatmul.f32.gmra.mxu0 %v1063
      %v1179 = vpop.f32.mrf.mxu0
      %v1180 = vadd.f32 0.0, %v1179
      %1181 = vmatmul.f32.gmra.mxu0 %v1066
      %v1182 = vpop.f32.mrf.mxu0
      %v1183 = vadd.f32 0.0, %v1182
      %1184 = vmatmul.f32.gmra.mxu0 %v1069
      %v1185 = vpop.f32.mrf.mxu0
      %v1186 = vadd.f32 0.0, %v1185
      %1187 = vmatmul.f32.gmra.mxu0 %v1072
      %v1188 = vpop.f32.mrf.mxu0
      %v1189 = vadd.f32 0.0, %v1188
      %1190 = vmatmul.f32.gmra.mxu0 %v1075
      %v1191 = vpop.f32.mrf.mxu0
      %v1192 = vadd.f32 0.0, %v1191
      %1193 = vmatmul.f32.gmra.mxu0 %v1078
      %v1194 = vpop.f32.mrf.mxu0
      %v1195 = vadd.f32 0.0, %v1194
      %1196 = vmatmul.f32.gmra.mxu0 %v1081
      %v1197 = vpop.f32.mrf.mxu0
      %v1198 = vadd.f32 0.0, %v1197
      %1199 = vmatmul.f32.gmra.mxu0 %v1084
      %v1200 = vpop.f32.mrf.mxu0
      %v1201 = vadd.f32 0.0, %v1200
      %1202 = vmatmul.f32.gmra.mxu0 %v1087
      %v1203 = vpop.f32.mrf.mxu0
      %v1204 = vadd.f32 0.0, %v1203
      %1205 = vmatmul.f32.gmra.mxu0 %v1090
      %v1206 = vpop.f32.mrf.mxu0
      %v1207 = vadd.f32 0.0, %v1206
      %1208 = vmatmul.f32.gmra.mxu0 %v1093
      %v1209 = vpop.f32.mrf.mxu0
      %v1210 = vadd.f32 0.0, %v1209
      %1211 = vmatmul.f32.gmra.mxu0 %v1096
      %v1212 = vpop.f32.mrf.mxu0
      %v1213 = vadd.f32 0.0, %v1212
      %1214 = vmatmul.f32.gmra.mxu0 %v1099
      %v1215 = vpop.f32.mrf.mxu0
      %v1216 = vadd.f32 0.0, %v1215
      %1217 = vdwg.mxu0
      %1218 = vst.msk [vmem:[#allocation3] sm:$0xff] %vm312, %v1123
      %1219 = vst.msk [vmem:[#allocation3 + $0x8] sm:$0xff] %vm312, %v1126
      %1220 = vst.msk [vmem:[#allocation3 + $0x10] sm:$0xff] %vm312, %v1129
      %1221 = vst.msk [vmem:[#allocation3 + $0x18] sm:$0xff] %vm312, %v1132
      %1222 = vst.msk [vmem:[#allocation3 + $0x20] sm:$0xff] %vm312, %v1135
      %1223 = vst.msk [vmem:[#allocation3 + $0x28] sm:$0xff] %vm312, %v1138
      %1224 = vst.msk [vmem:[#allocation3 + $0x30] sm:$0xff] %vm312, %v1141
      %1225 = vst.msk [vmem:[#allocation3 + $0x38] sm:$0xff] %vm312, %v1144
      %1226 = vst.msk [vmem:[#allocation3 + $0x40] sm:$0xff] %vm312, %v1147
      %1227 = vst.msk [vmem:[#allocation3 + $0x48] sm:$0xff] %vm312, %v1150
      %1228 = vst.msk [vmem:[#allocation3 + $0x50] sm:$0xff] %vm312, %v1153
      %1229 = vst.msk [vmem:[#allocation3 + $0x58] sm:$0xff] %vm312, %v1156
      %1230 = vst.msk [vmem:[#allocation3 + $0x60] sm:$0xff] %vm312, %v1159
      %1231 = vst.msk [vmem:[#allocation3 + $0x68] sm:$0xff] %vm312, %v1162
      %1232 = vst.msk [vmem:[#allocation3 + $0x70] sm:$0xff] %vm312, %v1165
      %1233 = vst.msk [vmem:[#allocation3 + $0x78] sm:$0xff] %vm312, %v1168
      %1234 = vst.msk [vmem:[#allocation3 + $0x80] sm:$0xff] %vm312, %v1171
      %1235 = vst.msk [vmem:[#allocation3 + $0x88] sm:$0xff] %vm312, %v1174
      %1236 = vst.msk [vmem:[#allocation3 + $0x90] sm:$0xff] %vm312, %v1177
      %1237 = vst.msk [vmem:[#allocation3 + $0x98] sm:$0xff] %vm312, %v1180
      %1238 = vst.msk [vmem:[#allocation3 + $0xa0] sm:$0xff] %vm312, %v1183
      %1239 = vst.msk [vmem:[#allocation3 + $0xa8] sm:$0xff] %vm312, %v1186
      %1240 = vst.msk [vmem:[#allocation3 + $0xb0] sm:$0xff] %vm312, %v1189
      %1241 = vst.msk [vmem:[#allocation3 + $0xb8] sm:$0xff] %vm312, %v1192
      %1242 = vst.msk [vmem:[#allocation3 + $0xc0] sm:$0xff] %vm312, %v1195
      %1243 = vst.msk [vmem:[#allocation3 + $0xc8] sm:$0xff] %vm312, %v1198
      %1244 = vst.msk [vmem:[#allocation3 + $0xd0] sm:$0xff] %vm312, %v1201
      %1245 = vst.msk [vmem:[#allocation3 + $0xd8] sm:$0xff] %vm312, %v1204
      %1246 = vst.msk [vmem:[#allocation3 + $0xe0] sm:$0xff] %vm312, %v1207
      %1247 = vst.msk [vmem:[#allocation3 + $0xe8] sm:$0xff] %vm312, %v1210
      %1248 = vst.msk [vmem:[#allocation3 + $0xf0] sm:$0xff] %vm312, %v1213
      %1249 = vst.msk [vmem:[#allocation3 + $0xf8] sm:$0xff] %vm312, %v1216
      %s1250 = scalar_lea.vmem %s1, 16
      %v1251 = vld [vmem:[%s1250] sm:$0xff]
      %v1252 = vld [vmem:[%s1250 + $0x8] sm:$0xf]
      %v1254 = vsel %vm1004, %v998, 0
      %v1257 = vsel %vm1004, %v999, 0
      %v1260 = vsel %vm1101, %v1252, 0
      %1262 = vmatpush.msra.mxu0 0.0
      %1263 = vmatpush.msra.mxu0 0.0
      %1264 = vmatpush.msra.mxu0 0.0
      %1265 = vmatpush.msra.mxu0 0.0
      %1266 = vmatpush.msra.mxu0 0.0
      %1267 = vmatpush.msra.mxu0 0.0
      %1268 = vmatpush.msra.mxu0 0.0
      %1269 = vmatpush.msra.mxu0 0.0
      %1270 = vmatpush.msra.mxu0 0.0
      %1271 = vmatpush.msra.mxu0 0.0
      %1272 = vmatpush.msra.mxu0 0.0
      %1273 = vmatpush.msra.mxu0 0.0
      %1274 = vmatpush.msra.mxu0 0.0
      %1275 = vmatpush.msra.mxu0 0.0
      %1276 = vmatpush.msra.mxu0 %v1260
      %1277 = vmatpush.msra.mxu0 %v1251
      %1278 = vmatmul.f32.gmra.mxu0 %v1012
      %v1279 = vpop.f32.mrf.mxu0
      %v1280 = vadd.f32 0.0, %v1279
      %1281 = vmatmul.f32.gmra.mxu0 %v1015
      %v1282 = vpop.f32.mrf.mxu0
      %v1283 = vadd.f32 0.0, %v1282
      %1284 = vmatmul.f32.gmra.mxu0 %v1018
      %v1285 = vpop.f32.mrf.mxu0
      %v1286 = vadd.f32 0.0, %v1285
      %1287 = vmatmul.f32.gmra.mxu0 %v1021
      %v1288 = vpop.f32.mrf.mxu0
      %v1289 = vadd.f32 0.0, %v1288
      %1290 = vmatmul.f32.gmra.mxu0 %v1024
      %v1291 = vpop.f32.mrf.mxu0
      %v1292 = vadd.f32 0.0, %v1291
      %1293 = vmatmul.f32.gmra.mxu0 %v1027
      %v1294 = vpop.f32.mrf.mxu0
      %v1295 = vadd.f32 0.0, %v1294
      %1296 = vmatmul.f32.gmra.mxu0 %v1030
      %v1297 = vpop.f32.mrf.mxu0
      %v1298 = vadd.f32 0.0, %v1297
      %1299 = vmatmul.f32.gmra.mxu0 %v1033
      %v1300 = vpop.f32.mrf.mxu0
      %v1301 = vadd.f32 0.0, %v1300
      %1302 = vmatmul.f32.gmra.mxu0 %v1036
      %v1303 = vpop.f32.mrf.mxu0
      %v1304 = vadd.f32 0.0, %v1303
      %1305 = vmatmul.f32.gmra.mxu0 %v1039
      %v1306 = vpop.f32.mrf.mxu0
      %v1307 = vadd.f32 0.0, %v1306
      %1308 = vmatmul.f32.gmra.mxu0 %v1042
      %v1309 = vpop.f32.mrf.mxu0
      %v1310 = vadd.f32 0.0, %v1309
      %1311 = vmatmul.f32.gmra.mxu0 %v1045
      %v1312 = vpop.f32.mrf.mxu0
      %v1313 = vadd.f32 0.0, %v1312
      %1314 = vmatmul.f32.gmra.mxu0 %v1048
      %v1315 = vpop.f32.mrf.mxu0
      %v1316 = vadd.f32 0.0, %v1315
      %1317 = vmatmul.f32.gmra.mxu0 %v1051
      %v1318 = vpop.f32.mrf.mxu0
      %v1319 = vadd.f32 0.0, %v1318
      %1320 = vmatmul.f32.gmra.mxu0 %v1054
      %v1321 = vpop.f32.mrf.mxu0
      %v1322 = vadd.f32 0.0, %v1321
      %1323 = vmatmul.f32.gmra.mxu0 %v1057
      %v1324 = vpop.f32.mrf.mxu0
      %v1325 = vadd.f32 0.0, %v1324
      %1326 = vmatmul.f32.gmra.mxu0 %v1060
      %v1327 = vpop.f32.mrf.mxu0
      %v1328 = vadd.f32 0.0, %v1327
      %1329 = vmatmul.f32.gmra.mxu0 %v1063
      %v1330 = vpop.f32.mrf.mxu0
      %v1331 = vadd.f32 0.0, %v1330
      %1332 = vmatmul.f32.gmra.mxu0 %v1066
      %v1333 = vpop.f32.mrf.mxu0
      %v1334 = vadd.f32 0.0, %v1333
      %1335 = vmatmul.f32.gmra.mxu0 %v1069
      %v1336 = vpop.f32.mrf.mxu0
      %v1337 = vadd.f32 0.0, %v1336
      %1338 = vmatmul.f32.gmra.mxu0 %v1072
      %v1339 = vpop.f32.mrf.mxu0
      %v1340 = vadd.f32 0.0, %v1339
      %1341 = vmatmul.f32.gmra.mxu0 %v1075
      %v1342 = vpop.f32.mrf.mxu0
      %v1343 = vadd.f32 0.0, %v1342
      %1344 = vmatmul.f32.gmra.mxu0 %v1078
      %v1345 = vpop.f32.mrf.mxu0
      %v1346 = vadd.f32 0.0, %v1345
      %1347 = vmatmul.f32.gmra.mxu0 %v1081
      %v1348 = vpop.f32.mrf.mxu0
      %v1349 = vadd.f32 0.0, %v1348
      %1350 = vmatmul.f32.gmra.mxu0 %v1084
      %v1351 = vpop.f32.mrf.mxu0
      %v1352 = vadd.f32 0.0, %v1351
      %1353 = vmatmul.f32.gmra.mxu0 %v1087
      %v1354 = vpop.f32.mrf.mxu0
      %v1355 = vadd.f32 0.0, %v1354
      %1356 = vmatmul.f32.gmra.mxu0 %v1090
      %v1357 = vpop.f32.mrf.mxu0
      %v1358 = vadd.f32 0.0, %v1357
      %1359 = vmatmul.f32.gmra.mxu0 %v1093
      %v1360 = vpop.f32.mrf.mxu0
      %v1361 = vadd.f32 0.0, %v1360
      %1362 = vmatmul.f32.gmra.mxu0 %v1096
      %v1363 = vpop.f32.mrf.mxu0
      %v1364 = vadd.f32 0.0, %v1363
      %1365 = vmatmul.f32.gmra.mxu0 %v1099
      %v1366 = vpop.f32.mrf.mxu0
      %v1367 = vadd.f32 0.0, %v1366
      %1368 = vmatmul.f32.gmra.mxu0 %v1254
      %v1369 = vpop.f32.mrf.mxu0
      %v1370 = vadd.f32 0.0, %v1369
      %1371 = vmatmul.f32.gmra.mxu0 %v1257
      %v1372 = vpop.f32.mrf.mxu0
      %v1373 = vadd.f32 0.0, %v1372
      %1374 = vdwg.mxu0
      %v1375 = vld [vmem:[#allocation3] sm:$0xff]
      %v1376 = vld [vmem:[#allocation3 + $0x8] sm:$0xff]
      %v1377 = vld [vmem:[#allocation3 + $0x10] sm:$0xff]
      %v1378 = vld [vmem:[#allocation3 + $0x18] sm:$0xff]
      %v1379 = vld [vmem:[#allocation3 + $0x20] sm:$0xff]
      %v1380 = vld [vmem:[#allocation3 + $0x28] sm:$0xff]
      %v1381 = vld [vmem:[#allocation3 + $0x30] sm:$0xff]
      %v1382 = vld [vmem:[#allocation3 + $0x38] sm:$0xff]
      %v1383 = vld [vmem:[#allocation3 + $0x40] sm:$0xff]
      %v1384 = vld [vmem:[#allocation3 + $0x48] sm:$0xff]
      %v1385 = vld [vmem:[#allocation3 + $0x50] sm:$0xff]
      %v1386 = vld [vmem:[#allocation3 + $0x58] sm:$0xff]
      %v1387 = vld [vmem:[#allocation3 + $0x60] sm:$0xff]
      %v1388 = vld [vmem:[#allocation3 + $0x68] sm:$0xff]
      %v1389 = vld [vmem:[#allocation3 + $0x70] sm:$0xff]
      %v1390 = vld [vmem:[#allocation3 + $0x78] sm:$0xff]
      %v1391 = vld [vmem:[#allocation3 + $0x80] sm:$0xff]
      %v1392 = vld [vmem:[#allocation3 + $0x88] sm:$0xff]
      %v1393 = vld [vmem:[#allocation3 + $0x90] sm:$0xff]
      %v1394 = vld [vmem:[#allocation3 + $0x98] sm:$0xff]
      %v1395 = vld [vmem:[#allocation3 + $0xa0] sm:$0xff]
      %v1396 = vld [vmem:[#allocation3 + $0xa8] sm:$0xff]
      %v1397 = vld [vmem:[#allocation3 + $0xb0] sm:$0xff]
      %v1398 = vld [vmem:[#allocation3 + $0xb8] sm:$0xff]
      %v1399 = vld [vmem:[#allocation3 + $0xc0] sm:$0xff]
      %v1400 = vld [vmem:[#allocation3 + $0xc8] sm:$0xff]
      %v1401 = vld [vmem:[#allocation3 + $0xd0] sm:$0xff]
      %v1402 = vld [vmem:[#allocation3 + $0xd8] sm:$0xff]
      %v1403 = vld [vmem:[#allocation3 + $0xe0] sm:$0xff]
      %v1404 = vld [vmem:[#allocation3 + $0xe8] sm:$0xff]
      %v1405 = vld [vmem:[#allocation3 + $0xf0] sm:$0xff]
      %v1406 = vld [vmem:[#allocation3 + $0xf8] sm:$0xff]
      %v1407 = vadd.f32 %v1375, %v1280
      %v1408 = vadd.f32 %v1376, %v1283
      %v1409 = vadd.f32 %v1377, %v1286
      %v1410 = vadd.f32 %v1378, %v1289
      %v1411 = vadd.f32 %v1379, %v1292
      %v1412 = vadd.f32 %v1380, %v1295
      %v1413 = vadd.f32 %v1381, %v1298
      %v1414 = vadd.f32 %v1382, %v1301
      %v1415 = vadd.f32 %v1383, %v1304
      %v1416 = vadd.f32 %v1384, %v1307
      %v1417 = vadd.f32 %v1385, %v1310
      %v1418 = vadd.f32 %v1386, %v1313
      %v1419 = vadd.f32 %v1387, %v1316
      %v1420 = vadd.f32 %v1388, %v1319
      %v1421 = vadd.f32 %v1389, %v1322
      %v1422 = vadd.f32 %v1390, %v1325
      %v1423 = vadd.f32 %v1391, %v1328
      %v1424 = vadd.f32 %v1392, %v1331
      %v1425 = vadd.f32 %v1393, %v1334
      %v1426 = vadd.f32 %v1394, %v1337
      %v1427 = vadd.f32 %v1395, %v1340
      %v1428 = vadd.f32 %v1396, %v1343
      %v1429 = vadd.f32 %v1397, %v1346
      %v1430 = vadd.f32 %v1398, %v1349
      %v1431 = vadd.f32 %v1399, %v1352
      %v1432 = vadd.f32 %v1400, %v1355
      %v1433 = vadd.f32 %v1401, %v1358
      %v1434 = vadd.f32 %v1402, %v1361
      %v1435 = vadd.f32 %v1403, %v1364
      %v1436 = vadd.f32 %v1404, %v1367
      %v1437 = vadd.f32 %v1405, %v1370
      %v1438 = vadd.f32 %v1406, %v1373
      %1439 = vst.msk [vmem:[#allocation3] sm:$0xff] %vm312, %v1407
      %1440 = vst.msk [vmem:[#allocation3 + $0x8] sm:$0xff] %vm312, %v1408
      %1441 = vst.msk [vmem:[#allocation3 + $0x10] sm:$0xff] %vm312, %v1409
      %1442 = vst.msk [vmem:[#allocation3 + $0x18] sm:$0xff] %vm312, %v1410
      %1443 = vst.msk [vmem:[#allocation3 + $0x20] sm:$0xff] %vm312, %v1411
      %1444 = vst.msk [vmem:[#allocation3 + $0x28] sm:$0xff] %vm312, %v1412
      %1445 = vst.msk [vmem:[#allocation3 + $0x30] sm:$0xff] %vm312, %v1413
      %1446 = vst.msk [vmem:[#allocation3 + $0x38] sm:$0xff] %vm312, %v1414
      %1447 = vst.msk [vmem:[#allocation3 + $0x40] sm:$0xff] %vm312, %v1415
      %1448 = vst.msk [vmem:[#allocation3 + $0x48] sm:$0xff] %vm312, %v1416
      %1449 = vst.msk [vmem:[#allocation3 + $0x50] sm:$0xff] %vm312, %v1417
      %1450 = vst.msk [vmem:[#allocation3 + $0x58] sm:$0xff] %vm312, %v1418
      %1451 = vst.msk [vmem:[#allocation3 + $0x60] sm:$0xff] %vm312, %v1419
      %1452 = vst.msk [vmem:[#allocation3 + $0x68] sm:$0xff] %vm312, %v1420
      %1453 = vst.msk [vmem:[#allocation3 + $0x70] sm:$0xff] %vm312, %v1421
      %1454 = vst.msk [vmem:[#allocation3 + $0x78] sm:$0xff] %vm312, %v1422
      %1455 = vst.msk [vmem:[#allocation3 + $0x80] sm:$0xff] %vm312, %v1423
      %1456 = vst.msk [vmem:[#allocation3 + $0x88] sm:$0xff] %vm312, %v1424
      %1457 = vst.msk [vmem:[#allocation3 + $0x90] sm:$0xff] %vm312, %v1425
      %1458 = vst.msk [vmem:[#allocation3 + $0x98] sm:$0xff] %vm312, %v1426
      %1459 = vst.msk [vmem:[#allocation3 + $0xa0] sm:$0xff] %vm312, %v1427
      %1460 = vst.msk [vmem:[#allocation3 + $0xa8] sm:$0xff] %vm312, %v1428
      %1461 = vst.msk [vmem:[#allocation3 + $0xb0] sm:$0xff] %vm312, %v1429
      %1462 = vst.msk [vmem:[#allocation3 + $0xb8] sm:$0xff] %vm312, %v1430
      %1463 = vst.msk [vmem:[#allocation3 + $0xc0] sm:$0xff] %vm312, %v1431
      %1464 = vst.msk [vmem:[#allocation3 + $0xc8] sm:$0xff] %vm312, %v1432
      %1465 = vst.msk [vmem:[#allocation3 + $0xd0] sm:$0xff] %vm312, %v1433
      %1466 = vst.msk [vmem:[#allocation3 + $0xd8] sm:$0xff] %vm312, %v1434
      %1467 = vst.msk [vmem:[#allocation3 + $0xe0] sm:$0xff] %vm312, %v1435
      %1468 = vst.msk [vmem:[#allocation3 + $0xe8] sm:$0xff] %vm312, %v1436
      %1469 = vst.msk [vmem:[#allocation3 + $0xf0] sm:$0xff] %vm312, %v1437
      %1470 = vst.msk [vmem:[#allocation3 + $0xf8] sm:$0xff] %vm312, %v1438
      %s1471 = scalar_lea.vmem %s1, 32
      %v1472 = vld [vmem:[%s1471] sm:$0xff]
      %v1473 = vld [vmem:[%s1471 + $0x8] sm:$0xf]
      %v1475 = vsel %vm1004, %v1000, 0
      %v1478 = vsel %vm1004, %v1001, 0
      %v1481 = vsel %vm1101, %v1473, 0
      %1483 = vmatpush.msra.mxu0 0.0
      %1484 = vmatpush.msra.mxu0 0.0
      %1485 = vmatpush.msra.mxu0 0.0
      %1486 = vmatpush.msra.mxu0 0.0
      %1487 = vmatpush.msra.mxu0 0.0
      %1488 = vmatpush.msra.mxu0 0.0
      %1489 = vmatpush.msra.mxu0 0.0
      %1490 = vmatpush.msra.mxu0 0.0
      %1491 = vmatpush.msra.mxu0 0.0
      %1492 = vmatpush.msra.mxu0 0.0
      %1493 = vmatpush.msra.mxu0 0.0
      %1494 = vmatpush.msra.mxu0 0.0
      %1495 = vmatpush.msra.mxu0 0.0
      %1496 = vmatpush.msra.mxu0 0.0
      %1497 = vmatpush.msra.mxu0 %v1481
      %1498 = vmatpush.msra.mxu0 %v1472
      %1499 = vmatmul.f32.gmra.mxu0 %v1018
      %v1500 = vpop.f32.mrf.mxu0
      %v1501 = vadd.f32 0.0, %v1500
      %1502 = vmatmul.f32.gmra.mxu0 %v1021
      %v1503 = vpop.f32.mrf.mxu0
      %v1504 = vadd.f32 0.0, %v1503
      %1505 = vmatmul.f32.gmra.mxu0 %v1024
      %v1506 = vpop.f32.mrf.mxu0
      %v1507 = vadd.f32 0.0, %v1506
      %1508 = vmatmul.f32.gmra.mxu0 %v1027
      %v1509 = vpop.f32.mrf.mxu0
      %v1510 = vadd.f32 0.0, %v1509
      %1511 = vmatmul.f32.gmra.mxu0 %v1030
      %v1512 = vpop.f32.mrf.mxu0
      %v1513 = vadd.f32 0.0, %v1512
      %1514 = vmatmul.f32.gmra.mxu0 %v1033
      %v1515 = vpop.f32.mrf.mxu0
      %v1516 = vadd.f32 0.0, %v1515
      %1517 = vmatmul.f32.gmra.mxu0 %v1036
      %v1518 = vpop.f32.mrf.mxu0
      %v1519 = vadd.f32 0.0, %v1518
      %1520 = vmatmul.f32.gmra.mxu0 %v1039
      %v1521 = vpop.f32.mrf.mxu0
      %v1522 = vadd.f32 0.0, %v1521
      %1523 = vmatmul.f32.gmra.mxu0 %v1042
      %v1524 = vpop.f32.mrf.mxu0
      %v1525 = vadd.f32 0.0, %v1524
      %1526 = vmatmul.f32.gmra.mxu0 %v1045
      %v1527 = vpop.f32.mrf.mxu0
      %v1528 = vadd.f32 0.0, %v1527
      %1529 = vmatmul.f32.gmra.mxu0 %v1048
      %v1530 = vpop.f32.mrf.mxu0
      %v1531 = vadd.f32 0.0, %v1530
      %1532 = vmatmul.f32.gmra.mxu0 %v1051
      %v1533 = vpop.f32.mrf.mxu0
      %v1534 = vadd.f32 0.0, %v1533
      %1535 = vmatmul.f32.gmra.mxu0 %v1054
      %v1536 = vpop.f32.mrf.mxu0
      %v1537 = vadd.f32 0.0, %v1536
      %1538 = vmatmul.f32.gmra.mxu0 %v1057
      %v1539 = vpop.f32.mrf.mxu0
      %v1540 = vadd.f32 0.0, %v1539
      %1541 = vmatmul.f32.gmra.mxu0 %v1060
      %v1542 = vpop.f32.mrf.mxu0
      %v1543 = vadd.f32 0.0, %v1542
      %1544 = vmatmul.f32.gmra.mxu0 %v1063
      %v1545 = vpop.f32.mrf.mxu0
      %v1546 = vadd.f32 0.0, %v1545
      %1547 = vmatmul.f32.gmra.mxu0 %v1066
      %v1548 = vpop.f32.mrf.mxu0
      %v1549 = vadd.f32 0.0, %v1548
      %1550 = vmatmul.f32.gmra.mxu0 %v1069
      %v1551 = vpop.f32.mrf.mxu0
      %v1552 = vadd.f32 0.0, %v1551
      %1553 = vmatmul.f32.gmra.mxu0 %v1072
      %v1554 = vpop.f32.mrf.mxu0
      %v1555 = vadd.f32 0.0, %v1554
      %1556 = vmatmul.f32.gmra.mxu0 %v1075
      %v1557 = vpop.f32.mrf.mxu0
      %v1558 = vadd.f32 0.0, %v1557
      %1559 = vmatmul.f32.gmra.mxu0 %v1078
      %v1560 = vpop.f32.mrf.mxu0
      %v1561 = vadd.f32 0.0, %v1560
      %1562 = vmatmul.f32.gmra.mxu0 %v1081
      %v1563 = vpop.f32.mrf.mxu0
      %v1564 = vadd.f32 0.0, %v1563
      %1565 = vmatmul.f32.gmra.mxu0 %v1084
      %v1566 = vpop.f32.mrf.mxu0
      %v1567 = vadd.f32 0.0, %v1566
      %1568 = vmatmul.f32.gmra.mxu0 %v1087
      %v1569 = vpop.f32.mrf.mxu0
      %v1570 = vadd.f32 0.0, %v1569
      %1571 = vmatmul.f32.gmra.mxu0 %v1090
      %v1572 = vpop.f32.mrf.mxu0
      %v1573 = vadd.f32 0.0, %v1572
      %1574 = vmatmul.f32.gmra.mxu0 %v1093
      %v1575 = vpop.f32.mrf.mxu0
      %v1576 = vadd.f32 0.0, %v1575
      %1577 = vmatmul.f32.gmra.mxu0 %v1096
      %v1578 = vpop.f32.mrf.mxu0
      %v1579 = vadd.f32 0.0, %v1578
      %1580 = vmatmul.f32.gmra.mxu0 %v1099
      %v1581 = vpop.f32.mrf.mxu0
      %v1582 = vadd.f32 0.0, %v1581
      %1583 = vmatmul.f32.gmra.mxu0 %v1254
      %v1584 = vpop.f32.mrf.mxu0
      %v1585 = vadd.f32 0.0, %v1584
      %1586 = vmatmul.f32.gmra.mxu0 %v1257
      %v1587 = vpop.f32.mrf.mxu0
      %v1588 = vadd.f32 0.0, %v1587
      %1589 = vmatmul.f32.gmra.mxu0 %v1475
      %v1590 = vpop.f32.mrf.mxu0
      %v1591 = vadd.f32 0.0, %v1590
      %1592 = vmatmul.f32.gmra.mxu0 %v1478
      %v1593 = vpop.f32.mrf.mxu0
      %v1594 = vadd.f32 0.0, %v1593
      %1595 = vdwg.mxu0
      %v1596 = vld [vmem:[#allocation3] sm:$0xff]
      %v1597 = vld [vmem:[#allocation3 + $0x8] sm:$0xff]
      %v1598 = vld [vmem:[#allocation3 + $0x10] sm:$0xff]
      %v1599 = vld [vmem:[#allocation3 + $0x18] sm:$0xff]
      %v1600 = vld [vmem:[#allocation3 + $0x20] sm:$0xff]
      %v1601 = vld [vmem:[#allocation3 + $0x28] sm:$0xff]
      %v1602 = vld [vmem:[#allocation3 + $0x30] sm:$0xff]
      %v1603 = vld [vmem:[#allocation3 + $0x38] sm:$0xff]
      %v1604 = vld [vmem:[#allocation3 + $0x40] sm:$0xff]
      %v1605 = vld [vmem:[#allocation3 + $0x48] sm:$0xff]
      %v1606 = vld [vmem:[#allocation3 + $0x50] sm:$0xff]
      %v1607 = vld [vmem:[#allocation3 + $0x58] sm:$0xff]
      %v1608 = vld [vmem:[#allocation3 + $0x60] sm:$0xff]
      %v1609 = vld [vmem:[#allocation3 + $0x68] sm:$0xff]
      %v1610 = vld [vmem:[#allocation3 + $0x70] sm:$0xff]
      %v1611 = vld [vmem:[#allocation3 + $0x78] sm:$0xff]
      %v1612 = vld [vmem:[#allocation3 + $0x80] sm:$0xff]
      %v1613 = vld [vmem:[#allocation3 + $0x88] sm:$0xff]
      %v1614 = vld [vmem:[#allocation3 + $0x90] sm:$0xff]
      %v1615 = vld [vmem:[#allocation3 + $0x98] sm:$0xff]
      %v1616 = vld [vmem:[#allocation3 + $0xa0] sm:$0xff]
      %v1617 = vld [vmem:[#allocation3 + $0xa8] sm:$0xff]
      %v1618 = vld [vmem:[#allocation3 + $0xb0] sm:$0xff]
      %v1619 = vld [vmem:[#allocation3 + $0xb8] sm:$0xff]
      %v1620 = vld [vmem:[#allocation3 + $0xc0] sm:$0xff]
      %v1621 = vld [vmem:[#allocation3 + $0xc8] sm:$0xff]
      %v1622 = vld [vmem:[#allocation3 + $0xd0] sm:$0xff]
      %v1623 = vld [vmem:[#allocation3 + $0xd8] sm:$0xff]
      %v1624 = vld [vmem:[#allocation3 + $0xe0] sm:$0xff]
      %v1625 = vld [vmem:[#allocation3 + $0xe8] sm:$0xff]
      %v1626 = vld [vmem:[#allocation3 + $0xf0] sm:$0xff]
      %v1627 = vld [vmem:[#allocation3 + $0xf8] sm:$0xff]
      %v1628 = vadd.f32 %v1596, %v1501
      %v1629 = vadd.f32 %v1597, %v1504
      %v1630 = vadd.f32 %v1598, %v1507
      %v1631 = vadd.f32 %v1599, %v1510
      %v1632 = vadd.f32 %v1600, %v1513
      %v1633 = vadd.f32 %v1601, %v1516
      %v1634 = vadd.f32 %v1602, %v1519
      %v1635 = vadd.f32 %v1603, %v1522
      %v1636 = vadd.f32 %v1604, %v1525
      %v1637 = vadd.f32 %v1605, %v1528
      %v1638 = vadd.f32 %v1606, %v1531
      %v1639 = vadd.f32 %v1607, %v1534
      %v1640 = vadd.f32 %v1608, %v1537
      %v1641 = vadd.f32 %v1609, %v1540
      %v1642 = vadd.f32 %v1610, %v1543
      %v1643 = vadd.f32 %v1611, %v1546
      %v1644 = vadd.f32 %v1612, %v1549
      %v1645 = vadd.f32 %v1613, %v1552
      %v1646 = vadd.f32 %v1614, %v1555
      %v1647 = vadd.f32 %v1615, %v1558
      %v1648 = vadd.f32 %v1616, %v1561
      %v1649 = vadd.f32 %v1617, %v1564
      %v1650 = vadd.f32 %v1618, %v1567
      %v1651 = vadd.f32 %v1619, %v1570
      %v1652 = vadd.f32 %v1620, %v1573
      %v1653 = vadd.f32 %v1621, %v1576
      %v1654 = vadd.f32 %v1622, %v1579
      %v1655 = vadd.f32 %v1623, %v1582
      %v1656 = vadd.f32 %v1624, %v1585
      %v1657 = vadd.f32 %v1625, %v1588
      %v1658 = vadd.f32 %v1626, %v1591
      %v1659 = vadd.f32 %v1627, %v1594
      %1660 = vst.msk [vmem:[#allocation3] sm:$0xff] %vm312, %v1628
      %1661 = vst.msk [vmem:[#allocation3 + $0x8] sm:$0xff] %vm312, %v1629
      %1662 = vst.msk [vmem:[#allocation3 + $0x10] sm:$0xff] %vm312, %v1630
      %1663 = vst.msk [vmem:[#allocation3 + $0x18] sm:$0xff] %vm312, %v1631
      %1664 = vst.msk [vmem:[#allocation3 + $0x20] sm:$0xff] %vm312, %v1632
      %1665 = vst.msk [vmem:[#allocation3 + $0x28] sm:$0xff] %vm312, %v1633
      %1666 = vst.msk [vmem:[#allocation3 + $0x30] sm:$0xff] %vm312, %v1634
      %1667 = vst.msk [vmem:[#allocation3 + $0x38] sm:$0xff] %vm312, %v1635
      %1668 = vst.msk [vmem:[#allocation3 + $0x40] sm:$0xff] %vm312, %v1636
      %1669 = vst.msk [vmem:[#allocation3 + $0x48] sm:$0xff] %vm312, %v1637
      %1670 = vst.msk [vmem:[#allocation3 + $0x50] sm:$0xff] %vm312, %v1638
      %1671 = vst.msk [vmem:[#allocation3 + $0x58] sm:$0xff] %vm312, %v1639
      %1672 = vst.msk [vmem:[#allocation3 + $0x60] sm:$0xff] %vm312, %v1640
      %1673 = vst.msk [vmem:[#allocation3 + $0x68] sm:$0xff] %vm312, %v1641
      %1674 = vst.msk [vmem:[#allocation3 + $0x70] sm:$0xff] %vm312, %v1642
      %1675 = vst.msk [vmem:[#allocation3 + $0x78] sm:$0xff] %vm312, %v1643
      %1676 = vst.msk [vmem:[#allocation3 + $0x80] sm:$0xff] %vm312, %v1644
      %1677 = vst.msk [vmem:[#allocation3 + $0x88] sm:$0xff] %vm312, %v1645
      %1678 = vst.msk [vmem:[#allocation3 + $0x90] sm:$0xff] %vm312, %v1646
      %1679 = vst.msk [vmem:[#allocation3 + $0x98] sm:$0xff] %vm312, %v1647
      %1680 = vst.msk [vmem:[#allocation3 + $0xa0] sm:$0xff] %vm312, %v1648
      %1681 = vst.msk [vmem:[#allocation3 + $0xa8] sm:$0xff] %vm312, %v1649
      %1682 = vst.msk [vmem:[#allocation3 + $0xb0] sm:$0xff] %vm312, %v1650
      %1683 = vst.msk [vmem:[#allocation3 + $0xb8] sm:$0xff] %vm312, %v1651
      %1684 = vst.msk [vmem:[#allocation3 + $0xc0] sm:$0xff] %vm312, %v1652
      %1685 = vst.msk [vmem:[#allocation3 + $0xc8] sm:$0xff] %vm312, %v1653
      %1686 = vst.msk [vmem:[#allocation3 + $0xd0] sm:$0xff] %vm312, %v1654
      %1687 = vst.msk [vmem:[#allocation3 + $0xd8] sm:$0xff] %vm312, %v1655
      %1688 = vst.msk [vmem:[#allocation3 + $0xe0] sm:$0xff] %vm312, %v1656
      %1689 = vst.msk [vmem:[#allocation3 + $0xe8] sm:$0xff] %vm312, %v1657
      %1690 = vst.msk [vmem:[#allocation3 + $0xf0] sm:$0xff] %vm312, %v1658
      %1691 = vst.msk [vmem:[#allocation3 + $0xf8] sm:$0xff] %vm312, %v1659
      %v1692 = vld [vmem:[#allocation3] sm:$0xff]
      %v1693 = vld [vmem:[#allocation3 + $0x8] sm:$0xff]
      %v1694 = vld [vmem:[#allocation3 + $0x10] sm:$0xff]
      %v1695 = vld [vmem:[#allocation3 + $0x18] sm:$0xff]
      %v1696 = vld [vmem:[#allocation3 + $0x20] sm:$0xff]
      %v1697 = vld [vmem:[#allocation3 + $0x28] sm:$0xff]
      %v1698 = vld [vmem:[#allocation3 + $0x30] sm:$0xff]
      %v1699 = vld [vmem:[#allocation3 + $0x38] sm:$0xff]
      %v1700 = vld [vmem:[#allocation3 + $0x40] sm:$0xff]
      %v1701 = vld [vmem:[#allocation3 + $0x48] sm:$0xff]
      %v1702 = vld [vmem:[#allocation3 + $0x50] sm:$0xff]
      %v1703 = vld [vmem:[#allocation3 + $0x58] sm:$0xff]
      %v1704 = vld [vmem:[#allocation3 + $0x60] sm:$0xff]
      %v1705 = vld [vmem:[#allocation3 + $0x68] sm:$0xff]
      %v1706 = vld [vmem:[#allocation3 + $0x70] sm:$0xff]
      %v1707 = vld [vmem:[#allocation3 + $0x78] sm:$0xff]
      %v1708 = vld [vmem:[#allocation3 + $0x80] sm:$0xff]
      %v1709 = vld [vmem:[#allocation3 + $0x88] sm:$0xff]
      %v1710 = vld [vmem:[#allocation3 + $0x90] sm:$0xff]
      %v1711 = vld [vmem:[#allocation3 + $0x98] sm:$0xff]
      %v1712 = vld [vmem:[#allocation3 + $0xa0] sm:$0xff]
      %v1713 = vld [vmem:[#allocation3 + $0xa8] sm:$0xff]
      %v1714 = vld [vmem:[#allocation3 + $0xb0] sm:$0xff]
      %v1715 = vld [vmem:[#allocation3 + $0xb8] sm:$0xff]
      %v1716 = vld [vmem:[#allocation3 + $0xc0] sm:$0xff]
      %v1717 = vld [vmem:[#allocation3 + $0xc8] sm:$0xff]
      %v1718 = vld [vmem:[#allocation3 + $0xd0] sm:$0xff]
      %v1719 = vld [vmem:[#allocation3 + $0xd8] sm:$0xff]
      %v1720 = vld [vmem:[#allocation3 + $0xe0] sm:$0xff]
      %v1721 = vld [vmem:[#allocation3 + $0xe8] sm:$0xff]
      %v1722 = vld [vmem:[#allocation3 + $0xf0] sm:$0xff]
      %v1723 = vld [vmem:[#allocation3 + $0xf8] sm:$0xff]
      %v1724 = vld [vmem:[%s2] sm:$0x1]
      %v1725 = vld [vmem:[%s3] sm:$0x1]
      %v1726 = vsel %vm312, %v1692, 0.0
      %v1727 = vsel %vm312, %v1693, 0.0
      %v1728 = vadd.f32 %v1726, %v1727
      %v1729 = vsel %vm312, %v1694, 0.0
      %v1730 = vadd.f32 %v1728, %v1729
      %v1731 = vsel %vm312, %v1695, 0.0
      %v1732 = vadd.f32 %v1730, %v1731
      %v1733 = vsel %vm312, %v1696, 0.0
      %v1734 = vadd.f32 %v1732, %v1733
      %v1735 = vsel %vm312, %v1697, 0.0
      %v1736 = vadd.f32 %v1734, %v1735
      %v1737 = vsel %vm312, %v1698, 0.0
      %v1738 = vadd.f32 %v1736, %v1737
      %v1739 = vsel %vm312, %v1699, 0.0
      %v1740 = vadd.f32 %v1738, %v1739
      %v1741 = vsel %vm312, %v1700, 0.0
      %v1742 = vadd.f32 %v1740, %v1741
      %v1743 = vsel %vm312, %v1701, 0.0
      %v1744 = vadd.f32 %v1742, %v1743
      %v1745 = vsel %vm312, %v1702, 0.0
      %v1746 = vadd.f32 %v1744, %v1745
      %v1747 = vsel %vm312, %v1703, 0.0
      %v1748 = vadd.f32 %v1746, %v1747
      %v1749 = vsel %vm312, %v1704, 0.0
      %v1750 = vadd.f32 %v1748, %v1749
      %v1751 = vsel %vm312, %v1705, 0.0
      %v1752 = vadd.f32 %v1750, %v1751
      %v1753 = vsel %vm312, %v1706, 0.0
      %v1754 = vadd.f32 %v1752, %v1753
      %v1755 = vsel %vm312, %v1707, 0.0
      %v1756 = vadd.f32 %v1754, %v1755
      %v1757 = vsel %vm312, %v1708, 0.0
      %v1758 = vadd.f32 %v1756, %v1757
      %v1759 = vsel %vm312, %v1709, 0.0
      %v1760 = vadd.f32 %v1758, %v1759
      %v1761 = vsel %vm312, %v1710, 0.0
      %v1762 = vadd.f32 %v1760, %v1761
      %v1763 = vsel %vm312, %v1711, 0.0
      %v1764 = vadd.f32 %v1762, %v1763
      %v1765 = vsel %vm312, %v1712, 0.0
      %v1766 = vadd.f32 %v1764, %v1765
      %v1767 = vsel %vm312, %v1713, 0.0
      %v1768 = vadd.f32 %v1766, %v1767
      %v1769 = vsel %vm312, %v1714, 0.0
      %v1770 = vadd.f32 %v1768, %v1769
      %v1771 = vsel %vm312, %v1715, 0.0
      %v1772 = vadd.f32 %v1770, %v1771
      %v1773 = vsel %vm312, %v1716, 0.0
      %v1774 = vadd.f32 %v1772, %v1773
      %v1775 = vsel %vm312, %v1717, 0.0
      %v1776 = vadd.f32 %v1774, %v1775
      %v1777 = vsel %vm312, %v1718, 0.0
      %v1778 = vadd.f32 %v1776, %v1777
      %v1779 = vsel %vm312, %v1719, 0.0
      %v1780 = vadd.f32 %v1778, %v1779
      %v1781 = vsel %vm312, %v1720, 0.0
      %v1782 = vadd.f32 %v1780, %v1781
      %v1783 = vsel %vm312, %v1721, 0.0
      %v1784 = vadd.f32 %v1782, %v1783
      %v1785 = vsel %vm312, %v1722, 0.0
      %v1786 = vadd.f32 %v1784, %v1785
      %v1787 = vsel %vm312, %v1723, 0.0
      %v1788 = vadd.f32 %v1786, %v1787
      %v1789 = vrot.slane %v1788, 4
      %v1790 = vadd.f32 %v1788, %v1789
      %v1791 = vrot.slane %v1790, 2
      %v1792 = vadd.f32 %v1790, %v1791
      %v1793 = vrot.slane %v1792, 1
      %v1794 = vadd.f32 %v1792, %v1793
      %v1795 = vmul.f32 %v1692, %v1692
      %v1796 = vmul.f32 %v1693, %v1693
      %v1797 = vmul.f32 %v1694, %v1694
      %v1798 = vmul.f32 %v1695, %v1695
      %v1799 = vmul.f32 %v1696, %v1696
      %v1800 = vmul.f32 %v1697, %v1697
      %v1801 = vmul.f32 %v1698, %v1698
      %v1802 = vmul.f32 %v1699, %v1699
      %v1803 = vmul.f32 %v1700, %v1700
      %v1804 = vmul.f32 %v1701, %v1701
      %v1805 = vmul.f32 %v1702, %v1702
      %v1806 = vmul.f32 %v1703, %v1703
      %v1807 = vmul.f32 %v1704, %v1704
      %v1808 = vmul.f32 %v1705, %v1705
      %v1809 = vmul.f32 %v1706, %v1706
      %v1810 = vmul.f32 %v1707, %v1707
      %v1811 = vmul.f32 %v1708, %v1708
      %v1812 = vmul.f32 %v1709, %v1709
      %v1813 = vmul.f32 %v1710, %v1710
      %v1814 = vmul.f32 %v1711, %v1711
      %v1815 = vmul.f32 %v1712, %v1712
      %v1816 = vmul.f32 %v1713, %v1713
      %v1817 = vmul.f32 %v1714, %v1714
      %v1818 = vmul.f32 %v1715, %v1715
      %v1819 = vmul.f32 %v1716, %v1716
      %v1820 = vmul.f32 %v1717, %v1717
      %v1821 = vmul.f32 %v1718, %v1718
      %v1822 = vmul.f32 %v1719, %v1719
      %v1823 = vmul.f32 %v1720, %v1720
      %v1824 = vmul.f32 %v1721, %v1721
      %v1825 = vmul.f32 %v1722, %v1722
      %v1826 = vmul.f32 %v1723, %v1723
      %v1827 = vsel %vm312, %v1795, 0.0
      %v1828 = vsel %vm312, %v1796, 0.0
      %v1829 = vadd.f32 %v1827, %v1828
      %v1830 = vsel %vm312, %v1797, 0.0
      %v1831 = vadd.f32 %v1829, %v1830
      %v1832 = vsel %vm312, %v1798, 0.0
      %v1833 = vadd.f32 %v1831, %v1832
      %v1834 = vsel %vm312, %v1799, 0.0
      %v1835 = vadd.f32 %v1833, %v1834
      %v1836 = vsel %vm312, %v1800, 0.0
      %v1837 = vadd.f32 %v1835, %v1836
      %v1838 = vsel %vm312, %v1801, 0.0
      %v1839 = vadd.f32 %v1837, %v1838
      %v1840 = vsel %vm312, %v1802, 0.0
      %v1841 = vadd.f32 %v1839, %v1840
      %v1842 = vsel %vm312, %v1803, 0.0
      %v1843 = vadd.f32 %v1841, %v1842
      %v1844 = vsel %vm312, %v1804, 0.0
      %v1845 = vadd.f32 %v1843, %v1844
      %v1846 = vsel %vm312, %v1805, 0.0
      %v1847 = vadd.f32 %v1845, %v1846
      %v1848 = vsel %vm312, %v1806, 0.0
      %v1849 = vadd.f32 %v1847, %v1848
      %v1850 = vsel %vm312, %v1807, 0.0
      %v1851 = vadd.f32 %v1849, %v1850
      %v1852 = vsel %vm312, %v1808, 0.0
      %v1853 = vadd.f32 %v1851, %v1852
      %v1854 = vsel %vm312, %v1809, 0.0
      %v1855 = vadd.f32 %v1853, %v1854
      %v1856 = vsel %vm312, %v1810, 0.0
      %v1857 = vadd.f32 %v1855, %v1856
      %v1858 = vsel %vm312, %v1811, 0.0
      %v1859 = vadd.f32 %v1857, %v1858
      %v1860 = vsel %vm312, %v1812, 0.0
      %v1861 = vadd.f32 %v1859, %v1860
      %v1862 = vsel %vm312, %v1813, 0.0
      %v1863 = vadd.f32 %v1861, %v1862
      %v1864 = vsel %vm312, %v1814, 0.0
      %v1865 = vadd.f32 %v1863, %v1864
      %v1866 = vsel %vm312, %v1815, 0.0
      %v1867 = vadd.f32 %v1865, %v1866
      %v1868 = vsel %vm312, %v1816, 0.0
      %v1869 = vadd.f32 %v1867, %v1868
      %v1870 = vsel %vm312, %v1817, 0.0
      %v1871 = vadd.f32 %v1869, %v1870
      %v1872 = vsel %vm312, %v1818, 0.0
      %v1873 = vadd.f32 %v1871, %v1872
      %v1874 = vsel %vm312, %v1819, 0.0
      %v1875 = vadd.f32 %v1873, %v1874
      %v1876 = vsel %vm312, %v1820, 0.0
      %v1877 = vadd.f32 %v1875, %v1876
      %v1878 = vsel %vm312, %v1821, 0.0
      %v1879 = vadd.f32 %v1877, %v1878
      %v1880 = vsel %vm312, %v1822, 0.0
      %v1881 = vadd.f32 %v1879, %v1880
      %v1882 = vsel %vm312, %v1823, 0.0
      %v1883 = vadd.f32 %v1881, %v1882
      %v1884 = vsel %vm312, %v1824, 0.0
      %v1885 = vadd.f32 %v1883, %v1884
      %v1886 = vsel %vm312, %v1825, 0.0
      %v1887 = vadd.f32 %v1885, %v1886
      %v1888 = vsel %vm312, %v1826, 0.0
      %v1889 = vadd.f32 %v1887, %v1888
      %v1890 = vrot.slane %v1889, 4
      %v1891 = vadd.f32 %v1889, %v1890
      %v1892 = vrot.slane %v1891, 2
      %v1893 = vadd.f32 %v1891, %v1892
      %v1894 = vrot.slane %v1893, 1
      %v1895 = vadd.f32 %v1893, %v1894
      %v1896 = vmul.f32 %v1794, 0.00390625
      %v1897 = vmul.f32 %v1895, 0.00390625
      %v1898 = vmul.f32 %v1896, %v1896
      %v1899 = vsub.f32 %v1897, %v1898
      %v1900 = vmax.f32 %v1899, 0.0
      %v1901 = vadd.f32 %v1900, 1e-05
      %v1902 = vrsqrt.pop %v1901
      %v1903 = vmul.f32 %v1902, %v1901
      %v1904 = vmul.f32 %v1903, %v1902
      %v1905 = vmul.f32 0.5, %v1904
      %v1906 = vsub.f32 1.5, %v1905
      %v1907 = vmul.f32 %v1902, %v1906
      %vm1908 = vweird.f32 %v1901
      %vm1909 = vweird.f32 %v1902
      %vm1910 = vmor %vm1908, %vm1909
      %v1911 = vsel %vm1910, %v1902, %v1907
      %v1912 = vmul.f32 %v1724, %v1911
      %v1913 = vmul.f32 %v1896, %v1912
      %v1914 = vsub.f32 %v1725, %v1913
      %v1916 = vperm.slane %v1912, 0
      %v1918 = vmul.f32 %v1692, %v1916
      %v1919 = vmul.f32 %v1693, %v1916
      %v1920 = vmul.f32 %v1694, %v1916
      %v1921 = vmul.f32 %v1695, %v1916
      %v1922 = vmul.f32 %v1696, %v1916
      %v1923 = vmul.f32 %v1697, %v1916
      %v1924 = vmul.f32 %v1698, %v1916
      %v1925 = vmul.f32 %v1699, %v1916
      %v1926 = vmul.f32 %v1700, %v1916
      %v1927 = vmul.f32 %v1701, %v1916
      %v1928 = vmul.f32 %v1702, %v1916
      %v1929 = vmul.f32 %v1703, %v1916
      %v1930 = vmul.f32 %v1704, %v1916
      %v1931 = vmul.f32 %v1705, %v1916
      %v1932 = vmul.f32 %v1706, %v1916
      %v1933 = vmul.f32 %v1707, %v1916
      %v1934 = vmul.f32 %v1708, %v1916
      %v1935 = vmul.f32 %v1709, %v1916
      %v1936 = vmul.f32 %v1710, %v1916
      %v1937 = vmul.f32 %v1711, %v1916
      %v1938 = vmul.f32 %v1712, %v1916
      %v1939 = vmul.f32 %v1713, %v1916
      %v1940 = vmul.f32 %v1714, %v1916
      %v1941 = vmul.f32 %v1715, %v1916
      %v1942 = vmul.f32 %v1716, %v1916
      %v1943 = vmul.f32 %v1717, %v1916
      %v1944 = vmul.f32 %v1718, %v1916
      %v1945 = vmul.f32 %v1719, %v1916
      %v1946 = vmul.f32 %v1720, %v1916
      %v1947 = vmul.f32 %v1721, %v1916
      %v1948 = vmul.f32 %v1722, %v1916
      %v1949 = vmul.f32 %v1723, %v1916
      %v1951 = vperm.slane %v1914, 0
      %v1953 = vadd.f32 %v1918, %v1951
      %v1954 = vadd.f32 %v1919, %v1951
      %v1955 = vadd.f32 %v1920, %v1951
      %v1956 = vadd.f32 %v1921, %v1951
      %v1957 = vadd.f32 %v1922, %v1951
      %v1958 = vadd.f32 %v1923, %v1951
      %v1959 = vadd.f32 %v1924, %v1951
      %v1960 = vadd.f32 %v1925, %v1951
      %v1961 = vadd.f32 %v1926, %v1951
      %v1962 = vadd.f32 %v1927, %v1951
      %v1963 = vadd.f32 %v1928, %v1951
      %v1964 = vadd.f32 %v1929, %v1951
      %v1965 = vadd.f32 %v1930, %v1951
      %v1966 = vadd.f32 %v1931, %v1951
      %v1967 = vadd.f32 %v1932, %v1951
      %v1968 = vadd.f32 %v1933, %v1951
      %v1969 = vadd.f32 %v1934, %v1951
      %v1970 = vadd.f32 %v1935, %v1951
      %v1971 = vadd.f32 %v1936, %v1951
      %v1972 = vadd.f32 %v1937, %v1951
      %v1973 = vadd.f32 %v1938, %v1951
      %v1974 = vadd.f32 %v1939, %v1951
      %v1975 = vadd.f32 %v1940, %v1951
      %v1976 = vadd.f32 %v1941, %v1951
      %v1977 = vadd.f32 %v1942, %v1951
      %v1978 = vadd.f32 %v1943, %v1951
      %v1979 = vadd.f32 %v1944, %v1951
      %v1980 = vadd.f32 %v1945, %v1951
      %v1981 = vadd.f32 %v1946, %v1951
      %v1982 = vadd.f32 %v1947, %v1951
      %v1983 = vadd.f32 %v1948, %v1951
      %v1984 = vadd.f32 %v1949, %v1951
      %v1985 = vmax.f32 %v1953, 0.0
      %v1986 = vmax.f32 %v1954, 0.0
      %v1987 = vmax.f32 %v1955, 0.0
      %v1988 = vmax.f32 %v1956, 0.0
      %v1989 = vmax.f32 %v1957, 0.0
      %v1990 = vmax.f32 %v1958, 0.0
      %v1991 = vmax.f32 %v1959, 0.0
      %v1992 = vmax.f32 %v1960, 0.0
      %v1993 = vmax.f32 %v1961, 0.0
      %v1994 = vmax.f32 %v1962, 0.0
      %v1995 = vmax.f32 %v1963, 0.0
      %v1996 = vmax.f32 %v1964, 0.0
      %v1997 = vmax.f32 %v1965, 0.0
      %v1998 = vmax.f32 %v1966, 0.0
      %v1999 = vmax.f32 %v1967, 0.0
      %v2000 = vmax.f32 %v1968, 0.0
      %v2001 = vmax.f32 %v1969, 0.0
      %v2002 = vmax.f32 %v1970, 0.0
      %v2003 = vmax.f32 %v1971, 0.0
      %v2004 = vmax.f32 %v1972, 0.0
      %v2005 = vmax.f32 %v1973, 0.0
      %v2006 = vmax.f32 %v1974, 0.0
      %v2007 = vmax.f32 %v1975, 0.0
      %v2008 = vmax.f32 %v1976, 0.0
      %v2009 = vmax.f32 %v1977, 0.0
      %v2010 = vmax.f32 %v1978, 0.0
      %v2011 = vmax.f32 %v1979, 0.0
      %v2012 = vmax.f32 %v1980, 0.0
      %v2013 = vmax.f32 %v1981, 0.0
      %v2014 = vmax.f32 %v1982, 0.0
      %v2015 = vmax.f32 %v1983, 0.0
      %v2016 = vmax.f32 %v1984, 0.0
      %2017 = vst.msk [vmem:[%s311 + $0x1] sm:$0xff] %vm312, %v1985
      %2018 = vst.msk [vmem:[%s311 + $0x9] sm:$0xff] %vm312, %v1986
      %2019 = vst.msk [vmem:[%s311 + $0x19] sm:$0xff] %vm312, %v1987
      %2020 = vst.msk [vmem:[%s311 + $0x21] sm:$0xff] %vm312, %v1988
      %2021 = vst.msk [vmem:[%s311 + $0x31] sm:$0xff] %vm312, %v1989
      %2022 = vst.msk [vmem:[%s311 + $0x39] sm:$0xff] %vm312, %v1990
      %2023 = vst.msk [vmem:[%s311 + $0x49] sm:$0xff] %vm312, %v1991
      %2024 = vst.msk [vmem:[%s311 + $0x51] sm:$0xff] %vm312, %v1992
      %2025 = vst.msk [vmem:[%s311 + $0x61] sm:$0xff] %vm312, %v1993
      %2026 = vst.msk [vmem:[%s311 + $0x69] sm:$0xff] %vm312, %v1994
      %2027 = vst.msk [vmem:[%s311 + $0x79] sm:$0xff] %vm312, %v1995
      %2028 = vst.msk [vmem:[%s311 + $0x81] sm:$0xff] %vm312, %v1996
      %2029 = vst.msk [vmem:[%s311 + $0x91] sm:$0xff] %vm312, %v1997
      %2030 = vst.msk [vmem:[%s311 + $0x99] sm:$0xff] %vm312, %v1998
      %2031 = vst.msk [vmem:[%s311 + $0xa9] sm:$0xff] %vm312, %v1999
      %2032 = vst.msk [vmem:[%s311 + $0xb1] sm:$0xff] %vm312, %v2000
      %2033 = vst.msk [vmem:[%s311 + $0xc1] sm:$0xff] %vm312, %v2001
      %2034 = vst.msk [vmem:[%s311 + $0xc9] sm:$0xff] %vm312, %v2002
      %2035 = vst.msk [vmem:[%s311 + $0xd9] sm:$0xff] %vm312, %v2003
      %2036 = vst.msk [vmem:[%s311 + $0xe1] sm:$0xff] %vm312, %v2004
      %2037 = vst.msk [vmem:[%s311 + $0xf1] sm:$0xff] %vm312, %v2005
      %2038 = vst.msk [vmem:[%s311 + $0xf9] sm:$0xff] %vm312, %v2006
      %2039 = vst.msk [vmem:[%s311 + $0x109] sm:$0xff] %vm312, %v2007
      %2040 = vst.msk [vmem:[%s311 + $0x111] sm:$0xff] %vm312, %v2008
      %2041 = vst.msk [vmem:[%s311 + $0x121] sm:$0xff] %vm312, %v2009
      %2042 = vst.msk [vmem:[%s311 + $0x129] sm:$0xff] %vm312, %v2010
      %2043 = vst.msk [vmem:[%s311 + $0x139] sm:$0xff] %vm312, %v2011
      %2044 = vst.msk [vmem:[%s311 + $0x141] sm:$0xff] %vm312, %v2012
      %2045 = vst.msk [vmem:[%s311 + $0x151] sm:$0xff] %vm312, %v2013
      %2046 = vst.msk [vmem:[%s311 + $0x159] sm:$0xff] %vm312, %v2014
      %2047 = vst.msk [vmem:[%s311 + $0x169] sm:$0xff] %vm312, %v2015
      %2048 = vst.msk [vmem:[%s311 + $0x171] sm:$0xff] %vm312, %v2016
      %2049 = vst.msk [vmem:[#allocation2 + $0x1] sm:$0xff] %vm312, %v1987
      %2050 = vst.msk [vmem:[#allocation2 + $0x9] sm:$0xff] %vm312, %v1988
      %2051 = vst.msk [vmem:[%s347 + $0x1] sm:$0xff] %vm312, %v2013
      %2052 = vst.msk [vmem:[%s347 + $0x9] sm:$0xff] %vm312, %v2014
      %v2053 = vld [vmem:[#allocation2 + $0x2] sm:$0x1]
      %v2054 = vld [vmem:[#allocation2 + $0x1a] sm:$0x1]
      %v2055 = vld [vmem:[#allocation2 + $0x32] sm:$0x1]
      %v2056 = vld [vmem:[#allocation2 + $0x4a] sm:$0x1]
      %v2057 = vld [vmem:[#allocation2 + $0x62] sm:$0x1]
      %v2058 = vld [vmem:[#allocation2 + $0x7a] sm:$0x1]
      %v2059 = vld [vmem:[#allocation2 + $0x92] sm:$0x1]
      %v2060 = vld [vmem:[#allocation2 + $0xaa] sm:$0x1]
      %v2061 = vld [vmem:[#allocation2 + $0xc2] sm:$0x1]
      %v2062 = vld [vmem:[#allocation2 + $0xda] sm:$0x1]
      %v2063 = vld [vmem:[#allocation2 + $0xf2] sm:$0x1]
      %v2064 = vld [vmem:[#allocation2 + $0x10a] sm:$0x1]
      %v2065 = vld [vmem:[#allocation2 + $0x122] sm:$0x1]
      %v2066 = vld [vmem:[#allocation2 + $0x13a] sm:$0x1]
      %v2067 = vld [vmem:[#allocation2 + $0x152] sm:$0x1]
      %v2068 = vld [vmem:[#allocation2 + $0x16a] sm:$0x1]
      %v2069 = vld [vmem:[#allocation2 + $0x182] sm:$0x1]
      %v2070 = vld [vmem:[#allocation2 + $0x19a] sm:$0x1]
      %2071 = vst.msk [vmem:[#allocation2] sm:$0x1] %vm368, %v2053
      %2072 = vst.msk [vmem:[#allocation2 + $0x18] sm:$0x1] %vm368, %v2054
      %2073 = vst.msk [vmem:[#allocation2 + $0x30] sm:$0x1] %vm368, %v2055
      %2074 = vst.msk [vmem:[#allocation2 + $0x48] sm:$0x1] %vm368, %v2056
      %2075 = vst.msk [vmem:[#allocation2 + $0x60] sm:$0x1] %vm368, %v2057
      %2076 = vst.msk [vmem:[#allocation2 + $0x78] sm:$0x1] %vm368, %v2058
      %2077 = vst.msk [vmem:[#allocation2 + $0x90] sm:$0x1] %vm368, %v2059
      %2078 = vst.msk [vmem:[#allocation2 + $0xa8] sm:$0x1] %vm368, %v2060
      %2079 = vst.msk [vmem:[#allocation2 + $0xc0] sm:$0x1] %vm368, %v2061
      %2080 = vst.msk [vmem:[#allocation2 + $0xd8] sm:$0x1] %vm368, %v2062
      %2081 = vst.msk [vmem:[#allocation2 + $0xf0] sm:$0x1] %vm368, %v2063
      %2082 = vst.msk [vmem:[#allocation2 + $0x108] sm:$0x1] %vm368, %v2064
      %2083 = vst.msk [vmem:[#allocation2 + $0x120] sm:$0x1] %vm368, %v2065
      %2084 = vst.msk [vmem:[#allocation2 + $0x138] sm:$0x1] %vm368, %v2066
      %2085 = vst.msk [vmem:[#allocation2 + $0x150] sm:$0x1] %vm368, %v2067
      %2086 = vst.msk [vmem:[#allocation2 + $0x168] sm:$0x1] %vm368, %v2068
      %2087 = vst.msk [vmem:[#allocation2 + $0x180] sm:$0x1] %vm368, %v2069
      %2088 = vst.msk [vmem:[#allocation2 + $0x198] sm:$0x1] %vm368, %v2070
      %v2089 = vld [vmem:[#allocation2 + $0xf] sm:$0x1]
      %v2090 = vld [vmem:[#allocation2 + $0x27] sm:$0x1]
      %v2091 = vld [vmem:[#allocation2 + $0x3f] sm:$0x1]
      %v2092 = vld [vmem:[#allocation2 + $0x57] sm:$0x1]
      %v2093 = vld [vmem:[#allocation2 + $0x6f] sm:$0x1]
      %v2094 = vld [vmem:[#allocation2 + $0x87] sm:$0x1]
      %v2095 = vld [vmem:[#allocation2 + $0x9f] sm:$0x1]
      %v2096 = vld [vmem:[#allocation2 + $0xb7] sm:$0x1]
      %v2097 = vld [vmem:[#allocation2 + $0xcf] sm:$0x1]
      %v2098 = vld [vmem:[#allocation2 + $0xe7] sm:$0x1]
      %v2099 = vld [vmem:[#allocation2 + $0xff] sm:$0x1]
      %v2100 = vld [vmem:[#allocation2 + $0x117] sm:$0x1]
      %v2101 = vld [vmem:[#allocation2 + $0x12f] sm:$0x1]
      %v2102 = vld [vmem:[#allocation2 + $0x147] sm:$0x1]
      %v2103 = vld [vmem:[#allocation2 + $0x15f] sm:$0x1]
      %v2104 = vld [vmem:[#allocation2 + $0x177] sm:$0x1]
      %v2105 = vld [vmem:[#allocation2 + $0x18f] sm:$0x1]
      %v2106 = vld [vmem:[#allocation2 + $0x1a7] sm:$0x1]
      %2107 = vst.msk [vmem:[#allocation2 + $0x11] sm:$0x1] %vm368, %v2089
      %2108 = vst.msk [vmem:[#allocation2 + $0x29] sm:$0x1] %vm368, %v2090
      %2109 = vst.msk [vmem:[#allocation2 + $0x41] sm:$0x1] %vm368, %v2091
      %2110 = vst.msk [vmem:[#allocation2 + $0x59] sm:$0x1] %vm368, %v2092
      %2111 = vst.msk [vmem:[#allocation2 + $0x71] sm:$0x1] %vm368, %v2093
      %2112 = vst.msk [vmem:[#allocation2 + $0x89] sm:$0x1] %vm368, %v2094
      %2113 = vst.msk [vmem:[#allocation2 + $0xa1] sm:$0x1] %vm368, %v2095
      %2114 = vst.msk [vmem:[#allocation2 + $0xb9] sm:$0x1] %vm368, %v2096
      %2115 = vst.msk [vmem:[#allocation2 + $0xd1] sm:$0x1] %vm368, %v2097
      %2116 = vst.msk [vmem:[#allocation2 + $0xe9] sm:$0x1] %vm368, %v2098
      %2117 = vst.msk [vmem:[#allocation2 + $0x101] sm:$0x1] %vm368, %v2099
      %2118 = vst.msk [vmem:[#allocation2 + $0x119] sm:$0x1] %vm368, %v2100
      %2119 = vst.msk [vmem:[#allocation2 + $0x131] sm:$0x1] %vm368, %v2101
      %2120 = vst.msk [vmem:[#allocation2 + $0x149] sm:$0x1] %vm368, %v2102
      %2121 = vst.msk [vmem:[#allocation2 + $0x161] sm:$0x1] %vm368, %v2103
      %2122 = vst.msk [vmem:[#allocation2 + $0x179] sm:$0x1] %vm368, %v2104
      %2123 = vst.msk [vmem:[#allocation2 + $0x191] sm:$0x1] %vm368, %v2105
      %2124 = vst.msk [vmem:[#allocation2 + $0x1a9] sm:$0x1] %vm368, %v2106
      %v2125 = vld [vmem:[#allocation2] sm:$0xff]
      %v2126 = vld [vmem:[#allocation2 + $0x8] sm:$0xff]
      %v2127 = vld [vmem:[#allocation2 + $0x10] sm:$0x3]
      %v2128 = vld [vmem:[#allocation2 + $0x18] sm:$0xff]
      %v2129 = vld [vmem:[#allocation2 + $0x20] sm:$0xff]
      %v2130 = vld [vmem:[#allocation2 + $0x28] sm:$0x3]
      %v2131 = vld [vmem:[#allocation2 + $0x30] sm:$0xff]
      %v2132 = vld [vmem:[#allocation2 + $0x38] sm:$0xff]
      %v2133 = vld [vmem:[#allocation2 + $0x40] sm:$0x3]
      %v2134 = vld [vmem:[#allocation2 + $0x48] sm:$0xff]
      %v2135 = vld [vmem:[#allocation2 + $0x50] sm:$0xff]
      %v2136 = vld [vmem:[#allocation2 + $0x58] sm:$0x3]
      %v2137 = vld [vmem:[#allocation2 + $0x60] sm:$0xff]
      %v2138 = vld [vmem:[#allocation2 + $0x68] sm:$0xff]
      %v2139 = vld [vmem:[#allocation2 + $0x70] sm:$0x3]
      %v2140 = vld [vmem:[#allocation2 + $0x78] sm:$0xff]
      %v2141 = vld [vmem:[#allocation2 + $0x80] sm:$0xff]
      %v2142 = vld [vmem:[#allocation2 + $0x88] sm:$0x3]
      %v2143 = vld [vmem:[#allocation2 + $0x90] sm:$0xff]
      %v2144 = vld [vmem:[#allocation2 + $0x98] sm:$0xff]
      %v2145 = vld [vmem:[#allocation2 + $0xa0] sm:$0x3]
      %v2146 = vld [vmem:[#allocation2 + $0xa8] sm:$0xff]
      %v2147 = vld [vmem:[#allocation2 + $0xb0] sm:$0xff]
      %v2148 = vld [vmem:[#allocation2 + $0xb8] sm:$0x3]
      %v2149 = vld [vmem:[#allocation2 + $0xc0] sm:$0xff]
      %v2150 = vld [vmem:[#allocation2 + $0xc8] sm:$0xff]
      %v2151 = vld [vmem:[#allocation2 + $0xd0] sm:$0x3]
      %v2152 = vld [vmem:[#allocation2 + $0xd8] sm:$0xff]
      %v2153 = vld [vmem:[#allocation2 + $0xe0] sm:$0xff]
      %v2154 = vld [vmem:[#allocation2 + $0xe8] sm:$0x3]
      %v2155 = vld [vmem:[#allocation2 + $0xf0] sm:$0xff]
      %v2156 = vld [vmem:[#allocation2 + $0xf8] sm:$0xff]
      %v2157 = vld [vmem:[#allocation2 + $0x100] sm:$0x3]
      %v2158 = vld [vmem:[#allocation2 + $0x108] sm:$0xff]
      %v2159 = vld [vmem:[#allocation2 + $0x110] sm:$0xff]
      %v2160 = vld [vmem:[#allocation2 + $0x118] sm:$0x3]
      %v2161 = vld [vmem:[#allocation2 + $0x120] sm:$0xff]
      %v2162 = vld [vmem:[#allocation2 + $0x128] sm:$0xff]
      %v2163 = vld [vmem:[#allocation2 + $0x130] sm:$0x3]
      %v2164 = vld [vmem:[#allocation2 + $0x138] sm:$0xff]
      %v2165 = vld [vmem:[#allocation2 + $0x140] sm:$0xff]
      %v2166 = vld [vmem:[#allocation2 + $0x148] sm:$0x3]
      %v2167 = vld [vmem:[#allocation2 + $0x150] sm:$0xff]
      %v2168 = vld [vmem:[#allocation2 + $0x158] sm:$0xff]
      %v2169 = vld [vmem:[#allocation2 + $0x160] sm:$0x3]
      %v2170 = vld [vmem:[#allocation2 + $0x168] sm:$0xff]
      %v2171 = vld [vmem:[#allocation2 + $0x170] sm:$0xff]
      %v2172 = vld [vmem:[#allocation2 + $0x178] sm:$0x3]
      %v2173 = vld [vmem:[#allocation2 + $0x180] sm:$0xff]
      %v2174 = vld [vmem:[#allocation2 + $0x188] sm:$0xff]
      %v2175 = vld [vmem:[#allocation2 + $0x190] sm:$0x3]
      %v2176 = vld [vmem:[#allocation2 + $0x198] sm:$0xff]
      %v2177 = vld [vmem:[#allocation2 + $0x1a0] sm:$0xff]
      %v2178 = vld [vmem:[#allocation2 + $0x1a8] sm:$0x3]
      %v2233 = vrot.slane %v2125, 1
      %v2234 = vrot.slane %v2126, 1
      %v2235 = vsel %vm531, %v2233, %v2234
      %v2236 = vrot.slane %v2127, 1
      %v2237 = vsel %vm531, %v2234, %v2236
      %v2238 = vrot.slane %v2128, 1
      %v2239 = vrot.slane %v2129, 1
      %v2240 = vsel %vm531, %v2238, %v2239
      %v2241 = vrot.slane %v2130, 1
      %v2242 = vsel %vm531, %v2239, %v2241
      %v2243 = vrot.slane %v2131, 1
      %v2244 = vrot.slane %v2132, 1
      %v2245 = vsel %vm531, %v2243, %v2244
      %v2246 = vrot.slane %v2133, 1
      %v2247 = vsel %vm531, %v2244, %v2246
      %v2248 = vrot.slane %v2134, 1
      %v2249 = vrot.slane %v2135, 1
      %v2250 = vsel %vm531, %v2248, %v2249
      %v2251 = vrot.slane %v2136, 1
      %v2252 = vsel %vm531, %v2249, %v2251
      %v2253 = vrot.slane %v2137, 1
      %v2254 = vrot.slane %v2138, 1
      %v2255 = vsel %vm531, %v2253, %v2254
      %v2256 = vrot.slane %v2139, 1
      %v2257 = vsel %vm531, %v2254, %v2256
      %v2258 = vrot.slane %v2140, 1
      %v2259 = vrot.slane %v2141, 1
      %v2260 = vsel %vm531, %v2258, %v2259
      %v2261 = vrot.slane %v2142, 1
      %v2262 = vsel %vm531, %v2259, %v2261
      %v2263 = vrot.slane %v2143, 1
      %v2264 = vrot.slane %v2144, 1
      %v2265 = vsel %vm531, %v2263, %v2264
      %v2266 = vrot.slane %v2145, 1
      %v2267 = vsel %vm531, %v2264, %v2266
      %v2268 = vrot.slane %v2146, 1
      %v2269 = vrot.slane %v2147, 1
      %v2270 = vsel %vm531, %v2268, %v2269
      %v2271 = vrot.slane %v2148, 1
      %v2272 = vsel %vm531, %v2269, %v2271
      %v2273 = vrot.slane %v2149, 1
      %v2274 = vrot.slane %v2150, 1
      %v2275 = vsel %vm531, %v2273, %v2274
      %v2276 = vrot.slane %v2151, 1
      %v2277 = vsel %vm531, %v2274, %v2276
      %v2278 = vrot.slane %v2152, 1
      %v2279 = vrot.slane %v2153, 1
      %v2280 = vsel %vm531, %v2278, %v2279
      %v2281 = vrot.slane %v2154, 1
      %v2282 = vsel %vm531, %v2279, %v2281
      %v2283 = vrot.slane %v2155, 1
      %v2284 = vrot.slane %v2156, 1
      %v2285 = vsel %vm531, %v2283, %v2284
      %v2286 = vrot.slane %v2157, 1
      %v2287 = vsel %vm531, %v2284, %v2286
      %v2288 = vrot.slane %v2158, 1
      %v2289 = vrot.slane %v2159, 1
      %v2290 = vsel %vm531, %v2288, %v2289
      %v2291 = vrot.slane %v2160, 1
      %v2292 = vsel %vm531, %v2289, %v2291
      %v2293 = vrot.slane %v2161, 1
      %v2294 = vrot.slane %v2162, 1
      %v2295 = vsel %vm531, %v2293, %v2294
      %v2296 = vrot.slane %v2163, 1
      %v2297 = vsel %vm531, %v2294, %v2296
      %v2298 = vrot.slane %v2164, 1
      %v2299 = vrot.slane %v2165, 1
      %v2300 = vsel %vm531, %v2298, %v2299
      %v2301 = vrot.slane %v2166, 1
      %v2302 = vsel %vm531, %v2299, %v2301
      %v2303 = vrot.slane %v2167, 1
      %v2304 = vrot.slane %v2168, 1
      %v2305 = vsel %vm531, %v2303, %v2304
      %v2306 = vrot.slane %v2169, 1
      %v2307 = vsel %vm531, %v2304, %v2306
      %v2308 = vrot.slane %v2170, 1
      %v2309 = vrot.slane %v2171, 1
      %v2310 = vsel %vm531, %v2308, %v2309
      %v2311 = vrot.slane %v2172, 1
      %v2312 = vsel %vm531, %v2309, %v2311
      %v2313 = vrot.slane %v2173, 1
      %v2314 = vrot.slane %v2174, 1
      %v2315 = vsel %vm531, %v2313, %v2314
      %v2316 = vrot.slane %v2175, 1
      %v2317 = vsel %vm531, %v2314, %v2316
      %v2318 = vrot.slane %v2176, 1
      %v2319 = vrot.slane %v2177, 1
      %v2320 = vsel %vm531, %v2318, %v2319
      %v2321 = vrot.slane %v2178, 1
      %v2322 = vsel %vm531, %v2319, %v2321
      %2323 = vrot.lane.b32.xlu0 %v2235, 4
      %v2324 = vpop.permute.xlu0 %2323
      %2325 = vrot.lane.b32.xlu0 %v2237, 4
      %v2326 = vpop.permute.xlu0 %2325
      %2327 = vrot.lane.b32.xlu0 %v2240, 4
      %v2328 = vpop.permute.xlu0 %2327
      %2329 = vrot.lane.b32.xlu0 %v2242, 4
      %v2330 = vpop.permute.xlu0 %2329
      %2331 = vrot.lane.b32.xlu0 %v2245, 4
      %v2332 = vpop.permute.xlu0 %2331
      %2333 = vrot.lane.b32.xlu0 %v2247, 4
      %v2334 = vpop.permute.xlu0 %2333
      %2335 = vrot.lane.b32.xlu0 %v2250, 4
      %v2336 = vpop.permute.xlu0 %2335
      %2337 = vrot.lane.b32.xlu0 %v2252, 4
      %v2338 = vpop.permute.xlu0 %2337
      %2339 = vrot.lane.b32.xlu0 %v2255, 4
      %v2340 = vpop.permute.xlu0 %2339
      %2341 = vrot.lane.b32.xlu0 %v2257, 4
      %v2342 = vpop.permute.xlu0 %2341
      %2343 = vrot.lane.b32.xlu0 %v2260, 4
      %v2344 = vpop.permute.xlu0 %2343
      %2345 = vrot.lane.b32.xlu0 %v2262, 4
      %v2346 = vpop.permute.xlu0 %2345
      %2347 = vrot.lane.b32.xlu0 %v2265, 4
      %v2348 = vpop.permute.xlu0 %2347
      %2349 = vrot.lane.b32.xlu0 %v2267, 4
      %v2350 = vpop.permute.xlu0 %2349
      %2351 = vrot.lane.b32.xlu0 %v2270, 4
      %v2352 = vpop.permute.xlu0 %2351
      %2353 = vrot.lane.b32.xlu0 %v2272, 4
      %v2354 = vpop.permute.xlu0 %2353
      %2355 = vrot.lane.b32.xlu0 %v2275, 4
      %v2356 = vpop.permute.xlu0 %2355
      %2357 = vrot.lane.b32.xlu0 %v2277, 4
      %v2358 = vpop.permute.xlu0 %2357
      %2359 = vrot.lane.b32.xlu0 %v2280, 4
      %v2360 = vpop.permute.xlu0 %2359
      %2361 = vrot.lane.b32.xlu0 %v2282, 4
      %v2362 = vpop.permute.xlu0 %2361
      %2363 = vrot.lane.b32.xlu0 %v2285, 4
      %v2364 = vpop.permute.xlu0 %2363
      %2365 = vrot.lane.b32.xlu0 %v2287, 4
      %v2366 = vpop.permute.xlu0 %2365
      %2367 = vrot.lane.b32.xlu0 %v2290, 4
      %v2368 = vpop.permute.xlu0 %2367
      %2369 = vrot.lane.b32.xlu0 %v2292, 4
      %v2370 = vpop.permute.xlu0 %2369
      %2371 = vrot.lane.b32.xlu0 %v2295, 4
      %v2372 = vpop.permute.xlu0 %2371
      %2373 = vrot.lane.b32.xlu0 %v2297, 4
      %v2374 = vpop.permute.xlu0 %2373
      %2375 = vrot.lane.b32.xlu0 %v2300, 4
      %v2376 = vpop.permute.xlu0 %2375
      %2377 = vrot.lane.b32.xlu0 %v2302, 4
      %v2378 = vpop.permute.xlu0 %2377
      %2379 = vrot.lane.b32.xlu0 %v2305, 4
      %v2380 = vpop.permute.xlu0 %2379
      %2381 = vrot.lane.b32.xlu0 %v2307, 4
      %v2382 = vpop.permute.xlu0 %2381
      %2383 = vrot.lane.b32.xlu0 %v2310, 4
      %v2384 = vpop.permute.xlu0 %2383
      %2385 = vrot.lane.b32.xlu0 %v2312, 4
      %v2386 = vpop.permute.xlu0 %2385
      %2387 = vrot.lane.b32.xlu0 %v2315, 4
      %v2388 = vpop.permute.xlu0 %2387
      %2389 = vrot.lane.b32.xlu0 %v2317, 4
      %v2390 = vpop.permute.xlu0 %2389
      %2391 = vrot.lane.b32.xlu0 %v2320, 4
      %v2392 = vpop.permute.xlu0 %2391
      %2393 = vrot.lane.b32.xlu0 %v2322, 4
      %v2394 = vpop.permute.xlu0 %2393
      %v2431 = vrot.slane %v2125, 2
      %v2432 = vrot.slane %v2126, 2
      %v2433 = vsel %vm730, %v2431, %v2432
      %v2434 = vrot.slane %v2127, 2
      %v2435 = vsel %vm730, %v2432, %v2434
      %v2436 = vrot.slane %v2128, 2
      %v2437 = vrot.slane %v2129, 2
      %v2438 = vsel %vm730, %v2436, %v2437
      %v2439 = vrot.slane %v2130, 2
      %v2440 = vsel %vm730, %v2437, %v2439
      %v2441 = vrot.slane %v2131, 2
      %v2442 = vrot.slane %v2132, 2
      %v2443 = vsel %vm730, %v2441, %v2442
      %v2444 = vrot.slane %v2133, 2
      %v2445 = vsel %vm730, %v2442, %v2444
      %v2446 = vrot.slane %v2134, 2
      %v2447 = vrot.slane %v2135, 2
      %v2448 = vsel %vm730, %v2446, %v2447
      %v2449 = vrot.slane %v2136, 2
      %v2450 = vsel %vm730, %v2447, %v2449
      %v2451 = vrot.slane %v2137, 2
      %v2452 = vrot.slane %v2138, 2
      %v2453 = vsel %vm730, %v2451, %v2452
      %v2454 = vrot.slane %v2139, 2
      %v2455 = vsel %vm730, %v2452, %v2454
      %v2456 = vrot.slane %v2140, 2
      %v2457 = vrot.slane %v2141, 2
      %v2458 = vsel %vm730, %v2456, %v2457
      %v2459 = vrot.slane %v2142, 2
      %v2460 = vsel %vm730, %v2457, %v2459
      %v2461 = vrot.slane %v2143, 2
      %v2462 = vrot.slane %v2144, 2
      %v2463 = vsel %vm730, %v2461, %v2462
      %v2464 = vrot.slane %v2145, 2
      %v2465 = vsel %vm730, %v2462, %v2464
      %v2466 = vrot.slane %v2146, 2
      %v2467 = vrot.slane %v2147, 2
      %v2468 = vsel %vm730, %v2466, %v2467
      %v2469 = vrot.slane %v2148, 2
      %v2470 = vsel %vm730, %v2467, %v2469
      %v2471 = vrot.slane %v2149, 2
      %v2472 = vrot.slane %v2150, 2
      %v2473 = vsel %vm730, %v2471, %v2472
      %v2474 = vrot.slane %v2151, 2
      %v2475 = vsel %vm730, %v2472, %v2474
      %v2476 = vrot.slane %v2152, 2
      %v2477 = vrot.slane %v2153, 2
      %v2478 = vsel %vm730, %v2476, %v2477
      %v2479 = vrot.slane %v2154, 2
      %v2480 = vsel %vm730, %v2477, %v2479
      %v2481 = vrot.slane %v2155, 2
      %v2482 = vrot.slane %v2156, 2
      %v2483 = vsel %vm730, %v2481, %v2482
      %v2484 = vrot.slane %v2157, 2
      %v2485 = vsel %vm730, %v2482, %v2484
      %v2486 = vrot.slane %v2158, 2
      %v2487 = vrot.slane %v2159, 2
      %v2488 = vsel %vm730, %v2486, %v2487
      %v2489 = vrot.slane %v2160, 2
      %v2490 = vsel %vm730, %v2487, %v2489
      %v2491 = vrot.slane %v2161, 2
      %v2492 = vrot.slane %v2162, 2
      %v2493 = vsel %vm730, %v2491, %v2492
      %v2494 = vrot.slane %v2163, 2
      %v2495 = vsel %vm730, %v2492, %v2494
      %v2496 = vrot.slane %v2164, 2
      %v2497 = vrot.slane %v2165, 2
      %v2498 = vsel %vm730, %v2496, %v2497
      %v2499 = vrot.slane %v2166, 2
      %v2500 = vsel %vm730, %v2497, %v2499
      %v2501 = vrot.slane %v2167, 2
      %v2502 = vrot.slane %v2168, 2
      %v2503 = vsel %vm730, %v2501, %v2502
      %v2504 = vrot.slane %v2169, 2
      %v2505 = vsel %vm730, %v2502, %v2504
      %v2506 = vrot.slane %v2170, 2
      %v2507 = vrot.slane %v2171, 2
      %v2508 = vsel %vm730, %v2506, %v2507
      %v2509 = vrot.slane %v2172, 2
      %v2510 = vsel %vm730, %v2507, %v2509
      %v2511 = vrot.slane %v2173, 2
      %v2512 = vrot.slane %v2174, 2
      %v2513 = vsel %vm730, %v2511, %v2512
      %v2514 = vrot.slane %v2175, 2
      %v2515 = vsel %vm730, %v2512, %v2514
      %v2516 = vrot.slane %v2176, 2
      %v2517 = vrot.slane %v2177, 2
      %v2518 = vsel %vm730, %v2516, %v2517
      %v2519 = vrot.slane %v2178, 2
      %v2520 = vsel %vm730, %v2517, %v2519
      %2521 = vrot.lane.b32.xlu0 %v2433, 8
      %v2522 = vpop.permute.xlu0 %2521
      %2523 = vrot.lane.b32.xlu0 %v2435, 8
      %v2524 = vpop.permute.xlu0 %2523
      %2525 = vrot.lane.b32.xlu0 %v2438, 8
      %v2526 = vpop.permute.xlu0 %2525
      %2527 = vrot.lane.b32.xlu0 %v2440, 8
      %v2528 = vpop.permute.xlu0 %2527
      %2529 = vrot.lane.b32.xlu0 %v2443, 8
      %v2530 = vpop.permute.xlu0 %2529
      %2531 = vrot.lane.b32.xlu0 %v2445, 8
      %v2532 = vpop.permute.xlu0 %2531
      %2533 = vrot.lane.b32.xlu0 %v2448, 8
      %v2534 = vpop.permute.xlu0 %2533
      %2535 = vrot.lane.b32.xlu0 %v2450, 8
      %v2536 = vpop.permute.xlu0 %2535
      %2537 = vrot.lane.b32.xlu0 %v2453, 8
      %v2538 = vpop.permute.xlu0 %2537
      %2539 = vrot.lane.b32.xlu0 %v2455, 8
      %v2540 = vpop.permute.xlu0 %2539
      %2541 = vrot.lane.b32.xlu0 %v2458, 8
      %v2542 = vpop.permute.xlu0 %2541
      %2543 = vrot.lane.b32.xlu0 %v2460, 8
      %v2544 = vpop.permute.xlu0 %2543
      %2545 = vrot.lane.b32.xlu0 %v2463, 8
      %v2546 = vpop.permute.xlu0 %2545
      %2547 = vrot.lane.b32.xlu0 %v2465, 8
      %v2548 = vpop.permute.xlu0 %2547
      %2549 = vrot.lane.b32.xlu0 %v2468, 8
      %v2550 = vpop.permute.xlu0 %2549
      %2551 = vrot.lane.b32.xlu0 %v2470, 8
      %v2552 = vpop.permute.xlu0 %2551
      %2553 = vrot.lane.b32.xlu0 %v2473, 8
      %v2554 = vpop.permute.xlu0 %2553
      %2555 = vrot.lane.b32.xlu0 %v2475, 8
      %v2556 = vpop.permute.xlu0 %2555
      %2557 = vrot.lane.b32.xlu0 %v2478, 8
      %v2558 = vpop.permute.xlu0 %2557
      %2559 = vrot.lane.b32.xlu0 %v2480, 8
      %v2560 = vpop.permute.xlu0 %2559
      %2561 = vrot.lane.b32.xlu0 %v2483, 8
      %v2562 = vpop.permute.xlu0 %2561
      %2563 = vrot.lane.b32.xlu0 %v2485, 8
      %v2564 = vpop.permute.xlu0 %2563
      %2565 = vrot.lane.b32.xlu0 %v2488, 8
      %v2566 = vpop.permute.xlu0 %2565
      %2567 = vrot.lane.b32.xlu0 %v2490, 8
      %v2568 = vpop.permute.xlu0 %2567
      %2569 = vrot.lane.b32.xlu0 %v2493, 8
      %v2570 = vpop.permute.xlu0 %2569
      %2571 = vrot.lane.b32.xlu0 %v2495, 8
      %v2572 = vpop.permute.xlu0 %2571
      %2573 = vrot.lane.b32.xlu0 %v2498, 8
      %v2574 = vpop.permute.xlu0 %2573
      %2575 = vrot.lane.b32.xlu0 %v2500, 8
      %v2576 = vpop.permute.xlu0 %2575
      %2577 = vrot.lane.b32.xlu0 %v2503, 8
      %v2578 = vpop.permute.xlu0 %2577
      %2579 = vrot.lane.b32.xlu0 %v2505, 8
      %v2580 = vpop.permute.xlu0 %2579
      %2581 = vrot.lane.b32.xlu0 %v2508, 8
      %v2582 = vpop.permute.xlu0 %2581
      %2583 = vrot.lane.b32.xlu0 %v2510, 8
      %v2584 = vpop.permute.xlu0 %2583
      %2585 = vrot.lane.b32.xlu0 %v2513, 8
      %v2586 = vpop.permute.xlu0 %2585
      %2587 = vrot.lane.b32.xlu0 %v2515, 8
      %v2588 = vpop.permute.xlu0 %2587
      %2589 = vrot.lane.b32.xlu0 %v2518, 8
      %v2590 = vpop.permute.xlu0 %2589
      %2591 = vrot.lane.b32.xlu0 %v2520, 8
      %v2592 = vpop.permute.xlu0 %2591
      %v2629 = vsel %vm312, %v2125, %v2324
      %v2630 = vsel %vm312, %v2126, %v2326
      %v2631 = vsel %vm312, %v2128, %v2328
      %v2632 = vsel %vm312, %v2129, %v2330
      %v2633 = vsel %vm312, %v2131, %v2332
      %v2634 = vsel %vm312, %v2132, %v2334
      %v2635 = vsel %vm312, %v2134, %v2336
      %v2636 = vsel %vm312, %v2135, %v2338
      %v2637 = vsel %vm312, %v2137, %v2340
      %v2638 = vsel %vm312, %v2138, %v2342
      %v2639 = vsel %vm312, %v2140, %v2344
      %v2640 = vsel %vm312, %v2141, %v2346
      %v2641 = vsel %vm312, %v2143, %v2348
      %v2642 = vsel %vm312, %v2144, %v2350
      %v2643 = vsel %vm312, %v2146, %v2352
      %v2644 = vsel %vm312, %v2147, %v2354
      %v2645 = vsel %vm312, %v2149, %v2356
      %v2646 = vsel %vm312, %v2150, %v2358
      %v2647 = vsel %vm312, %v2152, %v2360
      %v2648 = vsel %vm312, %v2153, %v2362
      %v2649 = vsel %vm312, %v2155, %v2364
      %v2650 = vsel %vm312, %v2156, %v2366
      %v2651 = vsel %vm312, %v2158, %v2368
      %v2652 = vsel %vm312, %v2159, %v2370
      %v2653 = vsel %vm312, %v2161, %v2372
      %v2654 = vsel %vm312, %v2162, %v2374
      %v2655 = vsel %vm312, %v2164, %v2376
      %v2656 = vsel %vm312, %v2165, %v2378
      %v2657 = vsel %vm312, %v2167, %v2380
      %v2658 = vsel %vm312, %v2168, %v2382
      %v2659 = vsel %vm312, %v2170, %v2384
      %v2660 = vsel %vm312, %v2171, %v2386
      %v2661 = vsel %vm312, %v2173, %v2388
      %v2662 = vsel %vm312, %v2174, %v2390
      %v2663 = vsel %vm312, %v2176, %v2392
      %v2664 = vsel %vm312, %v2177, %v2394
      %v2665 = vsel %vm965, %v2629, %v2522
      %v2666 = vsel %vm965, %v2630, %v2524
      %v2667 = vsel %vm965, %v2631, %v2526
      %v2668 = vsel %vm965, %v2632, %v2528
      %v2669 = vsel %vm965, %v2633, %v2530
      %v2670 = vsel %vm965, %v2634, %v2532
      %v2671 = vsel %vm965, %v2635, %v2534
      %v2672 = vsel %vm965, %v2636, %v2536
      %v2673 = vsel %vm965, %v2637, %v2538
      %v2674 = vsel %vm965, %v2638, %v2540
      %v2675 = vsel %vm965, %v2639, %v2542
      %v2676 = vsel %vm965, %v2640, %v2544
      %v2677 = vsel %vm965, %v2641, %v2546
      %v2678 = vsel %vm965, %v2642, %v2548
      %v2679 = vsel %vm965, %v2643, %v2550
      %v2680 = vsel %vm965, %v2644, %v2552
      %v2681 = vsel %vm965, %v2645, %v2554
      %v2682 = vsel %vm965, %v2646, %v2556
      %v2683 = vsel %vm965, %v2647, %v2558
      %v2684 = vsel %vm965, %v2648, %v2560
      %v2685 = vsel %vm965, %v2649, %v2562
      %v2686 = vsel %vm965, %v2650, %v2564
      %v2687 = vsel %vm965, %v2651, %v2566
      %v2688 = vsel %vm965, %v2652, %v2568
      %v2689 = vsel %vm965, %v2653, %v2570
      %v2690 = vsel %vm965, %v2654, %v2572
      %v2691 = vsel %vm965, %v2655, %v2574
      %v2692 = vsel %vm965, %v2656, %v2576
      %v2693 = vsel %vm965, %v2657, %v2578
      %v2694 = vsel %vm965, %v2658, %v2580
      %v2695 = vsel %vm965, %v2659, %v2582
      %v2696 = vsel %vm965, %v2660, %v2584
      %v2697 = vsel %vm965, %v2661, %v2586
      %v2698 = vsel %vm965, %v2662, %v2588
      %v2699 = vsel %vm965, %v2663, %v2590
      %v2700 = vsel %vm965, %v2664, %v2592
      %v2701 = vld [vmem:[%s4] sm:$0xff]
      %v2702 = vld [vmem:[%s4 + $0x8] sm:$0xf]
      %v2704 = vsel %vm1004, %v2665, 0
      %v2707 = vsel %vm1004, %v2666, 0
      %v2710 = vsel %vm1004, %v2667, 0
      %v2713 = vsel %vm1004, %v2668, 0
      %v2716 = vsel %vm1004, %v2669, 0
      %v2719 = vsel %vm1004, %v2670, 0
      %v2722 = vsel %vm1004, %v2671, 0
      %v2725 = vsel %vm1004, %v2672, 0
      %v2728 = vsel %vm1004, %v2673, 0
      %v2731 = vsel %vm1004, %v2674, 0
      %v2734 = vsel %vm1004, %v2675, 0
      %v2737 = vsel %vm1004, %v2676, 0
      %v2740 = vsel %vm1004, %v2677, 0
      %v2743 = vsel %vm1004, %v2678, 0
      %v2746 = vsel %vm1004, %v2679, 0
      %v2749 = vsel %vm1004, %v2680, 0
      %v2752 = vsel %vm1004, %v2681, 0
      %v2755 = vsel %vm1004, %v2682, 0
      %v2758 = vsel %vm1004, %v2683, 0
      %v2761 = vsel %vm1004, %v2684, 0
      %v2764 = vsel %vm1004, %v2685, 0
      %v2767 = vsel %vm1004, %v2686, 0
      %v2770 = vsel %vm1004, %v2687, 0
      %v2773 = vsel %vm1004, %v2688, 0
      %v2776 = vsel %vm1004, %v2689, 0
      %v2779 = vsel %vm1004, %v2690, 0
      %v2782 = vsel %vm1004, %v2691, 0
      %v2785 = vsel %vm1004, %v2692, 0
      %v2788 = vsel %vm1004, %v2693, 0
      %v2791 = vsel %vm1004, %v2694, 0
      %v2794 = vsel %vm1004, %v2695, 0
      %v2797 = vsel %vm1004, %v2696, 0
      %v2800 = vsel %vm1101, %v2702, 0
      %2802 = vmatpush.msra.mxu0 0.0
      %2803 = vmatpush.msra.mxu0 0.0
      %2804 = vmatpush.msra.mxu0 0.0
      %2805 = vmatpush.msra.mxu0 0.0
      %2806 = vmatpush.msra.mxu0 0.0
      %2807 = vmatpush.msra.mxu0 0.0
      %2808 = vmatpush.msra.mxu0 0.0
      %2809 = vmatpush.msra.mxu0 0.0
      %2810 = vmatpush.msra.mxu0 0.0
      %2811 = vmatpush.msra.mxu0 0.0
      %2812 = vmatpush.msra.mxu0 0.0
      %2813 = vmatpush.msra.mxu0 0.0
      %2814 = vmatpush.msra.mxu0 0.0
      %2815 = vmatpush.msra.mxu0 0.0
      %2816 = vmatpush.msra.mxu0 %v2800
      %2817 = vmatpush.msra.mxu0 %v2701
      %2818 = vmatmul.f32.gmra.mxu0 %v2704
      %v2819 = vpop.f32.mrf.mxu0
      %v2820 = vadd.f32 0.0, %v2819
      %2821 = vmatmul.f32.gmra.mxu0 %v2707
      %v2822 = vpop.f32.mrf.mxu0
      %v2823 = vadd.f32 0.0, %v2822
      %2824 = vmatmul.f32.gmra.mxu0 %v2710
      %v2825 = vpop.f32.mrf.mxu0
      %v2826 = vadd.f32 0.0, %v2825
      %2827 = vmatmul.f32.gmra.mxu0 %v2713
      %v2828 = vpop.f32.mrf.mxu0
      %v2829 = vadd.f32 0.0, %v2828
      %2830 = vmatmul.f32.gmra.mxu0 %v2716
      %v2831 = vpop.f32.mrf.mxu0
      %v2832 = vadd.f32 0.0, %v2831
      %2833 = vmatmul.f32.gmra.mxu0 %v2719
      %v2834 = vpop.f32.mrf.mxu0
      %v2835 = vadd.f32 0.0, %v2834
      %2836 = vmatmul.f32.gmra.mxu0 %v2722
      %v2837 = vpop.f32.mrf.mxu0
      %v2838 = vadd.f32 0.0, %v2837
      %2839 = vmatmul.f32.gmra.mxu0 %v2725
      %v2840 = vpop.f32.mrf.mxu0
      %v2841 = vadd.f32 0.0, %v2840
      %2842 = vmatmul.f32.gmra.mxu0 %v2728
      %v2843 = vpop.f32.mrf.mxu0
      %v2844 = vadd.f32 0.0, %v2843
      %2845 = vmatmul.f32.gmra.mxu0 %v2731
      %v2846 = vpop.f32.mrf.mxu0
      %v2847 = vadd.f32 0.0, %v2846
      %2848 = vmatmul.f32.gmra.mxu0 %v2734
      %v2849 = vpop.f32.mrf.mxu0
      %v2850 = vadd.f32 0.0, %v2849
      %2851 = vmatmul.f32.gmra.mxu0 %v2737
      %v2852 = vpop.f32.mrf.mxu0
      %v2853 = vadd.f32 0.0, %v2852
      %2854 = vmatmul.f32.gmra.mxu0 %v2740
      %v2855 = vpop.f32.mrf.mxu0
      %v2856 = vadd.f32 0.0, %v2855
      %2857 = vmatmul.f32.gmra.mxu0 %v2743
      %v2858 = vpop.f32.mrf.mxu0
      %v2859 = vadd.f32 0.0, %v2858
      %2860 = vmatmul.f32.gmra.mxu0 %v2746
      %v2861 = vpop.f32.mrf.mxu0
      %v2862 = vadd.f32 0.0, %v2861
      %2863 = vmatmul.f32.gmra.mxu0 %v2749
      %v2864 = vpop.f32.mrf.mxu0
      %v2865 = vadd.f32 0.0, %v2864
      %2866 = vmatmul.f32.gmra.mxu0 %v2752
      %v2867 = vpop.f32.mrf.mxu0
      %v2868 = vadd.f32 0.0, %v2867
      %2869 = vmatmul.f32.gmra.mxu0 %v2755
      %v2870 = vpop.f32.mrf.mxu0
      %v2871 = vadd.f32 0.0, %v2870
      %2872 = vmatmul.f32.gmra.mxu0 %v2758
      %v2873 = vpop.f32.mrf.mxu0
      %v2874 = vadd.f32 0.0, %v2873
      %2875 = vmatmul.f32.gmra.mxu0 %v2761
      %v2876 = vpop.f32.mrf.mxu0
      %v2877 = vadd.f32 0.0, %v2876
      %2878 = vmatmul.f32.gmra.mxu0 %v2764
      %v2879 = vpop.f32.mrf.mxu0
      %v2880 = vadd.f32 0.0, %v2879
      %2881 = vmatmul.f32.gmra.mxu0 %v2767
      %v2882 = vpop.f32.mrf.mxu0
      %v2883 = vadd.f32 0.0, %v2882
      %2884 = vmatmul.f32.gmra.mxu0 %v2770
      %v2885 = vpop.f32.mrf.mxu0
      %v2886 = vadd.f32 0.0, %v2885
      %2887 = vmatmul.f32.gmra.mxu0 %v2773
      %v2888 = vpop.f32.mrf.mxu0
      %v2889 = vadd.f32 0.0, %v2888
      %2890 = vmatmul.f32.gmra.mxu0 %v2776
      %v2891 = vpop.f32.mrf.mxu0
      %v2892 = vadd.f32 0.0, %v2891
      %2893 = vmatmul.f32.gmra.mxu0 %v2779
      %v2894 = vpop.f32.mrf.mxu0
      %v2895 = vadd.f32 0.0, %v2894
      %2896 = vmatmul.f32.gmra.mxu0 %v2782
      %v2897 = vpop.f32.mrf.mxu0
      %v2898 = vadd.f32 0.0, %v2897
      %2899 = vmatmul.f32.gmra.mxu0 %v2785
      %v2900 = vpop.f32.mrf.mxu0
      %v2901 = vadd.f32 0.0, %v2900
      %2902 = vmatmul.f32.gmra.mxu0 %v2788
      %v2903 = vpop.f32.mrf.mxu0
      %v2904 = vadd.f32 0.0, %v2903
      %2905 = vmatmul.f32.gmra.mxu0 %v2791
      %v2906 = vpop.f32.mrf.mxu0
      %v2907 = vadd.f32 0.0, %v2906
      %2908 = vmatmul.f32.gmra.mxu0 %v2794
      %v2909 = vpop.f32.mrf.mxu0
      %v2910 = vadd.f32 0.0, %v2909
      %2911 = vmatmul.f32.gmra.mxu0 %v2797
      %v2912 = vpop.f32.mrf.mxu0
      %v2913 = vadd.f32 0.0, %v2912
      %2914 = vdwg.mxu0
      %2915 = vst.msk [vmem:[#allocation3] sm:$0xff] %vm312, %v2820
      %2916 = vst.msk [vmem:[#allocation3 + $0x8] sm:$0xff] %vm312, %v2823
      %2917 = vst.msk [vmem:[#allocation3 + $0x10] sm:$0xff] %vm312, %v2826
      %2918 = vst.msk [vmem:[#allocation3 + $0x18] sm:$0xff] %vm312, %v2829
      %2919 = vst.msk [vmem:[#allocation3 + $0x20] sm:$0xff] %vm312, %v2832
      %2920 = vst.msk [vmem:[#allocation3 + $0x28] sm:$0xff] %vm312, %v2835
      %2921 = vst.msk [vmem:[#allocation3 + $0x30] sm:$0xff] %vm312, %v2838
      %2922 = vst.msk [vmem:[#allocation3 + $0x38] sm:$0xff] %vm312, %v2841
      %2923 = vst.msk [vmem:[#allocation3 + $0x40] sm:$0xff] %vm312, %v2844
      %2924 = vst.msk [vmem:[#allocation3 + $0x48] sm:$0xff] %vm312, %v2847
      %2925 = vst.msk [vmem:[#allocation3 + $0x50] sm:$0xff] %vm312, %v2850
      %2926 = vst.msk [vmem:[#allocation3 + $0x58] sm:$0xff] %vm312, %v2853
      %2927 = vst.msk [vmem:[#allocation3 + $0x60] sm:$0xff] %vm312, %v2856
      %2928 = vst.msk [vmem:[#allocation3 + $0x68] sm:$0xff] %vm312, %v2859
      %2929 = vst.msk [vmem:[#allocation3 + $0x70] sm:$0xff] %vm312, %v2862
      %2930 = vst.msk [vmem:[#allocation3 + $0x78] sm:$0xff] %vm312, %v2865
      %2931 = vst.msk [vmem:[#allocation3 + $0x80] sm:$0xff] %vm312, %v2868
      %2932 = vst.msk [vmem:[#allocation3 + $0x88] sm:$0xff] %vm312, %v2871
      %2933 = vst.msk [vmem:[#allocation3 + $0x90] sm:$0xff] %vm312, %v2874
      %2934 = vst.msk [vmem:[#allocation3 + $0x98] sm:$0xff] %vm312, %v2877
      %2935 = vst.msk [vmem:[#allocation3 + $0xa0] sm:$0xff] %vm312, %v2880
      %2936 = vst.msk [vmem:[#allocation3 + $0xa8] sm:$0xff] %vm312, %v2883
      %2937 = vst.msk [vmem:[#allocation3 + $0xb0] sm:$0xff] %vm312, %v2886
      %2938 = vst.msk [vmem:[#allocation3 + $0xb8] sm:$0xff] %vm312, %v2889
      %2939 = vst.msk [vmem:[#allocation3 + $0xc0] sm:$0xff] %vm312, %v2892
      %2940 = vst.msk [vmem:[#allocation3 + $0xc8] sm:$0xff] %vm312, %v2895
      %2941 = vst.msk [vmem:[#allocation3 + $0xd0] sm:$0xff] %vm312, %v2898
      %2942 = vst.msk [vmem:[#allocation3 + $0xd8] sm:$0xff] %vm312, %v2901
      %2943 = vst.msk [vmem:[#allocation3 + $0xe0] sm:$0xff] %vm312, %v2904
      %2944 = vst.msk [vmem:[#allocation3 + $0xe8] sm:$0xff] %vm312, %v2907
      %2945 = vst.msk [vmem:[#allocation3 + $0xf0] sm:$0xff] %vm312, %v2910
      %2946 = vst.msk [vmem:[#allocation3 + $0xf8] sm:$0xff] %vm312, %v2913
      %s2947 = scalar_lea.vmem %s4, 16
      %v2948 = vld [vmem:[%s2947] sm:$0xff]
      %v2949 = vld [vmem:[%s2947 + $0x8] sm:$0xf]
      %v2951 = vsel %vm1004, %v2697, 0
      %v2954 = vsel %vm1004, %v2698, 0
      %v2957 = vsel %vm1101, %v2949, 0
      %2959 = vmatpush.msra.mxu0 0.0
      %2960 = vmatpush.msra.mxu0 0.0
      %2961 = vmatpush.msra.mxu0 0.0
      %2962 = vmatpush.msra.mxu0 0.0
      %2963 = vmatpush.msra.mxu0 0.0
      %2964 = vmatpush.msra.mxu0 0.0
      %2965 = vmatpush.msra.mxu0 0.0
      %2966 = vmatpush.msra.mxu0 0.0
      %2967 = vmatpush.msra.mxu0 0.0
      %2968 = vmatpush.msra.mxu0 0.0
      %2969 = vmatpush.msra.mxu0 0.0
      %2970 = vmatpush.msra.mxu0 0.0
      %2971 = vmatpush.msra.mxu0 0.0
      %2972 = vmatpush.msra.mxu0 0.0
      %2973 = vmatpush.msra.mxu0 %v2957
      %2974 = vmatpush.msra.mxu0 %v2948
      %2975 = vmatmul.f32.gmra.mxu0 %v2710
      %v2976 = vpop.f32.mrf.mxu0
      %v2977 = vadd.f32 0.0, %v2976
      %2978 = vmatmul.f32.gmra.mxu0 %v2713
      %v2979 = vpop.f32.mrf.mxu0
      %v2980 = vadd.f32 0.0, %v2979
      %2981 = vmatmul.f32.gmra.mxu0 %v2716
      %v2982 = vpop.f32.mrf.mxu0
      %v2983 = vadd.f32 0.0, %v2982
      %2984 = vmatmul.f32.gmra.mxu0 %v2719
      %v2985 = vpop.f32.mrf.mxu0
      %v2986 = vadd.f32 0.0, %v2985
      %2987 = vmatmul.f32.gmra.mxu0 %v2722
      %v2988 = vpop.f32.mrf.mxu0
      %v2989 = vadd.f32 0.0, %v2988
      %2990 = vmatmul.f32.gmra.mxu0 %v2725
      %v2991 = vpop.f32.mrf.mxu0
      %v2992 = vadd.f32 0.0, %v2991
      %2993 = vmatmul.f32.gmra.mxu0 %v2728
      %v2994 = vpop.f32.mrf.mxu0
      %v2995 = vadd.f32 0.0, %v2994
      %2996 = vmatmul.f32.gmra.mxu0 %v2731
      %v2997 = vpop.f32.mrf.mxu0
      %v2998 = vadd.f32 0.0, %v2997
      %2999 = vmatmul.f32.gmra.mxu0 %v2734
      %v3000 = vpop.f32.mrf.mxu0
      %v3001 = vadd.f32 0.0, %v3000
      %3002 = vmatmul.f32.gmra.mxu0 %v2737
      %v3003 = vpop.f32.mrf.mxu0
      %v3004 = vadd.f32 0.0, %v3003
      %3005 = vmatmul.f32.gmra.mxu0 %v2740
      %v3006 = vpop.f32.mrf.mxu0
      %v3007 = vadd.f32 0.0, %v3006
      %3008 = vmatmul.f32.gmra.mxu0 %v2743
      %v3009 = vpop.f32.mrf.mxu0
      %v3010 = vadd.f32 0.0, %v3009
      %3011 = vmatmul.f32.gmra.mxu0 %v2746
      %v3012 = vpop.f32.mrf.mxu0
      %v3013 = vadd.f32 0.0, %v3012
      %3014 = vmatmul.f32.gmra.mxu0 %v2749
      %v3015 = vpop.f32.mrf.mxu0
      %v3016 = vadd.f32 0.0, %v3015
      %3017 = vmatmul.f32.gmra.mxu0 %v2752
      %v3018 = vpop.f32.mrf.mxu0
      %v3019 = vadd.f32 0.0, %v3018
      %3020 = vmatmul.f32.gmra.mxu0 %v2755
      %v3021 = vpop.f32.mrf.mxu0
      %v3022 = vadd.f32 0.0, %v3021
      %3023 = vmatmul.f32.gmra.mxu0 %v2758
      %v3024 = vpop.f32.mrf.mxu0
      %v3025 = vadd.f32 0.0, %v3024
      %3026 = vmatmul.f32.gmra.mxu0 %v2761
      %v3027 = vpop.f32.mrf.mxu0
      %v3028 = vadd.f32 0.0, %v3027
      %3029 = vmatmul.f32.gmra.mxu0 %v2764
      %v3030 = vpop.f32.mrf.mxu0
      %v3031 = vadd.f32 0.0, %v3030
      %3032 = vmatmul.f32.gmra.mxu0 %v2767
      %v3033 = vpop.f32.mrf.mxu0
      %v3034 = vadd.f32 0.0, %v3033
      %3035 = vmatmul.f32.gmra.mxu0 %v2770
      %v3036 = vpop.f32.mrf.mxu0
      %v3037 = vadd.f32 0.0, %v3036
      %3038 = vmatmul.f32.gmra.mxu0 %v2773
      %v3039 = vpop.f32.mrf.mxu0
      %v3040 = vadd.f32 0.0, %v3039
      %3041 = vmatmul.f32.gmra.mxu0 %v2776
      %v3042 = vpop.f32.mrf.mxu0
      %v3043 = vadd.f32 0.0, %v3042
      %3044 = vmatmul.f32.gmra.mxu0 %v2779
      %v3045 = vpop.f32.mrf.mxu0
      %v3046 = vadd.f32 0.0, %v3045
      %3047 = vmatmul.f32.gmra.mxu0 %v2782
      %v3048 = vpop.f32.mrf.mxu0
      %v3049 = vadd.f32 0.0, %v3048
      %3050 = vmatmul.f32.gmra.mxu0 %v2785
      %v3051 = vpop.f32.mrf.mxu0
      %v3052 = vadd.f32 0.0, %v3051
      %3053 = vmatmul.f32.gmra.mxu0 %v2788
      %v3054 = vpop.f32.mrf.mxu0
      %v3055 = vadd.f32 0.0, %v3054
      %3056 = vmatmul.f32.gmra.mxu0 %v2791
      %v3057 = vpop.f32.mrf.mxu0
      %v3058 = vadd.f32 0.0, %v3057
      %3059 = vmatmul.f32.gmra.mxu0 %v2794
      %v3060 = vpop.f32.mrf.mxu0
      %v3061 = vadd.f32 0.0, %v3060
      %3062 = vmatmul.f32.gmra.mxu0 %v2797
      %v3063 = vpop.f32.mrf.mxu0
      %v3064 = vadd.f32 0.0, %v3063
      %3065 = vmatmul.f32.gmra.mxu0 %v2951
      %v3066 = vpop.f32.mrf.mxu0
      %v3067 = vadd.f32 0.0, %v3066
      %3068 = vmatmul.f32.gmra.mxu0 %v2954
      %v3069 = vpop.f32.mrf.mxu0
      %v3070 = vadd.f32 0.0, %v3069
      %3071 = vdwg.mxu0
      %v3072 = vld [vmem:[#allocation3] sm:$0xff]
      %v3073 = vld [vmem:[#allocation3 + $0x8] sm:$0xff]
      %v3074 = vld [vmem:[#allocation3 + $0x10] sm:$0xff]
      %v3075 = vld [vmem:[#allocation3 + $0x18] sm:$0xff]
      %v3076 = vld [vmem:[#allocation3 + $0x20] sm:$0xff]
      %v3077 = vld [vmem:[#allocation3 + $0x28] sm:$0xff]
      %v3078 = vld [vmem:[#allocation3 + $0x30] sm:$0xff]
      %v3079 = vld [vmem:[#allocation3 + $0x38] sm:$0xff]
      %v3080 = vld [vmem:[#allocation3 + $0x40] sm:$0xff]
      %v3081 = vld [vmem:[#allocation3 + $0x48] sm:$0xff]
      %v3082 = vld [vmem:[#allocation3 + $0x50] sm:$0xff]
      %v3083 = vld [vmem:[#allocation3 + $0x58] sm:$0xff]
      %v3084 = vld [vmem:[#allocation3 + $0x60] sm:$0xff]
      %v3085 = vld [vmem:[#allocation3 + $0x68] sm:$0xff]
      %v3086 = vld [vmem:[#allocation3 + $0x70] sm:$0xff]
      %v3087 = vld [vmem:[#allocation3 + $0x78] sm:$0xff]
      %v3088 = vld [vmem:[#allocation3 + $0x80] sm:$0xff]
      %v3089 = vld [vmem:[#allocation3 + $0x88] sm:$0xff]
      %v3090 = vld [vmem:[#allocation3 + $0x90] sm:$0xff]
      %v3091 = vld [vmem:[#allocation3 + $0x98] sm:$0xff]
      %v3092 = vld [vmem:[#allocation3 + $0xa0] sm:$0xff]
      %v3093 = vld [vmem:[#allocation3 + $0xa8] sm:$0xff]
      %v3094 = vld [vmem:[#allocation3 + $0xb0] sm:$0xff]
      %v3095 = vld [vmem:[#allocation3 + $0xb8] sm:$0xff]
      %v3096 = vld [vmem:[#allocation3 + $0xc0] sm:$0xff]
      %v3097 = vld [vmem:[#allocation3 + $0xc8] sm:$0xff]
      %v3098 = vld [vmem:[#allocation3 + $0xd0] sm:$0xff]
      %v3099 = vld [vmem:[#allocation3 + $0xd8] sm:$0xff]
      %v3100 = vld [vmem:[#allocation3 + $0xe0] sm:$0xff]
      %v3101 = vld [vmem:[#allocation3 + $0xe8] sm:$0xff]
      %v3102 = vld [vmem:[#allocation3 + $0xf0] sm:$0xff]
      %v3103 = vld [vmem:[#allocation3 + $0xf8] sm:$0xff]
      %v3104 = vadd.f32 %v3072, %v2977
      %v3105 = vadd.f32 %v3073, %v2980
      %v3106 = vadd.f32 %v3074, %v2983
      %v3107 = vadd.f32 %v3075, %v2986
      %v3108 = vadd.f32 %v3076, %v2989
      %v3109 = vadd.f32 %v3077, %v2992
      %v3110 = vadd.f32 %v3078, %v2995
      %v3111 = vadd.f32 %v3079, %v2998
      %v3112 = vadd.f32 %v3080, %v3001
      %v3113 = vadd.f32 %v3081, %v3004
      %v3114 = vadd.f32 %v3082, %v3007
      %v3115 = vadd.f32 %v3083, %v3010
      %v3116 = vadd.f32 %v3084, %v3013
      %v3117 = vadd.f32 %v3085, %v3016
      %v3118 = vadd.f32 %v3086, %v3019
      %v3119 = vadd.f32 %v3087, %v3022
      %v3120 = vadd.f32 %v3088, %v3025
      %v3121 = vadd.f32 %v3089, %v3028
      %v3122 = vadd.f32 %v3090, %v3031
      %v3123 = vadd.f32 %v3091, %v3034
      %v3124 = vadd.f32 %v3092, %v3037
      %v3125 = vadd.f32 %v3093, %v3040
      %v3126 = vadd.f32 %v3094, %v3043
      %v3127 = vadd.f32 %v3095, %v3046
      %v3128 = vadd.f32 %v3096, %v3049
      %v3129 = vadd.f32 %v3097, %v3052
      %v3130 = vadd.f32 %v3098, %v3055
      %v3131 = vadd.f32 %v3099, %v3058
      %v3132 = vadd.f32 %v3100, %v3061
      %v3133 = vadd.f32 %v3101, %v3064
      %v3134 = vadd.f32 %v3102, %v3067
      %v3135 = vadd.f32 %v3103, %v3070
      %3136 = vst.msk [vmem:[#allocation3] sm:$0xff] %vm312, %v3104
      %3137 = vst.msk [vmem:[#allocation3 + $0x8] sm:$0xff] %vm312, %v3105
      %3138 = vst.msk [vmem:[#allocation3 + $0x10] sm:$0xff] %vm312, %v3106
      %3139 = vst.msk [vmem:[#allocation3 + $0x18] sm:$0xff] %vm312, %v3107
      %3140 = vst.msk [vmem:[#allocation3 + $0x20] sm:$0xff] %vm312, %v3108
      %3141 = vst.msk [vmem:[#allocation3 + $0x28] sm:$0xff] %vm312, %v3109
      %3142 = vst.msk [vmem:[#allocation3 + $0x30] sm:$0xff] %vm312, %v3110
      %3143 = vst.msk [vmem:[#allocation3 + $0x38] sm:$0xff] %vm312, %v3111
      %3144 = vst.msk [vmem:[#allocation3 + $0x40] sm:$0xff] %vm312, %v3112
      %3145 = vst.msk [vmem:[#allocation3 + $0x48] sm:$0xff] %vm312, %v3113
      %3146 = vst.msk [vmem:[#allocation3 + $0x50] sm:$0xff] %vm312, %v3114
      %3147 = vst.msk [vmem:[#allocation3 + $0x58] sm:$0xff] %vm312, %v3115
      %3148 = vst.msk [vmem:[#allocation3 + $0x60] sm:$0xff] %vm312, %v3116
      %3149 = vst.msk [vmem:[#allocation3 + $0x68] sm:$0xff] %vm312, %v3117
      %3150 = vst.msk [vmem:[#allocation3 + $0x70] sm:$0xff] %vm312, %v3118
      %3151 = vst.msk [vmem:[#allocation3 + $0x78] sm:$0xff] %vm312, %v3119
      %3152 = vst.msk [vmem:[#allocation3 + $0x80] sm:$0xff] %vm312, %v3120
      %3153 = vst.msk [vmem:[#allocation3 + $0x88] sm:$0xff] %vm312, %v3121
      %3154 = vst.msk [vmem:[#allocation3 + $0x90] sm:$0xff] %vm312, %v3122
      %3155 = vst.msk [vmem:[#allocation3 + $0x98] sm:$0xff] %vm312, %v3123
      %3156 = vst.msk [vmem:[#allocation3 + $0xa0] sm:$0xff] %vm312, %v3124
      %3157 = vst.msk [vmem:[#allocation3 + $0xa8] sm:$0xff] %vm312, %v3125
      %3158 = vst.msk [vmem:[#allocation3 + $0xb0] sm:$0xff] %vm312, %v3126
      %3159 = vst.msk [vmem:[#allocation3 + $0xb8] sm:$0xff] %vm312, %v3127
      %3160 = vst.msk [vmem:[#allocation3 + $0xc0] sm:$0xff] %vm312, %v3128
      %3161 = vst.msk [vmem:[#allocation3 + $0xc8] sm:$0xff] %vm312, %v3129
      %3162 = vst.msk [vmem:[#allocation3 + $0xd0] sm:$0xff] %vm312, %v3130
      %3163 = vst.msk [vmem:[#allocation3 + $0xd8] sm:$0xff] %vm312, %v3131
      %3164 = vst.msk [vmem:[#allocation3 + $0xe0] sm:$0xff] %vm312, %v3132
      %3165 = vst.msk [vmem:[#allocation3 + $0xe8] sm:$0xff] %vm312, %v3133
      %3166 = vst.msk [vmem:[#allocation3 + $0xf0] sm:$0xff] %vm312, %v3134
      %3167 = vst.msk [vmem:[#allocation3 + $0xf8] sm:$0xff] %vm312, %v3135
      %s3168 = scalar_lea.vmem %s4, 32
      %v3169 = vld [vmem:[%s3168] sm:$0xff]
      %v3170 = vld [vmem:[%s3168 + $0x8] sm:$0xf]
      %v3172 = vsel %vm1004, %v2699, 0
      %v3175 = vsel %vm1004, %v2700, 0
      %v3178 = vsel %vm1101, %v3170, 0
      %3180 = vmatpush.msra.mxu0 0.0
      %3181 = vmatpush.msra.mxu0 0.0
      %3182 = vmatpush.msra.mxu0 0.0
      %3183 = vmatpush.msra.mxu0 0.0
      %3184 = vmatpush.msra.mxu0 0.0
      %3185 = vmatpush.msra.mxu0 0.0
      %3186 = vmatpush.msra.mxu0 0.0
      %3187 = vmatpush.msra.mxu0 0.0
      %3188 = vmatpush.msra.mxu0 0.0
      %3189 = vmatpush.msra.mxu0 0.0
      %3190 = vmatpush.msra.mxu0 0.0
      %3191 = vmatpush.msra.mxu0 0.0
      %3192 = vmatpush.msra.mxu0 0.0
      %3193 = vmatpush.msra.mxu0 0.0
      %3194 = vmatpush.msra.mxu0 %v3178
      %3195 = vmatpush.msra.mxu0 %v3169
      %3196 = vmatmul.f32.gmra.mxu0 %v2716
      %v3197 = vpop.f32.mrf.mxu0
      %v3198 = vadd.f32 0.0, %v3197
      %3199 = vmatmul.f32.gmra.mxu0 %v2719
      %v3200 = vpop.f32.mrf.mxu0
      %v3201 = vadd.f32 0.0, %v3200
      %3202 = vmatmul.f32.gmra.mxu0 %v2722
      %v3203 = vpop.f32.mrf.mxu0
      %v3204 = vadd.f32 0.0, %v3203
      %3205 = vmatmul.f32.gmra.mxu0 %v2725
      %v3206 = vpop.f32.mrf.mxu0
      %v3207 = vadd.f32 0.0, %v3206
      %3208 = vmatmul.f32.gmra.mxu0 %v2728
      %v3209 = vpop.f32.mrf.mxu0
      %v3210 = vadd.f32 0.0, %v3209
      %3211 = vmatmul.f32.gmra.mxu0 %v2731
      %v3212 = vpop.f32.mrf.mxu0
      %v3213 = vadd.f32 0.0, %v3212
      %3214 = vmatmul.f32.gmra.mxu0 %v2734
      %v3215 = vpop.f32.mrf.mxu0
      %v3216 = vadd.f32 0.0, %v3215
      %3217 = vmatmul.f32.gmra.mxu0 %v2737
      %v3218 = vpop.f32.mrf.mxu0
      %v3219 = vadd.f32 0.0, %v3218
      %3220 = vmatmul.f32.gmra.mxu0 %v2740
      %v3221 = vpop.f32.mrf.mxu0
      %v3222 = vadd.f32 0.0, %v3221
      %3223 = vmatmul.f32.gmra.mxu0 %v2743
      %v3224 = vpop.f32.mrf.mxu0
      %v3225 = vadd.f32 0.0, %v3224
      %3226 = vmatmul.f32.gmra.mxu0 %v2746
      %v3227 = vpop.f32.mrf.mxu0
      %v3228 = vadd.f32 0.0, %v3227
      %3229 = vmatmul.f32.gmra.mxu0 %v2749
      %v3230 = vpop.f32.mrf.mxu0
      %v3231 = vadd.f32 0.0, %v3230
      %3232 = vmatmul.f32.gmra.mxu0 %v2752
      %v3233 = vpop.f32.mrf.mxu0
      %v3234 = vadd.f32 0.0, %v3233
      %3235 = vmatmul.f32.gmra.mxu0 %v2755
      %v3236 = vpop.f32.mrf.mxu0
      %v3237 = vadd.f32 0.0, %v3236
      %3238 = vmatmul.f32.gmra.mxu0 %v2758
      %v3239 = vpop.f32.mrf.mxu0
      %v3240 = vadd.f32 0.0, %v3239
      %3241 = vmatmul.f32.gmra.mxu0 %v2761
      %v3242 = vpop.f32.mrf.mxu0
      %v3243 = vadd.f32 0.0, %v3242
      %3244 = vmatmul.f32.gmra.mxu0 %v2764
      %v3245 = vpop.f32.mrf.mxu0
      %v3246 = vadd.f32 0.0, %v3245
      %3247 = vmatmul.f32.gmra.mxu0 %v2767
      %v3248 = vpop.f32.mrf.mxu0
      %v3249 = vadd.f32 0.0, %v3248
      %3250 = vmatmul.f32.gmra.mxu0 %v2770
      %v3251 = vpop.f32.mrf.mxu0
      %v3252 = vadd.f32 0.0, %v3251
      %3253 = vmatmul.f32.gmra.mxu0 %v2773
      %v3254 = vpop.f32.mrf.mxu0
      %v3255 = vadd.f32 0.0, %v3254
      %3256 = vmatmul.f32.gmra.mxu0 %v2776
      %v3257 = vpop.f32.mrf.mxu0
      %v3258 = vadd.f32 0.0, %v3257
      %3259 = vmatmul.f32.gmra.mxu0 %v2779
      %v3260 = vpop.f32.mrf.mxu0
      %v3261 = vadd.f32 0.0, %v3260
      %3262 = vmatmul.f32.gmra.mxu0 %v2782
      %v3263 = vpop.f32.mrf.mxu0
      %v3264 = vadd.f32 0.0, %v3263
      %3265 = vmatmul.f32.gmra.mxu0 %v2785
      %v3266 = vpop.f32.mrf.mxu0
      %v3267 = vadd.f32 0.0, %v3266
      %3268 = vmatmul.f32.gmra.mxu0 %v2788
      %v3269 = vpop.f32.mrf.mxu0
      %v3270 = vadd.f32 0.0, %v3269
      %3271 = vmatmul.f32.gmra.mxu0 %v2791
      %v3272 = vpop.f32.mrf.mxu0
      %v3273 = vadd.f32 0.0, %v3272
      %3274 = vmatmul.f32.gmra.mxu0 %v2794
      %v3275 = vpop.f32.mrf.mxu0
      %v3276 = vadd.f32 0.0, %v3275
      %3277 = vmatmul.f32.gmra.mxu0 %v2797
      %v3278 = vpop.f32.mrf.mxu0
      %v3279 = vadd.f32 0.0, %v3278
      %3280 = vmatmul.f32.gmra.mxu0 %v2951
      %v3281 = vpop.f32.mrf.mxu0
      %v3282 = vadd.f32 0.0, %v3281
      %3283 = vmatmul.f32.gmra.mxu0 %v2954
      %v3284 = vpop.f32.mrf.mxu0
      %v3285 = vadd.f32 0.0, %v3284
      %3286 = vmatmul.f32.gmra.mxu0 %v3172
      %v3287 = vpop.f32.mrf.mxu0
      %v3288 = vadd.f32 0.0, %v3287
      %3289 = vmatmul.f32.gmra.mxu0 %v3175
      %v3290 = vpop.f32.mrf.mxu0
      %v3291 = vadd.f32 0.0, %v3290
      %3292 = vdwg.mxu0
      %v3293 = vld [vmem:[#allocation3] sm:$0xff]
      %v3294 = vld [vmem:[#allocation3 + $0x8] sm:$0xff]
      %v3295 = vld [vmem:[#allocation3 + $0x10] sm:$0xff]
      %v3296 = vld [vmem:[#allocation3 + $0x18] sm:$0xff]
      %v3297 = vld [vmem:[#allocation3 + $0x20] sm:$0xff]
      %v3298 = vld [vmem:[#allocation3 + $0x28] sm:$0xff]
      %v3299 = vld [vmem:[#allocation3 + $0x30] sm:$0xff]
      %v3300 = vld [vmem:[#allocation3 + $0x38] sm:$0xff]
      %v3301 = vld [vmem:[#allocation3 + $0x40] sm:$0xff]
      %v3302 = vld [vmem:[#allocation3 + $0x48] sm:$0xff]
      %v3303 = vld [vmem:[#allocation3 + $0x50] sm:$0xff]
      %v3304 = vld [vmem:[#allocation3 + $0x58] sm:$0xff]
      %v3305 = vld [vmem:[#allocation3 + $0x60] sm:$0xff]
      %v3306 = vld [vmem:[#allocation3 + $0x68] sm:$0xff]
      %v3307 = vld [vmem:[#allocation3 + $0x70] sm:$0xff]
      %v3308 = vld [vmem:[#allocation3 + $0x78] sm:$0xff]
      %v3309 = vld [vmem:[#allocation3 + $0x80] sm:$0xff]
      %v3310 = vld [vmem:[#allocation3 + $0x88] sm:$0xff]
      %v3311 = vld [vmem:[#allocation3 + $0x90] sm:$0xff]
      %v3312 = vld [vmem:[#allocation3 + $0x98] sm:$0xff]
      %v3313 = vld [vmem:[#allocation3 + $0xa0] sm:$0xff]
      %v3314 = vld [vmem:[#allocation3 + $0xa8] sm:$0xff]
      %v3315 = vld [vmem:[#allocation3 + $0xb0] sm:$0xff]
      %v3316 = vld [vmem:[#allocation3 + $0xb8] sm:$0xff]
      %v3317 = vld [vmem:[#allocation3 + $0xc0] sm:$0xff]
      %v3318 = vld [vmem:[#allocation3 + $0xc8] sm:$0xff]
      %v3319 = vld [vmem:[#allocation3 + $0xd0] sm:$0xff]
      %v3320 = vld [vmem:[#allocation3 + $0xd8] sm:$0xff]
      %v3321 = vld [vmem:[#allocation3 + $0xe0] sm:$0xff]
      %v3322 = vld [vmem:[#allocation3 + $0xe8] sm:$0xff]
      %v3323 = vld [vmem:[#allocation3 + $0xf0] sm:$0xff]
      %v3324 = vld [vmem:[#allocation3 + $0xf8] sm:$0xff]
      %v3325 = vadd.f32 %v3293, %v3198
      %v3326 = vadd.f32 %v3294, %v3201
      %v3327 = vadd.f32 %v3295, %v3204
      %v3328 = vadd.f32 %v3296, %v3207
      %v3329 = vadd.f32 %v3297, %v3210
      %v3330 = vadd.f32 %v3298, %v3213
      %v3331 = vadd.f32 %v3299, %v3216
      %v3332 = vadd.f32 %v3300, %v3219
      %v3333 = vadd.f32 %v3301, %v3222
      %v3334 = vadd.f32 %v3302, %v3225
      %v3335 = vadd.f32 %v3303, %v3228
      %v3336 = vadd.f32 %v3304, %v3231
      %v3337 = vadd.f32 %v3305, %v3234
      %v3338 = vadd.f32 %v3306, %v3237
      %v3339 = vadd.f32 %v3307, %v3240
      %v3340 = vadd.f32 %v3308, %v3243
      %v3341 = vadd.f32 %v3309, %v3246
      %v3342 = vadd.f32 %v3310, %v3249
      %v3343 = vadd.f32 %v3311, %v3252
      %v3344 = vadd.f32 %v3312, %v3255
      %v3345 = vadd.f32 %v3313, %v3258
      %v3346 = vadd.f32 %v3314, %v3261
      %v3347 = vadd.f32 %v3315, %v3264
      %v3348 = vadd.f32 %v3316, %v3267
      %v3349 = vadd.f32 %v3317, %v3270
      %v3350 = vadd.f32 %v3318, %v3273
      %v3351 = vadd.f32 %v3319, %v3276
      %v3352 = vadd.f32 %v3320, %v3279
      %v3353 = vadd.f32 %v3321, %v3282
      %v3354 = vadd.f32 %v3322, %v3285
      %v3355 = vadd.f32 %v3323, %v3288
      %v3356 = vadd.f32 %v3324, %v3291
      %3357 = vst.msk [vmem:[#allocation3] sm:$0xff] %vm312, %v3325
      %3358 = vst.msk [vmem:[#allocation3 + $0x8] sm:$0xff] %vm312, %v3326
      %3359 = vst.msk [vmem:[#allocation3 + $0x10] sm:$0xff] %vm312, %v3327
      %3360 = vst.msk [vmem:[#allocation3 + $0x18] sm:$0xff] %vm312, %v3328
      %3361 = vst.msk [vmem:[#allocation3 + $0x20] sm:$0xff] %vm312, %v3329
      %3362 = vst.msk [vmem:[#allocation3 + $0x28] sm:$0xff] %vm312, %v3330
      %3363 = vst.msk [vmem:[#allocation3 + $0x30] sm:$0xff] %vm312, %v3331
      %3364 = vst.msk [vmem:[#allocation3 + $0x38] sm:$0xff] %vm312, %v3332
      %3365 = vst.msk [vmem:[#allocation3 + $0x40] sm:$0xff] %vm312, %v3333
      %3366 = vst.msk [vmem:[#allocation3 + $0x48] sm:$0xff] %vm312, %v3334
      %3367 = vst.msk [vmem:[#allocation3 + $0x50] sm:$0xff] %vm312, %v3335
      %3368 = vst.msk [vmem:[#allocation3 + $0x58] sm:$0xff] %vm312, %v3336
      %3369 = vst.msk [vmem:[#allocation3 + $0x60] sm:$0xff] %vm312, %v3337
      %3370 = vst.msk [vmem:[#allocation3 + $0x68] sm:$0xff] %vm312, %v3338
      %3371 = vst.msk [vmem:[#allocation3 + $0x70] sm:$0xff] %vm312, %v3339
      %3372 = vst.msk [vmem:[#allocation3 + $0x78] sm:$0xff] %vm312, %v3340
      %3373 = vst.msk [vmem:[#allocation3 + $0x80] sm:$0xff] %vm312, %v3341
      %3374 = vst.msk [vmem:[#allocation3 + $0x88] sm:$0xff] %vm312, %v3342
      %3375 = vst.msk [vmem:[#allocation3 + $0x90] sm:$0xff] %vm312, %v3343
      %3376 = vst.msk [vmem:[#allocation3 + $0x98] sm:$0xff] %vm312, %v3344
      %3377 = vst.msk [vmem:[#allocation3 + $0xa0] sm:$0xff] %vm312, %v3345
      %3378 = vst.msk [vmem:[#allocation3 + $0xa8] sm:$0xff] %vm312, %v3346
      %3379 = vst.msk [vmem:[#allocation3 + $0xb0] sm:$0xff] %vm312, %v3347
      %3380 = vst.msk [vmem:[#allocation3 + $0xb8] sm:$0xff] %vm312, %v3348
      %3381 = vst.msk [vmem:[#allocation3 + $0xc0] sm:$0xff] %vm312, %v3349
      %3382 = vst.msk [vmem:[#allocation3 + $0xc8] sm:$0xff] %vm312, %v3350
      %3383 = vst.msk [vmem:[#allocation3 + $0xd0] sm:$0xff] %vm312, %v3351
      %3384 = vst.msk [vmem:[#allocation3 + $0xd8] sm:$0xff] %vm312, %v3352
      %3385 = vst.msk [vmem:[#allocation3 + $0xe0] sm:$0xff] %vm312, %v3353
      %3386 = vst.msk [vmem:[#allocation3 + $0xe8] sm:$0xff] %vm312, %v3354
      %3387 = vst.msk [vmem:[#allocation3 + $0xf0] sm:$0xff] %vm312, %v3355
      %3388 = vst.msk [vmem:[#allocation3 + $0xf8] sm:$0xff] %vm312, %v3356
      %v3389 = vld [vmem:[#allocation3] sm:$0xff]
      %v3390 = vld [vmem:[#allocation3 + $0x8] sm:$0xff]
      %v3391 = vld [vmem:[#allocation3 + $0x10] sm:$0xff]
      %v3392 = vld [vmem:[#allocation3 + $0x18] sm:$0xff]
      %v3393 = vld [vmem:[#allocation3 + $0x20] sm:$0xff]
      %v3394 = vld [vmem:[#allocation3 + $0x28] sm:$0xff]
      %v3395 = vld [vmem:[#allocation3 + $0x30] sm:$0xff]
      %v3396 = vld [vmem:[#allocation3 + $0x38] sm:$0xff]
      %v3397 = vld [vmem:[#allocation3 + $0x40] sm:$0xff]
      %v3398 = vld [vmem:[#allocation3 + $0x48] sm:$0xff]
      %v3399 = vld [vmem:[#allocation3 + $0x50] sm:$0xff]
      %v3400 = vld [vmem:[#allocation3 + $0x58] sm:$0xff]
      %v3401 = vld [vmem:[#allocation3 + $0x60] sm:$0xff]
      %v3402 = vld [vmem:[#allocation3 + $0x68] sm:$0xff]
      %v3403 = vld [vmem:[#allocation3 + $0x70] sm:$0xff]
      %v3404 = vld [vmem:[#allocation3 + $0x78] sm:$0xff]
      %v3405 = vld [vmem:[#allocation3 + $0x80] sm:$0xff]
      %v3406 = vld [vmem:[#allocation3 + $0x88] sm:$0xff]
      %v3407 = vld [vmem:[#allocation3 + $0x90] sm:$0xff]
      %v3408 = vld [vmem:[#allocation3 + $0x98] sm:$0xff]
      %v3409 = vld [vmem:[#allocation3 + $0xa0] sm:$0xff]
      %v3410 = vld [vmem:[#allocation3 + $0xa8] sm:$0xff]
      %v3411 = vld [vmem:[#allocation3 + $0xb0] sm:$0xff]
      %v3412 = vld [vmem:[#allocation3 + $0xb8] sm:$0xff]
      %v3413 = vld [vmem:[#allocation3 + $0xc0] sm:$0xff]
      %v3414 = vld [vmem:[#allocation3 + $0xc8] sm:$0xff]
      %v3415 = vld [vmem:[#allocation3 + $0xd0] sm:$0xff]
      %v3416 = vld [vmem:[#allocation3 + $0xd8] sm:$0xff]
      %v3417 = vld [vmem:[#allocation3 + $0xe0] sm:$0xff]
      %v3418 = vld [vmem:[#allocation3 + $0xe8] sm:$0xff]
      %v3419 = vld [vmem:[#allocation3 + $0xf0] sm:$0xff]
      %v3420 = vld [vmem:[#allocation3 + $0xf8] sm:$0xff]
      %v3421 = vld [vmem:[%s5] sm:$0x1]
      %v3422 = vld [vmem:[%s6] sm:$0x1]
      %v3423 = vsel %vm312, %v3389, 0.0
      %v3424 = vsel %vm312, %v3390, 0.0
      %v3425 = vadd.f32 %v3423, %v3424
      %v3426 = vsel %vm312, %v3391, 0.0
      %v3427 = vadd.f32 %v3425, %v3426
      %v3428 = vsel %vm312, %v3392, 0.0
      %v3429 = vadd.f32 %v3427, %v3428
      %v3430 = vsel %vm312, %v3393, 0.0
      %v3431 = vadd.f32 %v3429, %v3430
      %v3432 = vsel %vm312, %v3394, 0.0
      %v3433 = vadd.f32 %v3431, %v3432
      %v3434 = vsel %vm312, %v3395, 0.0
      %v3435 = vadd.f32 %v3433, %v3434
      %v3436 = vsel %vm312, %v3396, 0.0
      %v3437 = vadd.f32 %v3435, %v3436
      %v3438 = vsel %vm312, %v3397, 0.0
      %v3439 = vadd.f32 %v3437, %v3438
      %v3440 = vsel %vm312, %v3398, 0.0
      %v3441 = vadd.f32 %v3439, %v3440
      %v3442 = vsel %vm312, %v3399, 0.0
      %v3443 = vadd.f32 %v3441, %v3442
      %v3444 = vsel %vm312, %v3400, 0.0
      %v3445 = vadd.f32 %v3443, %v3444
      %v3446 = vsel %vm312, %v3401, 0.0
      %v3447 = vadd.f32 %v3445, %v3446
      %v3448 = vsel %vm312, %v3402, 0.0
      %v3449 = vadd.f32 %v3447, %v3448
      %v3450 = vsel %vm312, %v3403, 0.0
      %v3451 = vadd.f32 %v3449, %v3450
      %v3452 = vsel %vm312, %v3404, 0.0
      %v3453 = vadd.f32 %v3451, %v3452
      %v3454 = vsel %vm312, %v3405, 0.0
      %v3455 = vadd.f32 %v3453, %v3454
      %v3456 = vsel %vm312, %v3406, 0.0
      %v3457 = vadd.f32 %v3455, %v3456
      %v3458 = vsel %vm312, %v3407, 0.0
      %v3459 = vadd.f32 %v3457, %v3458
      %v3460 = vsel %vm312, %v3408, 0.0
      %v3461 = vadd.f32 %v3459, %v3460
      %v3462 = vsel %vm312, %v3409, 0.0
      %v3463 = vadd.f32 %v3461, %v3462
      %v3464 = vsel %vm312, %v3410, 0.0
      %v3465 = vadd.f32 %v3463, %v3464
      %v3466 = vsel %vm312, %v3411, 0.0
      %v3467 = vadd.f32 %v3465, %v3466
      %v3468 = vsel %vm312, %v3412, 0.0
      %v3469 = vadd.f32 %v3467, %v3468
      %v3470 = vsel %vm312, %v3413, 0.0
      %v3471 = vadd.f32 %v3469, %v3470
      %v3472 = vsel %vm312, %v3414, 0.0
      %v3473 = vadd.f32 %v3471, %v3472
      %v3474 = vsel %vm312, %v3415, 0.0
      %v3475 = vadd.f32 %v3473, %v3474
      %v3476 = vsel %vm312, %v3416, 0.0
      %v3477 = vadd.f32 %v3475, %v3476
      %v3478 = vsel %vm312, %v3417, 0.0
      %v3479 = vadd.f32 %v3477, %v3478
      %v3480 = vsel %vm312, %v3418, 0.0
      %v3481 = vadd.f32 %v3479, %v3480
      %v3482 = vsel %vm312, %v3419, 0.0
      %v3483 = vadd.f32 %v3481, %v3482
      %v3484 = vsel %vm312, %v3420, 0.0
      %v3485 = vadd.f32 %v3483, %v3484
      %v3486 = vrot.slane %v3485, 4
      %v3487 = vadd.f32 %v3485, %v3486
      %v3488 = vrot.slane %v3487, 2
      %v3489 = vadd.f32 %v3487, %v3488
      %v3490 = vrot.slane %v3489, 1
      %v3491 = vadd.f32 %v3489, %v3490
      %v3492 = vmul.f32 %v3389, %v3389
      %v3493 = vmul.f32 %v3390, %v3390
      %v3494 = vmul.f32 %v3391, %v3391
      %v3495 = vmul.f32 %v3392, %v3392
      %v3496 = vmul.f32 %v3393, %v3393
      %v3497 = vmul.f32 %v3394, %v3394
      %v3498 = vmul.f32 %v3395, %v3395
      %v3499 = vmul.f32 %v3396, %v3396
      %v3500 = vmul.f32 %v3397, %v3397
      %v3501 = vmul.f32 %v3398, %v3398
      %v3502 = vmul.f32 %v3399, %v3399
      %v3503 = vmul.f32 %v3400, %v3400
      %v3504 = vmul.f32 %v3401, %v3401
      %v3505 = vmul.f32 %v3402, %v3402
      %v3506 = vmul.f32 %v3403, %v3403
      %v3507 = vmul.f32 %v3404, %v3404
      %v3508 = vmul.f32 %v3405, %v3405
      %v3509 = vmul.f32 %v3406, %v3406
      %v3510 = vmul.f32 %v3407, %v3407
      %v3511 = vmul.f32 %v3408, %v3408
      %v3512 = vmul.f32 %v3409, %v3409
      %v3513 = vmul.f32 %v3410, %v3410
      %v3514 = vmul.f32 %v3411, %v3411
      %v3515 = vmul.f32 %v3412, %v3412
      %v3516 = vmul.f32 %v3413, %v3413
      %v3517 = vmul.f32 %v3414, %v3414
      %v3518 = vmul.f32 %v3415, %v3415
      %v3519 = vmul.f32 %v3416, %v3416
      %v3520 = vmul.f32 %v3417, %v3417
      %v3521 = vmul.f32 %v3418, %v3418
      %v3522 = vmul.f32 %v3419, %v3419
      %v3523 = vmul.f32 %v3420, %v3420
      %v3524 = vsel %vm312, %v3492, 0.0
      %v3525 = vsel %vm312, %v3493, 0.0
      %v3526 = vadd.f32 %v3524, %v3525
      %v3527 = vsel %vm312, %v3494, 0.0
      %v3528 = vadd.f32 %v3526, %v3527
      %v3529 = vsel %vm312, %v3495, 0.0
      %v3530 = vadd.f32 %v3528, %v3529
      %v3531 = vsel %vm312, %v3496, 0.0
      %v3532 = vadd.f32 %v3530, %v3531
      %v3533 = vsel %vm312, %v3497, 0.0
      %v3534 = vadd.f32 %v3532, %v3533
      %v3535 = vsel %vm312, %v3498, 0.0
      %v3536 = vadd.f32 %v3534, %v3535
      %v3537 = vsel %vm312, %v3499, 0.0
      %v3538 = vadd.f32 %v3536, %v3537
      %v3539 = vsel %vm312, %v3500, 0.0
      %v3540 = vadd.f32 %v3538, %v3539
      %v3541 = vsel %vm312, %v3501, 0.0
      %v3542 = vadd.f32 %v3540, %v3541
      %v3543 = vsel %vm312, %v3502, 0.0
      %v3544 = vadd.f32 %v3542, %v3543
      %v3545 = vsel %vm312, %v3503, 0.0
      %v3546 = vadd.f32 %v3544, %v3545
      %v3547 = vsel %vm312, %v3504, 0.0
      %v3548 = vadd.f32 %v3546, %v3547
      %v3549 = vsel %vm312, %v3505, 0.0
      %v3550 = vadd.f32 %v3548, %v3549
      %v3551 = vsel %vm312, %v3506, 0.0
      %v3552 = vadd.f32 %v3550, %v3551
      %v3553 = vsel %vm312, %v3507, 0.0
      %v3554 = vadd.f32 %v3552, %v3553
      %v3555 = vsel %vm312, %v3508, 0.0
      %v3556 = vadd.f32 %v3554, %v3555
      %v3557 = vsel %vm312, %v3509, 0.0
      %v3558 = vadd.f32 %v3556, %v3557
      %v3559 = vsel %vm312, %v3510, 0.0
      %v3560 = vadd.f32 %v3558, %v3559
      %v3561 = vsel %vm312, %v3511, 0.0
      %v3562 = vadd.f32 %v3560, %v3561
      %v3563 = vsel %vm312, %v3512, 0.0
      %v3564 = vadd.f32 %v3562, %v3563
      %v3565 = vsel %vm312, %v3513, 0.0
      %v3566 = vadd.f32 %v3564, %v3565
      %v3567 = vsel %vm312, %v3514, 0.0
      %v3568 = vadd.f32 %v3566, %v3567
      %v3569 = vsel %vm312, %v3515, 0.0
      %v3570 = vadd.f32 %v3568, %v3569
      %v3571 = vsel %vm312, %v3516, 0.0
      %v3572 = vadd.f32 %v3570, %v3571
      %v3573 = vsel %vm312, %v3517, 0.0
      %v3574 = vadd.f32 %v3572, %v3573
      %v3575 = vsel %vm312, %v3518, 0.0
      %v3576 = vadd.f32 %v3574, %v3575
      %v3577 = vsel %vm312, %v3519, 0.0
      %v3578 = vadd.f32 %v3576, %v3577
      %v3579 = vsel %vm312, %v3520, 0.0
      %v3580 = vadd.f32 %v3578, %v3579
      %v3581 = vsel %vm312, %v3521, 0.0
      %v3582 = vadd.f32 %v3580, %v3581
      %v3583 = vsel %vm312, %v3522, 0.0
      %v3584 = vadd.f32 %v3582, %v3583
      %v3585 = vsel %vm312, %v3523, 0.0
      %v3586 = vadd.f32 %v3584, %v3585
      %v3587 = vrot.slane %v3586, 4
      %v3588 = vadd.f32 %v3586, %v3587
      %v3589 = vrot.slane %v3588, 2
      %v3590 = vadd.f32 %v3588, %v3589
      %v3591 = vrot.slane %v3590, 1
      %v3592 = vadd.f32 %v3590, %v3591
      %v3593 = vmul.f32 %v3491, 0.00390625
      %v3594 = vmul.f32 %v3592, 0.00390625
      %v3595 = vmul.f32 %v3593, %v3593
      %v3596 = vsub.f32 %v3594, %v3595
      %v3597 = vmax.f32 %v3596, 0.0
      %v3598 = vadd.f32 %v3597, 1e-05
      %v3599 = vrsqrt.pop %v3598
      %v3600 = vmul.f32 %v3599, %v3598
      %v3601 = vmul.f32 %v3600, %v3599
      %v3602 = vmul.f32 0.5, %v3601
      %v3603 = vsub.f32 1.5, %v3602
      %v3604 = vmul.f32 %v3599, %v3603
      %vm3605 = vweird.f32 %v3598
      %vm3606 = vweird.f32 %v3599
      %vm3607 = vmor %vm3605, %vm3606
      %v3608 = vsel %vm3607, %v3599, %v3604
      %v3609 = vmul.f32 %v3421, %v3608
      %v3610 = vmul.f32 %v3593, %v3609
      %v3611 = vsub.f32 %v3422, %v3610
      %v3613 = vperm.slane %v3609, 0
      %v3615 = vmul.f32 %v3389, %v3613
      %v3616 = vmul.f32 %v3390, %v3613
      %v3617 = vmul.f32 %v3391, %v3613
      %v3618 = vmul.f32 %v3392, %v3613
      %v3619 = vmul.f32 %v3393, %v3613
      %v3620 = vmul.f32 %v3394, %v3613
      %v3621 = vmul.f32 %v3395, %v3613
      %v3622 = vmul.f32 %v3396, %v3613
      %v3623 = vmul.f32 %v3397, %v3613
      %v3624 = vmul.f32 %v3398, %v3613
      %v3625 = vmul.f32 %v3399, %v3613
      %v3626 = vmul.f32 %v3400, %v3613
      %v3627 = vmul.f32 %v3401, %v3613
      %v3628 = vmul.f32 %v3402, %v3613
      %v3629 = vmul.f32 %v3403, %v3613
      %v3630 = vmul.f32 %v3404, %v3613
      %v3631 = vmul.f32 %v3405, %v3613
      %v3632 = vmul.f32 %v3406, %v3613
      %v3633 = vmul.f32 %v3407, %v3613
      %v3634 = vmul.f32 %v3408, %v3613
      %v3635 = vmul.f32 %v3409, %v3613
      %v3636 = vmul.f32 %v3410, %v3613
      %v3637 = vmul.f32 %v3411, %v3613
      %v3638 = vmul.f32 %v3412, %v3613
      %v3639 = vmul.f32 %v3413, %v3613
      %v3640 = vmul.f32 %v3414, %v3613
      %v3641 = vmul.f32 %v3415, %v3613
      %v3642 = vmul.f32 %v3416, %v3613
      %v3643 = vmul.f32 %v3417, %v3613
      %v3644 = vmul.f32 %v3418, %v3613
      %v3645 = vmul.f32 %v3419, %v3613
      %v3646 = vmul.f32 %v3420, %v3613
      %v3648 = vperm.slane %v3611, 0
      %v3650 = vadd.f32 %v3615, %v3648
      %v3651 = vadd.f32 %v3616, %v3648
      %v3652 = vadd.f32 %v3617, %v3648
      %v3653 = vadd.f32 %v3618, %v3648
      %v3654 = vadd.f32 %v3619, %v3648
      %v3655 = vadd.f32 %v3620, %v3648
      %v3656 = vadd.f32 %v3621, %v3648
      %v3657 = vadd.f32 %v3622, %v3648
      %v3658 = vadd.f32 %v3623, %v3648
      %v3659 = vadd.f32 %v3624, %v3648
      %v3660 = vadd.f32 %v3625, %v3648
      %v3661 = vadd.f32 %v3626, %v3648
      %v3662 = vadd.f32 %v3627, %v3648
      %v3663 = vadd.f32 %v3628, %v3648
      %v3664 = vadd.f32 %v3629, %v3648
      %v3665 = vadd.f32 %v3630, %v3648
      %v3666 = vadd.f32 %v3631, %v3648
      %v3667 = vadd.f32 %v3632, %v3648
      %v3668 = vadd.f32 %v3633, %v3648
      %v3669 = vadd.f32 %v3634, %v3648
      %v3670 = vadd.f32 %v3635, %v3648
      %v3671 = vadd.f32 %v3636, %v3648
      %v3672 = vadd.f32 %v3637, %v3648
      %v3673 = vadd.f32 %v3638, %v3648
      %v3674 = vadd.f32 %v3639, %v3648
      %v3675 = vadd.f32 %v3640, %v3648
      %v3676 = vadd.f32 %v3641, %v3648
      %v3677 = vadd.f32 %v3642, %v3648
      %v3678 = vadd.f32 %v3643, %v3648
      %v3679 = vadd.f32 %v3644, %v3648
      %v3680 = vadd.f32 %v3645, %v3648
      %v3681 = vadd.f32 %v3646, %v3648
      %v3682 = vld [vmem:[%s273] sm:$0xff]
      %v3683 = vld [vmem:[%s273 + $0x8] sm:$0xff]
      %v3684 = vld [vmem:[%s273 + $0x10] sm:$0xff]
      %v3685 = vld [vmem:[%s273 + $0x18] sm:$0xff]
      %v3686 = vld [vmem:[%s273 + $0x20] sm:$0xff]
      %v3687 = vld [vmem:[%s273 + $0x28] sm:$0xff]
      %v3688 = vld [vmem:[%s273 + $0x30] sm:$0xff]
      %v3689 = vld [vmem:[%s273 + $0x38] sm:$0xff]
      %v3690 = vld [vmem:[%s273 + $0x40] sm:$0xff]
      %v3691 = vld [vmem:[%s273 + $0x48] sm:$0xff]
      %v3692 = vld [vmem:[%s273 + $0x50] sm:$0xff]
      %v3693 = vld [vmem:[%s273 + $0x58] sm:$0xff]
      %v3694 = vld [vmem:[%s273 + $0x60] sm:$0xff]
      %v3695 = vld [vmem:[%s273 + $0x68] sm:$0xff]
      %v3696 = vld [vmem:[%s273 + $0x70] sm:$0xff]
      %v3697 = vld [vmem:[%s273 + $0x78] sm:$0xff]
      %v3698 = vld [vmem:[%s273 + $0x80] sm:$0xff]
      %v3699 = vld [vmem:[%s273 + $0x88] sm:$0xff]
      %v3700 = vld [vmem:[%s273 + $0x90] sm:$0xff]
      %v3701 = vld [vmem:[%s273 + $0x98] sm:$0xff]
      %v3702 = vld [vmem:[%s273 + $0xa0] sm:$0xff]
      %v3703 = vld [vmem:[%s273 + $0xa8] sm:$0xff]
      %v3704 = vld [vmem:[%s273 + $0xb0] sm:$0xff]
      %v3705 = vld [vmem:[%s273 + $0xb8] sm:$0xff]
      %v3706 = vld [vmem:[%s273 + $0xc0] sm:$0xff]
      %v3707 = vld [vmem:[%s273 + $0xc8] sm:$0xff]
      %v3708 = vld [vmem:[%s273 + $0xd0] sm:$0xff]
      %v3709 = vld [vmem:[%s273 + $0xd8] sm:$0xff]
      %v3710 = vld [vmem:[%s273 + $0xe0] sm:$0xff]
      %v3711 = vld [vmem:[%s273 + $0xe8] sm:$0xff]
      %v3712 = vld [vmem:[%s273 + $0xf0] sm:$0xff]
      %v3713 = vld [vmem:[%s273 + $0xf8] sm:$0xff]
      %v3714 = vadd.f32 %v3650, %v3682
      %v3715 = vadd.f32 %v3651, %v3683
      %v3716 = vadd.f32 %v3652, %v3684
      %v3717 = vadd.f32 %v3653, %v3685
      %v3718 = vadd.f32 %v3654, %v3686
      %v3719 = vadd.f32 %v3655, %v3687
      %v3720 = vadd.f32 %v3656, %v3688
      %v3721 = vadd.f32 %v3657, %v3689
      %v3722 = vadd.f32 %v3658, %v3690
      %v3723 = vadd.f32 %v3659, %v3691
      %v3724 = vadd.f32 %v3660, %v3692
      %v3725 = vadd.f32 %v3661, %v3693
      %v3726 = vadd.f32 %v3662, %v3694
      %v3727 = vadd.f32 %v3663, %v3695
      %v3728 = vadd.f32 %v3664, %v3696
      %v3729 = vadd.f32 %v3665, %v3697
      %v3730 = vadd.f32 %v3666, %v3698
      %v3731 = vadd.f32 %v3667, %v3699
      %v3732 = vadd.f32 %v3668, %v3700
      %v3733 = vadd.f32 %v3669, %v3701
      %v3734 = vadd.f32 %v3670, %v3702
      %v3735 = vadd.f32 %v3671, %v3703
      %v3736 = vadd.f32 %v3672, %v3704
      %v3737 = vadd.f32 %v3673, %v3705
      %v3738 = vadd.f32 %v3674, %v3706
      %v3739 = vadd.f32 %v3675, %v3707
      %v3740 = vadd.f32 %v3676, %v3708
      %v3741 = vadd.f32 %v3677, %v3709
      %v3742 = vadd.f32 %v3678, %v3710
      %v3743 = vadd.f32 %v3679, %v3711
      %v3744 = vadd.f32 %v3680, %v3712
      %v3745 = vadd.f32 %v3681, %v3713
      %3746 = vst.msk [vmem:[%s278] sm:$0xff] %vm312, %v3714
      %3747 = vst.msk [vmem:[%s278 + $0x8] sm:$0xff] %vm312, %v3715
      %3748 = vst.msk [vmem:[%s278 + $0x10] sm:$0xff] %vm312, %v3716
      %3749 = vst.msk [vmem:[%s278 + $0x18] sm:$0xff] %vm312, %v3717
      %3750 = vst.msk [vmem:[%s278 + $0x20] sm:$0xff] %vm312, %v3718
      %3751 = vst.msk [vmem:[%s278 + $0x28] sm:$0xff] %vm312, %v3719
      %3752 = vst.msk [vmem:[%s278 + $0x30] sm:$0xff] %vm312, %v3720
      %3753 = vst.msk [vmem:[%s278 + $0x38] sm:$0xff] %vm312, %v3721
      %3754 = vst.msk [vmem:[%s278 + $0x40] sm:$0xff] %vm312, %v3722
      %3755 = vst.msk [vmem:[%s278 + $0x48] sm:$0xff] %vm312, %v3723
      %3756 = vst.msk [vmem:[%s278 + $0x50] sm:$0xff] %vm312, %v3724
      %3757 = vst.msk [vmem:[%s278 + $0x58] sm:$0xff] %vm312, %v3725
      %3758 = vst.msk [vmem:[%s278 + $0x60] sm:$0xff] %vm312, %v3726
      %3759 = vst.msk [vmem:[%s278 + $0x68] sm:$0xff] %vm312, %v3727
      %3760 = vst.msk [vmem:[%s278 + $0x70] sm:$0xff] %vm312, %v3728
      %3761 = vst.msk [vmem:[%s278 + $0x78] sm:$0xff] %vm312, %v3729
      %3762 = vst.msk [vmem:[%s278 + $0x80] sm:$0xff] %vm312, %v3730
      %3763 = vst.msk [vmem:[%s278 + $0x88] sm:$0xff] %vm312, %v3731
      %3764 = vst.msk [vmem:[%s278 + $0x90] sm:$0xff] %vm312, %v3732
      %3765 = vst.msk [vmem:[%s278 + $0x98] sm:$0xff] %vm312, %v3733
      %3766 = vst.msk [vmem:[%s278 + $0xa0] sm:$0xff] %vm312, %v3734
      %3767 = vst.msk [vmem:[%s278 + $0xa8] sm:$0xff] %vm312, %v3735
      %3768 = vst.msk [vmem:[%s278 + $0xb0] sm:$0xff] %vm312, %v3736
      %3769 = vst.msk [vmem:[%s278 + $0xb8] sm:$0xff] %vm312, %v3737
      %3770 = vst.msk [vmem:[%s278 + $0xc0] sm:$0xff] %vm312, %v3738
      %3771 = vst.msk [vmem:[%s278 + $0xc8] sm:$0xff] %vm312, %v3739
      %3772 = vst.msk [vmem:[%s278 + $0xd0] sm:$0xff] %vm312, %v3740
      %3773 = vst.msk [vmem:[%s278 + $0xd8] sm:$0xff] %vm312, %v3741
      %3774 = vst.msk [vmem:[%s278 + $0xe0] sm:$0xff] %vm312, %v3742
      %3775 = vst.msk [vmem:[%s278 + $0xe8] sm:$0xff] %vm312, %v3743
      %3776 = vst.msk [vmem:[%s278 + $0xf0] sm:$0xff] %vm312, %v3744
      %3777 = vst.msk [vmem:[%s278 + $0xf8] sm:$0xff] %vm312, %v3745
      %p3778 = scmp.lt.s32.totalorder %s18, 1
      %s3779 = scalar_select %p3778, %s18, 1
      %s3780 = smul.addr %s3779, 32
      %s3781 = smul.addr %s3780, 8
      %s3782 = scalar_lea.vmem %s7, %s3781
      // Predicated region
      $region49: #{_residual_block_impl.1} parent=47 // pred_check
        %p3783 = pneg %p188
      $region50: #{_residual_block_impl.1} parent=47 // pred_check_branch
        %3785 = sbr.rel (%p3783) target = $region52
      $region51: #{_residual_block_impl.1} parent=47 // pred_region
        _
      $region52: #{_residual_block_impl.1} parent=47 // pred_fallthru
        _
    $region48: #{_residual_block_impl.1} parent=5 // pred_fallthru
      _
    %p3786 = scmp.le.s32.totalorder 2, %s13
    // Predicated region
    $region53: #{_residual_block_impl.1} parent=5 // pred_check
      %p3787 = pneg %p3786
    $region54: #{_residual_block_impl.1} parent=5 // pred_check_branch
      %3789 = sbr.rel (%p3787) target = $region56
    $region55: #{_residual_block_impl.1} parent=5 // pred_region
      %s3790 = ssub.s32 %s13, 2
      // Predicated region
      $region57: #{_residual_block_impl.1} parent=55 // pred_check
        %p3791 = pneg %p194
      $region58: #{_residual_block_impl.1} parent=55 // pred_check_branch
        %3793 = sbr.rel (%p3791) target = $region60
      $region59: #{_residual_block_impl.1} parent=55 // pred_region
        %p3794 = scmp.lt.s32.totalorder %s19, 1
        %s3795 = scalar_select %p3794, %s19, 1
        %s3796 = smul.addr %s3795, 32
        %s3797 = smul.addr %s3796, 8
        %s3798 = scalar_lea.vmem %s7, %s3797
      $region60: #{_residual_block_impl.1} parent=55 // pred_fallthru
        _
    $region56: #{_residual_block_impl.1} parent=5 // pred_fallthru
      _
  $region6: #{_residual_block_impl.1} parent=0 // loop_footer
    %s17 = sadd.s32 1, %s13
  $region7: #{_residual_block_impl.1} parent=0 // loop_footer_branch
    %12 = sbr.rel target = $region3
  $region8: #{_residual_block_impl.1} parent=0 // loop_exit
    _

</llo_original>
